<compile_context>
chip_gen: v7x
topology: tpu7x:2x2x1
jax: 0.10.0
libtpu: 0.0.40
codegen_flags: <defaults>
</compile_context>

<pallas_src>
import functools

import jax
import jax.numpy as jnp
from jax.experimental import pallas as pl
from jax.experimental.pallas import tpu as pltpu

FREQ = 24
H1, H2, NCLS = 256, 128, 5
BN_EPS = 1e-5
DEFAULT_TILE_F = 2048           # frames (lanes) per tile; multiple of 128
_HIGHEST = jax.lax.Precision.HIGHEST


def _round_up(x, m):
    return ((x + m - 1) // m) * m


def _pick_tiling(num_frame, max_tile=DEFAULT_TILE_F):
    """Pad frames to a multiple of 128; tile = largest 128-multiple divisor <= max_tile."""
    f_pad = _round_up(max(num_frame, 1), 128)
    m = f_pad // 128
    for d in range(max(1, min(m, max_tile // 128)), 0, -1):
        if m % d == 0:
            return f_pad, 128 * d
    return f_pad, 128


def _lane_mask(tile_f, num_frame):
    """(1, tile_f) bool mask of in-bounds frames for the current frame tile."""
    lane = jax.lax.broadcasted_iota(jnp.int32, (1, tile_f), 1)
    frame = pl.program_id(1) * tile_f + lane
    return frame < num_frame


# ---------------------------------------------------------------------------
# Kernels — transposed compute layout: (features, frames-on-lanes)
# ---------------------------------------------------------------------------

def _stats1_kernel(x_ref, w1_ref, b1_ref, sum_ref, sumsq_ref, *,
                   tile_f, num_frame, need_mask):
    x = x_ref[...]                                                 # (24, TILE_F)
    h1 = jnp.maximum(
        jnp.dot(w1_ref[...], x, preferred_element_type=jnp.float32)
        + b1_ref[...], 0.0)                                        # (256, TILE_F)
    if need_mask:
        h1 = jnp.where(_lane_mask(tile_f, num_frame), h1, 0.0)
    # Per-grid-step partial stats (no cross-step accumulation -> race-free,
    # megacore-parallel, interpreter-safe).
    sum_ref[...] = jnp.sum(h1, axis=1, keepdims=True)
    sumsq_ref[...] = jnp.sum(h1 * h1, axis=1, keepdims=True)


def _stats2_kernel(x_ref, w1_ref, b1_ref, w2_ref, b2_ref, sum_ref, sumsq_ref, *,
                   tile_f, num_frame, need_mask):
    x = x_ref[...]
    h1 = jnp.maximum(
        jnp.dot(w1_ref[...], x, preferred_element_type=jnp.float32)
        + b1_ref[...], 0.0)                                        # (256, TILE_F)
    h2 = jnp.maximum(
        jnp.dot(w2_ref[...], h1, preferred_element_type=jnp.float32)
        + b2_ref[...], 0.0)                                        # (128, TILE_F)
    if need_mask:
        h2 = jnp.where(_lane_mask(tile_f, num_frame), h2, 0.0)
    sum_ref[...] = jnp.sum(h2, axis=1, keepdims=True)
    sumsq_ref[...] = jnp.sum(h2 * h2, axis=1, keepdims=True)


def _apply_kernel(x_ref, w1_ref, b1_ref, w2_ref, b2_ref, w3_ref, b3_ref, o_ref):
    x = x_ref[...]
    h1 = jnp.maximum(
        jnp.dot(w1_ref[...], x, preferred_element_type=jnp.float32)
        + b1_ref[...], 0.0)
    h2 = jnp.maximum(
        jnp.dot(w2_ref[...], h1, preferred_element_type=jnp.float32)
        + b2_ref[...], 0.0)
    logits = (jnp.dot(w3_ref[...], h2, preferred_element_type=jnp.float32)
              + b3_ref[...])                                       # (5, TILE_F)
    m = jnp.max(logits, axis=0, keepdims=True)
    e = jnp.exp(logits - m)
    denom = jnp.sum(e, axis=0, keepdims=True)
    o_ref[...] = e / denom                                         # exact: rows sum to 1


# ---------------------------------------------------------------------------
# Host-side glue
# ---------------------------------------------------------------------------

def _bn_fold_scale_shift(sum_, sumsq, n_rows, gamma, beta):
    """Training-mode BN (biased variance) as per-feature scale/shift."""
    mean = sum_ / n_rows
    var = jnp.maximum(sumsq / n_rows - mean * mean, 0.0)
    s = gamma * jax.lax.rsqrt(var + BN_EPS)
    t = beta - mean * s
    return s, t


def mlp_forward(x, params, max_tile_f=DEFAULT_TILE_F):
    """x: (batch, 24, num_frame) f32 -> (batch, num_frame, 5) f32."""
    batch, freq, num_frame = x.shape
    assert freq == FREQ
    n_rows = batch * num_frame

    f_pad, tile_f = _pick_tiling(num_frame, max_tile_f)
    if f_pad != num_frame:
        x = jnp.pad(x, ((0, 0), (0, 0), (0, f_pad - num_frame)))
    n_ft = f_pad // tile_f
    grid = (batch, n_ft)
    need_mask = f_pad != num_frame

    w1 = params["w1"]                          # (256, 24)  PyTorch (out, in) layout
    b1 = params["b1"].reshape(H1, 1)

    x_spec = pl.BlockSpec((None, FREQ, tile_f), lambda b, f: (b, 0, f))

    def _resident(shape):                      # whole-array weight, VMEM-resident
        return pl.BlockSpec(shape, lambda b, f: (0, 0))

    def _partial(h):                           # unique partial-stat block per grid step
        return pl.BlockSpec((None, None, h, 1), lambda b, f: (b, f, 0, 0))

    def _partial_shape(h):
        return jax.ShapeDtypeStruct((batch, n_ft, h, 1), jnp.float32)

    parallel = pltpu.CompilerParams(
        dimension_semantics=("parallel", "parallel"))

    # ---- pass A: BN1 batch statistics of relu(W1 x + b1) ----
    psum1, psumsq1 = pl.pallas_call(
        functools.partial(_stats1_kernel, tile_f=tile_f, num_frame=num_frame,
                          need_mask=need_mask),
        grid=grid,
        in_specs=[x_spec, _resident((H1, FREQ)), _resident((H1, 1))],
        out_specs=(_partial(H1), _partial(H1)),
        out_shape=(_partial_shape(H1), _partial_shape(H1)),
        compiler_params=parallel,
    )(x, w1, b1)
    sum1 = jnp.sum(psum1, axis=(0, 1))[:, 0]
    sumsq1 = jnp.sum(psumsq1, axis=(0, 1))[:, 0]

    s1, t1 = _bn_fold_scale_shift(sum1, sumsq1, n_rows, params["g1"], params["be1"])
    w2f = params["w2"] * s1[None, :]                              # (128, 256)
    b2f = (jnp.dot(params["w2"], t1, precision=_HIGHEST)
           + params["b2"]).reshape(H2, 1)

    # ---- pass B: BN2 batch statistics of relu(W2' h1 + b2') ----
    psum2, psumsq2 = pl.pallas_call(
        functools.partial(_stats2_kernel, tile_f=tile_f, num_frame=num_frame,
                          need_mask=need_mask),
        grid=grid,
        in_specs=[x_spec, _resident((H1, FREQ)), _resident((H1, 1)),
                  _resident((H2, H1)), _resident((H2, 1))],
        out_specs=(_partial(H2), _partial(H2)),
        out_shape=(_partial_shape(H2), _partial_shape(H2)),
        compiler_params=parallel,
    )(x, w1, b1, w2f, b2f)
    sum2 = jnp.sum(psum2, axis=(0, 1))[:, 0]
    sumsq2 = jnp.sum(psumsq2, axis=(0, 1))[:, 0]

    s2, t2 = _bn_fold_scale_shift(sum2, sumsq2, n_rows, params["g2"], params["be2"])
    w3f = params["w3"] * s2[None, :]                              # (5, 128)
    b3f = (jnp.dot(params["w3"], t2, precision=_HIGHEST)
           + params["b3"]).reshape(NCLS, 1)

    # ---- pass C: folded network + softmax, lane-dense store ----
    out_t = pl.pallas_call(
        _apply_kernel,
        grid=grid,
        in_specs=[x_spec, _resident((H1, FREQ)), _resident((H1, 1)),
                  _resident((H2, H1)), _resident((H2, 1)),
                  _resident((NCLS, H2)), _resident((NCLS, 1))],
        out_specs=pl.BlockSpec((None, NCLS, tile_f), lambda b, f: (b, 0, f)),
        out_shape=jax.ShapeDtypeStruct((batch, NCLS, f_pad), jnp.float32),
        compiler_params=parallel,
    )(x, w1, b1, w2f, b2f, w3f, b3f)

    # (batch, 5, num_frame) -> (batch, num_frame, 5); tiny output-side transpose.
    # TODO(synk): elide this transpose if the downstream consumer accepts (B, 5, T).
    return jnp.transpose(out_t[:, :, :num_frame], (0, 2, 1))


def mlp_reference(x, params):
    """Pure-JAX reference with exact PyTorch training-mode semantics."""
    batch, freq, num_frame = x.shape
    x2 = jnp.transpose(x, (0, 2, 1)).reshape(batch * num_frame, freq)

    def bn(h, g, be):
        mean = jnp.mean(h, axis=0)
        var = jnp.mean((h - mean) ** 2, axis=0)
        return (h - mean) * jax.lax.rsqrt(var + BN_EPS) * g + be

    h = jnp.maximum(jnp.dot(x2, params["w1"].T, precision=_HIGHEST) + params["b1"], 0.0)
    h = bn(h, params["g1"], params["be1"])
    h = jnp.maximum(jnp.dot(h, params["w2"].T, precision=_HIGHEST) + params["b2"], 0.0)
    h = bn(h, params["g2"], params["be2"])
    logits = jnp.dot(h, params["w3"].T, precision=_HIGHEST) + params["b3"]
    return jax.nn.softmax(logits, axis=1).reshape(batch, num_frame, NCLS)


def init_params(key):
    """Deterministic init in PyTorch layout: W (out, in), b (out,)."""
    ks = jax.random.split(key, 6)

    def linear(kw, kb, fan_in, fan_out):
        bound = 1.0 / jnp.sqrt(fan_in)
        w = jax.random.uniform(kw, (fan_out, fan_in), jnp.float32, -bound, bound)
        b = jax.random.uniform(kb, (fan_out,), jnp.float32, -bound, bound)
        return w, b

    w1, b1 = linear(ks[0], ks[1], FREQ, H1)
    w2, b2 = linear(ks[2], ks[3], H1, H2)
    w3, b3 = linear(ks[4], ks[5], H2, NCLS)
    return dict(
        w1=w1, b1=b1, g1=jnp.ones((H1,), jnp.float32), be1=jnp.zeros((H1,), jnp.float32),
        w2=w2, b2=b2, g2=jnp.ones((H2,), jnp.float32), be2=jnp.zeros((H2,), jnp.float32),
        w3=w3, b3=b3,
    )


if __name__ == "__main__":
    key = jax.random.PRNGKey(0)
    pkey, xkey = jax.random.split(key)
    params = init_params(pkey)

    batch, num_frame = 2, 200     # ragged vs. 128 -> exercises padding + mask path
    x = jax.random.normal(xkey, (batch, FREQ, num_frame), jnp.float32)

    out = jax.block_until_ready(jax.jit(mlp_forward)(x, params))
    assert out.shape == (batch, num_frame, NCLS)

    ref = jax.block_until_ready(mlp_reference(x, params))
    assert jnp.allclose(jnp.sum(out, axis=-1), 1.0, atol=2e-3), "softmax rows must sum to 1"
    max_err = float(jnp.max(jnp.abs(out - ref)))
    assert jnp.allclose(out, ref, rtol=2e-3, atol=2e-3), (
        f"mismatch vs reference, max abs err {max_err}")
    print("KERNEL_OK")
</pallas_src>

<mosaic_0001>
module attributes {stable_mosaic.version = 11 : i64} {
  func.func @_stats1_kernel(%arg0: i32, %arg1: i32, %arg2: memref<1x24x256xf32, #tpu.memory_space<vmem>>, %arg3: memref<256x24xf32, #tpu.memory_space<vmem>>, %arg4: memref<256x1xf32, #tpu.memory_space<vmem>>, %arg5: memref<1x1x256x1xf32, #tpu.memory_space<vmem>>, %arg6: memref<1x1x256x1xf32, #tpu.memory_space<vmem>>) attributes {dimension_semantics = [#tpu.dimension_semantics<parallel>, #tpu.dimension_semantics<parallel>], iteration_bounds = array<i64: 2, 1>, scalar_prefetch = 0 : i64, scratch_operands = 0 : i64, tpu.core_type = #tpu.core_type<tc>, window_params = [{transform_indices = @transform_0, window_bounds = array<i64: 1, 24, 256>}, {pipeline_mode = #tpu.pipeline_mode<synchronous>, transform_indices = @transform_1, window_bounds = array<i64: 256, 24>}, {pipeline_mode = #tpu.pipeline_mode<synchronous>, transform_indices = @transform_2, window_bounds = array<i64: 256, 1>}, {transform_indices = @transform_3, window_bounds = array<i64: 1, 1, 256, 1>}, {transform_indices = @transform_4, window_bounds = array<i64: 1, 1, 256, 1>}]} {
    %c0 = arith.constant 0 : index
    %c0_0 = arith.constant 0 : index
    %c0_1 = arith.constant 0 : index
    %0 = vector.load %arg2[%c0, %c0_0, %c0_1] : memref<1x24x256xf32, #tpu.memory_space<vmem>>, vector<1x24x256xf32>
    %1 = vector.shape_cast %0 : vector<1x24x256xf32> to vector<24x256xf32>
    %c0_2 = arith.constant 0 : index
    %c0_3 = arith.constant 0 : index
    %2 = vector.load %arg3[%c0_2, %c0_3] : memref<256x24xf32, #tpu.memory_space<vmem>>, vector<256x24xf32>
    %cst = arith.constant dense<0.000000e+00> : vector<256x256xf32>
    %3 = tpu.matmul %2, %1, %cst {dimension_numbers = #tpu.dot_dimension_numbers<[1], [0], [0], [1], [0, 0, 1, 1], [], []>} : vector<256x24xf32>, vector<24x256xf32>, vector<256x256xf32> -> vector<256x256xf32>
    %c0_4 = arith.constant 0 : index
    %c0_5 = arith.constant 0 : index
    %4 = vector.load %arg4[%c0_4, %c0_5] : memref<256x1xf32, #tpu.memory_space<vmem>>, vector<256x1xf32>
    %5 = vector.broadcast %4 : vector<256x1xf32> to vector<256x256xf32>
    %6 = arith.addf %3, %5 : vector<256x256xf32>
    %cst_6 = arith.constant 0.000000e+00 : f32
    %7 = vector.broadcast %cst_6 : f32 to vector<256x256xf32>
    %8 = arith.maximumf %6, %7 : vector<256x256xf32>
    %9 = tpu.iota {dimensions = array<i32: 1>} : vector<1x256xi32>
    %c256_i32 = arith.constant 256 : i32
    %10 = arith.muli %arg1, %c256_i32 : i32
    %11 = vector.broadcast %10 : i32 to vector<1x256xi32>
    %12 = arith.addi %11, %9 : vector<1x256xi32>
    %c200_i32 = arith.constant 200 : i32
    %13 = vector.broadcast %c200_i32 : i32 to vector<1x256xi32>
    %14 = arith.cmpi slt, %12, %13 : vector<1x256xi32>
    %cst_7 = arith.constant 0.000000e+00 : f32
    %15 = vector.shape_cast %14 : vector<1x256xi1> to vector<1x256xi1>
    %16 = vector.broadcast %15 : vector<1x256xi1> to vector<256x256xi1>
    %17 = vector.broadcast %cst_7 : f32 to vector<256x256xf32>
    %18 = arith.select %16, %8, %17 : vector<256x256xi1>, vector<256x256xf32>
    %cst_8 = arith.constant dense<0.000000e+00> : vector<256xf32>
    %19 = vector.multi_reduction <add>, %18, %cst_8 [1] : vector<256x256xf32> to vector<256xf32>
    %20 = vector.shape_cast %19 : vector<256xf32> to vector<256x1xf32>
    %c0_9 = arith.constant 0 : index
    %c0_10 = arith.constant 0 : index
    %c0_11 = arith.constant 0 : index
    %c0_12 = arith.constant 0 : index
    %21 = vector.load %arg5[%c0_9, %c0_10, %c0_11, %c0_12] : memref<1x1x256x1xf32, #tpu.memory_space<vmem>>, vector<1x1x256x1xf32>
    %22 = vector.shape_cast %21 : vector<1x1x256x1xf32> to vector<256x1xf32>
    %23 = vector.shape_cast %20 : vector<256x1xf32> to vector<1x1x256x1xf32>
    tpu.vector_store %arg5[%c0_9, %c0_10, %c0_11, %c0_12], %23 {strides = array<i32>} : memref<1x1x256x1xf32, #tpu.memory_space<vmem>>, vector<1x1x256x1xf32>,
    %24 = arith.mulf %18, %18 : vector<256x256xf32>
    %cst_13 = arith.constant dense<0.000000e+00> : vector<256xf32>
    %25 = vector.multi_reduction <add>, %24, %cst_13 [1] : vector<256x256xf32> to vector<256xf32>
    %26 = vector.shape_cast %25 : vector<256xf32> to vector<256x1xf32>
    %c0_14 = arith.constant 0 : index
    %c0_15 = arith.constant 0 : index
    %c0_16 = arith.constant 0 : index
    %c0_17 = arith.constant 0 : index
    %27 = vector.load %arg6[%c0_14, %c0_15, %c0_16, %c0_17] : memref<1x1x256x1xf32, #tpu.memory_space<vmem>>, vector<1x1x256x1xf32>
    %28 = vector.shape_cast %27 : vector<1x1x256x1xf32> to vector<256x1xf32>
    %29 = vector.shape_cast %26 : vector<256x1xf32> to vector<1x1x256x1xf32>
    tpu.vector_store %arg6[%c0_14, %c0_15, %c0_16, %c0_17], %29 {strides = array<i32>} : memref<1x1x256x1xf32, #tpu.memory_space<vmem>>, vector<1x1x256x1xf32>,
    return
  }
  func.func @transform_0(%arg0: i32, %arg1: i32) -> (i32, i32, i32) {
    %c0_i32 = arith.constant 0 : i32
    %c0_i32_0 = arith.constant 0 : i32
    return %arg0, %c0_i32, %arg1 : i32, i32, i32
  }
  func.func @transform_1(%arg0: i32, %arg1: i32) -> (i32, i32) {
    %c0_i32 = arith.constant 0 : i32
    %c0_i32_0 = arith.constant 0 : i32
    %c0_i32_1 = arith.constant 0 : i32
    return %c0_i32, %c0_i32_0 : i32, i32
  }
  func.func @transform_2(%arg0: i32, %arg1: i32) -> (i32, i32) {
    %c0_i32 = arith.constant 0 : i32
    %c0_i32_0 = arith.constant 0 : i32
    %c0_i32_1 = arith.constant 0 : i32
    return %c0_i32, %c0_i32_0 : i32, i32
  }
  func.func @transform_3(%arg0: i32, %arg1: i32) -> (i32, i32, i32, i32) {
    %c0_i32 = arith.constant 0 : i32
    %c0_i32_0 = arith.constant 0 : i32
    %c0_i32_1 = arith.constant 0 : i32
    return %arg0, %arg1, %c0_i32, %c0_i32_0 : i32, i32, i32, i32
  }
  func.func @transform_4(%arg0: i32, %arg1: i32) -> (i32, i32, i32, i32) {
    %c0_i32 = arith.constant 0 : i32
    %c0_i32_0 = arith.constant 0 : i32
    %c0_i32_1 = arith.constant 0 : i32
    return %arg0, %arg1, %c0_i32, %c0_i32_0 : i32, i32, i32, i32
  }
}

module attributes {stable_mosaic.version = 11 : i64} {
  func.func @_apply_kernel(%arg0: i32, %arg1: i32, %arg2: memref<1x24x256xf32, #tpu.memory_space<vmem>>, %arg3: memref<256x24xf32, #tpu.memory_space<vmem>>, %arg4: memref<256x1xf32, #tpu.memory_space<vmem>>, %arg5: memref<128x256xf32, #tpu.memory_space<vmem>>, %arg6: memref<128x1xf32, #tpu.memory_space<vmem>>, %arg7: memref<5x128xf32, #tpu.memory_space<vmem>>, %arg8: memref<5x1xf32, #tpu.memory_space<vmem>>, %arg9: memref<1x5x256xf32, #tpu.memory_space<vmem>>) attributes {dimension_semantics = [#tpu.dimension_semantics<parallel>, #tpu.dimension_semantics<parallel>], iteration_bounds = array<i64: 2, 1>, scalar_prefetch = 0 : i64, scratch_operands = 0 : i64, tpu.core_type = #tpu.core_type<tc>, window_params = [{transform_indices = @transform_0, window_bounds = array<i64: 1, 24, 256>}, {pipeline_mode = #tpu.pipeline_mode<synchronous>, transform_indices = @transform_1, window_bounds = array<i64: 256, 24>}, {pipeline_mode = #tpu.pipeline_mode<synchronous>, transform_indices = @transform_2, window_bounds = array<i64: 256, 1>}, {pipeline_mode = #tpu.pipeline_mode<synchronous>, transform_indices = @transform_3, window_bounds = array<i64: 128, 256>}, {pipeline_mode = #tpu.pipeline_mode<synchronous>, transform_indices = @transform_4, window_bounds = array<i64: 128, 1>}, {pipeline_mode = #tpu.pipeline_mode<synchronous>, transform_indices = @transform_5, window_bounds = array<i64: 5, 128>}, {pipeline_mode = #tpu.pipeline_mode<synchronous>, transform_indices = @transform_6, window_bounds = array<i64: 5, 1>}, {transform_indices = @transform_7, window_bounds = array<i64: 1, 5, 256>}]} {
    %c0 = arith.constant 0 : index
    %c0_0 = arith.constant 0 : index
    %c0_1 = arith.constant 0 : index
    %0 = vector.load %arg2[%c0, %c0_0, %c0_1] : memref<1x24x256xf32, #tpu.memory_space<vmem>>, vector<1x24x256xf32>
    %1 = vector.shape_cast %0 : vector<1x24x256xf32> to vector<24x256xf32>
    %c0_2 = arith.constant 0 : index
    %c0_3 = arith.constant 0 : index
    %2 = vector.load %arg3[%c0_2, %c0_3] : memref<256x24xf32, #tpu.memory_space<vmem>>, vector<256x24xf32>
    %cst = arith.constant dense<0.000000e+00> : vector<256x256xf32>
    %3 = tpu.matmul %2, %1, %cst {dimension_numbers = #tpu.dot_dimension_numbers<[1], [0], [0], [1], [0, 0, 1, 1], [], []>} : vector<256x24xf32>, vector<24x256xf32>, vector<256x256xf32> -> vector<256x256xf32>
    %c0_4 = arith.constant 0 : index
    %c0_5 = arith.constant 0 : index
    %4 = vector.load %arg4[%c0_4, %c0_5] : memref<256x1xf32, #tpu.memory_space<vmem>>, vector<256x1xf32>
    %5 = vector.broadcast %4 : vector<256x1xf32> to vector<256x256xf32>
    %6 = arith.addf %3, %5 : vector<256x256xf32>
    %cst_6 = arith.constant 0.000000e+00 : f32
    %7 = vector.broadcast %cst_6 : f32 to vector<256x256xf32>
    %8 = arith.maximumf %6, %7 : vector<256x256xf32>
    %c0_7 = arith.constant 0 : index
    %c0_8 = arith.constant 0 : index
    %9 = vector.load %arg5[%c0_7, %c0_8] : memref<128x256xf32, #tpu.memory_space<vmem>>, vector<128x256xf32>
    %cst_9 = arith.constant dense<0.000000e+00> : vector<128x256xf32>
    %10 = tpu.matmul %9, %8, %cst_9 {dimension_numbers = #tpu.dot_dimension_numbers<[1], [0], [0], [1], [0, 0, 1, 1], [], []>} : vector<128x256xf32>, vector<256x256xf32>, vector<128x256xf32> -> vector<128x256xf32>
    %c0_10 = arith.constant 0 : index
    %c0_11 = arith.constant 0 : index
    %11 = vector.load %arg6[%c0_10, %c0_11] : memref<128x1xf32, #tpu.memory_space<vmem>>, vector<128x1xf32>
    %12 = vector.broadcast %11 : vector<128x1xf32> to vector<128x256xf32>
    %13 = arith.addf %10, %12 : vector<128x256xf32>
    %cst_12 = arith.constant 0.000000e+00 : f32
    %14 = vector.broadcast %cst_12 : f32 to vector<128x256xf32>
    %15 = arith.maximumf %13, %14 : vector<128x256xf32>
    %c0_13 = arith.constant 0 : index
    %c0_14 = arith.constant 0 : index
    %16 = vector.load %arg7[%c0_13, %c0_14] : memref<5x128xf32, #tpu.memory_space<vmem>>, vector<5x128xf32>
    %cst_15 = arith.constant dense<0.000000e+00> : vector<5x256xf32>
    %17 = tpu.matmul %16, %15, %cst_15 {dimension_numbers = #tpu.dot_dimension_numbers<[1], [0], [0], [1], [0, 0, 1, 1], [], []>} : vector<5x128xf32>, vector<128x256xf32>, vector<5x256xf32> -> vector<5x256xf32>
    %c0_16 = arith.constant 0 : index
    %c0_17 = arith.constant 0 : index
    %18 = vector.load %arg8[%c0_16, %c0_17] : memref<5x1xf32, #tpu.memory_space<vmem>>, vector<5x1xf32>
    %19 = vector.broadcast %18 : vector<5x1xf32> to vector<5x256xf32>
    %20 = arith.addf %17, %19 : vector<5x256xf32>
    %cst_18 = arith.constant dense<0xFF800000> : vector<256xf32>
    %21 = vector.multi_reduction <maximumf>, %20, %cst_18 [0] : vector<5x256xf32> to vector<256xf32>
    %22 = vector.shape_cast %21 : vector<256xf32> to vector<1x256xf32>
    %23 = vector.broadcast %22 : vector<1x256xf32> to vector<5x256xf32>
    %24 = arith.subf %20, %23 : vector<5x256xf32>
    %25 = math.exp %24 : vector<5x256xf32>
    %cst_19 = arith.constant dense<0.000000e+00> : vector<256xf32>
    %26 = vector.multi_reduction <add>, %25, %cst_19 [0] : vector<5x256xf32> to vector<256xf32>
    %27 = vector.shape_cast %26 : vector<256xf32> to vector<1x256xf32>
    %28 = vector.broadcast %27 : vector<1x256xf32> to vector<5x256xf32>
    %29 = arith.divf %25, %28 : vector<5x256xf32>
    %c0_20 = arith.constant 0 : index
    %c0_21 = arith.constant 0 : index
    %c0_22 = arith.constant 0 : index
    %30 = vector.load %arg9[%c0_20, %c0_21, %c0_22] : memref<1x5x256xf32, #tpu.memory_space<vmem>>, vector<1x5x256xf32>
    %31 = vector.shape_cast %30 : vector<1x5x256xf32> to vector<5x256xf32>
    %32 = vector.shape_cast %29 : vector<5x256xf32> to vector<1x5x256xf32>
    tpu.vector_store %arg9[%c0_20, %c0_21, %c0_22], %32 {strides = array<i32>} : memref<1x5x256xf32, #tpu.memory_space<vmem>>, vector<1x5x256xf32>,
    return
  }
  func.func @transform_0(%arg0: i32, %arg1: i32) -> (i32, i32, i32) {
    %c0_i32 = arith.constant 0 : i32
    %c0_i32_0 = arith.constant 0 : i32
    return %arg0, %c0_i32, %arg1 : i32, i32, i32
  }
  func.func @transform_1(%arg0: i32, %arg1: i32) -> (i32, i32) {
    %c0_i32 = arith.constant 0 : i32
    %c0_i32_0 = arith.constant 0 : i32
    %c0_i32_1 = arith.constant 0 : i32
    return %c0_i32, %c0_i32_0 : i32, i32
  }
  func.func @transform_2(%arg0: i32, %arg1: i32) -> (i32, i32) {
    %c0_i32 = arith.constant 0 : i32
    %c0_i32_0 = arith.constant 0 : i32
    %c0_i32_1 = arith.constant 0 : i32
    return %c0_i32, %c0_i32_0 : i32, i32
  }
  func.func @transform_3(%arg0: i32, %arg1: i32) -> (i32, i32) {
    %c0_i32 = arith.constant 0 : i32
    %c0_i32_0 = arith.constant 0 : i32
    %c0_i32_1 = arith.constant 0 : i32
    return %c0_i32, %c0_i32_0 : i32, i32
  }
  func.func @transform_4(%arg0: i32, %arg1: i32) -> (i32, i32) {
    %c0_i32 = arith.constant 0 : i32
    %c0_i32_0 = arith.constant 0 : i32
    %c0_i32_1 = arith.constant 0 : i32
    return %c0_i32, %c0_i32_0 : i32, i32
  }
  func.func @transform_5(%arg0: i32, %arg1: i32) -> (i32, i32) {
    %c0_i32 = arith.constant 0 : i32
    %c0_i32_0 = arith.constant 0 : i32
    %c0_i32_1 = arith.constant 0 : i32
    return %c0_i32, %c0_i32_0 : i32, i32
  }
  func.func @transform_6(%arg0: i32, %arg1: i32) -> (i32, i32) {
    %c0_i32 = arith.constant 0 : i32
    %c0_i32_0 = arith.constant 0 : i32
    %c0_i32_1 = arith.constant 0 : i32
    return %c0_i32, %c0_i32_0 : i32, i32
  }
  func.func @transform_7(%arg0: i32, %arg1: i32) -> (i32, i32, i32) {
    %c0_i32 = arith.constant 0 : i32
    %c0_i32_0 = arith.constant 0 : i32
    return %arg0, %c0_i32, %arg1 : i32, i32, i32
  }
}

module attributes {stable_mosaic.version = 11 : i64} {
  func.func @_stats2_kernel(%arg0: i32, %arg1: i32, %arg2: memref<1x24x256xf32, #tpu.memory_space<vmem>>, %arg3: memref<256x24xf32, #tpu.memory_space<vmem>>, %arg4: memref<256x1xf32, #tpu.memory_space<vmem>>, %arg5: memref<128x256xf32, #tpu.memory_space<vmem>>, %arg6: memref<128x1xf32, #tpu.memory_space<vmem>>, %arg7: memref<1x1x128x1xf32, #tpu.memory_space<vmem>>, %arg8: memref<1x1x128x1xf32, #tpu.memory_space<vmem>>) attributes {dimension_semantics = [#tpu.dimension_semantics<parallel>, #tpu.dimension_semantics<parallel>], iteration_bounds = array<i64: 2, 1>, scalar_prefetch = 0 : i64, scratch_operands = 0 : i64, tpu.core_type = #tpu.core_type<tc>, window_params = [{transform_indices = @transform_0, window_bounds = array<i64: 1, 24, 256>}, {pipeline_mode = #tpu.pipeline_mode<synchronous>, transform_indices = @transform_1, window_bounds = array<i64: 256, 24>}, {pipeline_mode = #tpu.pipeline_mode<synchronous>, transform_indices = @transform_2, window_bounds = array<i64: 256, 1>}, {pipeline_mode = #tpu.pipeline_mode<synchronous>, transform_indices = @transform_3, window_bounds = array<i64: 128, 256>}, {pipeline_mode = #tpu.pipeline_mode<synchronous>, transform_indices = @transform_4, window_bounds = array<i64: 128, 1>}, {transform_indices = @transform_5, window_bounds = array<i64: 1, 1, 128, 1>}, {transform_indices = @transform_6, window_bounds = array<i64: 1, 1, 128, 1>}]} {
    %c0 = arith.constant 0 : index
    %c0_0 = arith.constant 0 : index
    %c0_1 = arith.constant 0 : index
    %0 = vector.load %arg2[%c0, %c0_0, %c0_1] : memref<1x24x256xf32, #tpu.memory_space<vmem>>, vector<1x24x256xf32>
    %1 = vector.shape_cast %0 : vector<1x24x256xf32> to vector<24x256xf32>
    %c0_2 = arith.constant 0 : index
    %c0_3 = arith.constant 0 : index
    %2 = vector.load %arg3[%c0_2, %c0_3] : memref<256x24xf32, #tpu.memory_space<vmem>>, vector<256x24xf32>
    %cst = arith.constant dense<0.000000e+00> : vector<256x256xf32>
    %3 = tpu.matmul %2, %1, %cst {dimension_numbers = #tpu.dot_dimension_numbers<[1], [0], [0], [1], [0, 0, 1, 1], [], []>} : vector<256x24xf32>, vector<24x256xf32>, vector<256x256xf32> -> vector<256x256xf32>
    %c0_4 = arith.constant 0 : index
    %c0_5 = arith.constant 0 : index
    %4 = vector.load %arg4[%c0_4, %c0_5] : memref<256x1xf32, #tpu.memory_space<vmem>>, vector<256x1xf32>
    %5 = vector.broadcast %4 : vector<256x1xf32> to vector<256x256xf32>
    %6 = arith.addf %3, %5 : vector<256x256xf32>
    %cst_6 = arith.constant 0.000000e+00 : f32
    %7 = vector.broadcast %cst_6 : f32 to vector<256x256xf32>
    %8 = arith.maximumf %6, %7 : vector<256x256xf32>
    %c0_7 = arith.constant 0 : index
    %c0_8 = arith.constant 0 : index
    %9 = vector.load %arg5[%c0_7, %c0_8] : memref<128x256xf32, #tpu.memory_space<vmem>>, vector<128x256xf32>
    %cst_9 = arith.constant dense<0.000000e+00> : vector<128x256xf32>
    %10 = tpu.matmul %9, %8, %cst_9 {dimension_numbers = #tpu.dot_dimension_numbers<[1], [0], [0], [1], [0, 0, 1, 1], [], []>} : vector<128x256xf32>, vector<256x256xf32>, vector<128x256xf32> -> vector<128x256xf32>
    %c0_10 = arith.constant 0 : index
    %c0_11 = arith.constant 0 : index
    %11 = vector.load %arg6[%c0_10, %c0_11] : memref<128x1xf32, #tpu.memory_space<vmem>>, vector<128x1xf32>
    %12 = vector.broadcast %11 : vector<128x1xf32> to vector<128x256xf32>
    %13 = arith.addf %10, %12 : vector<128x256xf32>
    %cst_12 = arith.constant 0.000000e+00 : f32
    %14 = vector.broadcast %cst_12 : f32 to vector<128x256xf32>
    %15 = arith.maximumf %13, %14 : vector<128x256xf32>
    %16 = tpu.iota {dimensions = array<i32: 1>} : vector<1x256xi32>
    %c256_i32 = arith.constant 256 : i32
    %17 = arith.muli %arg1, %c256_i32 : i32
    %18 = vector.broadcast %17 : i32 to vector<1x256xi32>
    %19 = arith.addi %18, %16 : vector<1x256xi32>
    %c200_i32 = arith.constant 200 : i32
    %20 = vector.broadcast %c200_i32 : i32 to vector<1x256xi32>
    %21 = arith.cmpi slt, %19, %20 : vector<1x256xi32>
    %cst_13 = arith.constant 0.000000e+00 : f32
    %22 = vector.shape_cast %21 : vector<1x256xi1> to vector<1x256xi1>
    %23 = vector.broadcast %22 : vector<1x256xi1> to vector<128x256xi1>
    %24 = vector.broadcast %cst_13 : f32 to vector<128x256xf32>
    %25 = arith.select %23, %15, %24 : vector<128x256xi1>, vector<128x256xf32>
    %cst_14 = arith.constant dense<0.000000e+00> : vector<128xf32>
    %26 = vector.multi_reduction <add>, %25, %cst_14 [1] : vector<128x256xf32> to vector<128xf32>
    %27 = vector.shape_cast %26 : vector<128xf32> to vector<128x1xf32>
    %c0_15 = arith.constant 0 : index
    %c0_16 = arith.constant 0 : index
    %c0_17 = arith.constant 0 : index
    %c0_18 = arith.constant 0 : index
    %28 = vector.load %arg7[%c0_15, %c0_16, %c0_17, %c0_18] : memref<1x1x128x1xf32, #tpu.memory_space<vmem>>, vector<1x1x128x1xf32>
    %29 = vector.shape_cast %28 : vector<1x1x128x1xf32> to vector<128x1xf32>
    %30 = vector.shape_cast %27 : vector<128x1xf32> to vector<1x1x128x1xf32>
    tpu.vector_store %arg7[%c0_15, %c0_16, %c0_17, %c0_18], %30 {strides = array<i32>} : memref<1x1x128x1xf32, #tpu.memory_space<vmem>>, vector<1x1x128x1xf32>,
    %31 = arith.mulf %25, %25 : vector<128x256xf32>
    %cst_19 = arith.constant dense<0.000000e+00> : vector<128xf32>
    %32 = vector.multi_reduction <add>, %31, %cst_19 [1] : vector<128x256xf32> to vector<128xf32>
    %33 = vector.shape_cast %32 : vector<128xf32> to vector<128x1xf32>
    %c0_20 = arith.constant 0 : index
    %c0_21 = arith.constant 0 : index
    %c0_22 = arith.constant 0 : index
    %c0_23 = arith.constant 0 : index
    %34 = vector.load %arg8[%c0_20, %c0_21, %c0_22, %c0_23] : memref<1x1x128x1xf32, #tpu.memory_space<vmem>>, vector<1x1x128x1xf32>
    %35 = vector.shape_cast %34 : vector<1x1x128x1xf32> to vector<128x1xf32>
    %36 = vector.shape_cast %33 : vector<128x1xf32> to vector<1x1x128x1xf32>
    tpu.vector_store %arg8[%c0_20, %c0_21, %c0_22, %c0_23], %36 {strides = array<i32>} : memref<1x1x128x1xf32, #tpu.memory_space<vmem>>, vector<1x1x128x1xf32>,
    return
  }
  func.func @transform_0(%arg0: i32, %arg1: i32) -> (i32, i32, i32) {
    %c0_i32 = arith.constant 0 : i32
    %c0_i32_0 = arith.constant 0 : i32
    return %arg0, %c0_i32, %arg1 : i32, i32, i32
  }
  func.func @transform_1(%arg0: i32, %arg1: i32) -> (i32, i32) {
    %c0_i32 = arith.constant 0 : i32
    %c0_i32_0 = arith.constant 0 : i32
    %c0_i32_1 = arith.constant 0 : i32
    return %c0_i32, %c0_i32_0 : i32, i32
  }
  func.func @transform_2(%arg0: i32, %arg1: i32) -> (i32, i32) {
    %c0_i32 = arith.constant 0 : i32
    %c0_i32_0 = arith.constant 0 : i32
    %c0_i32_1 = arith.constant 0 : i32
    return %c0_i32, %c0_i32_0 : i32, i32
  }
  func.func @transform_3(%arg0: i32, %arg1: i32) -> (i32, i32) {
    %c0_i32 = arith.constant 0 : i32
    %c0_i32_0 = arith.constant 0 : i32
    %c0_i32_1 = arith.constant 0 : i32
    return %c0_i32, %c0_i32_0 : i32, i32
  }
  func.func @transform_4(%arg0: i32, %arg1: i32) -> (i32, i32) {
    %c0_i32 = arith.constant 0 : i32
    %c0_i32_0 = arith.constant 0 : i32
    %c0_i32_1 = arith.constant 0 : i32
    return %c0_i32, %c0_i32_0 : i32, i32
  }
  func.func @transform_5(%arg0: i32, %arg1: i32) -> (i32, i32, i32, i32) {
    %c0_i32 = arith.constant 0 : i32
    %c0_i32_0 = arith.constant 0 : i32
    %c0_i32_1 = arith.constant 0 : i32
    return %arg0, %arg1, %c0_i32, %c0_i32_0 : i32, i32, i32, i32
  }
  func.func @transform_6(%arg0: i32, %arg1: i32) -> (i32, i32, i32, i32) {
    %c0_i32 = arith.constant 0 : i32
    %c0_i32_0 = arith.constant 0 : i32
    %c0_i32_1 = arith.constant 0 : i32
    return %arg0, %arg1, %c0_i32, %c0_i32_0 : i32, i32, i32, i32
  }
}

</mosaic_0001>

<llo_original>
// kernel: mlp_forward.3
$region0: #{mlp_forward.3}
  #allocation0 [shape = 'u32[]', space=smem, size = 0x4, offset = 0x4, fixed_abs, tag = 'smem constant byte address 0x4 - core index']
  #allocation1 [shape = 'u32[144,128]{1,0:T(1,128)}', space=vmem, size = 0x12000, scoped, tag = 'internal scratch']
  %s0 = inlined_call_operand.vmem [shape: f32[2,24,256], index: 0, kind: input, shape index: {}]
  %s1 = inlined_call_operand.vmem [shape: f32[256,24], index: 1, kind: input, shape index: {}]
  %s2 = inlined_call_operand.vmem [shape: f32[256,1], index: 2, kind: input, shape index: {}]
  %s3 = inlined_call_operand.vmem [shape: f32[2,1,256,1], index: 3, kind: output, shape index: {0}]
  %s4 = inlined_call_operand.vmem [shape: f32[2,1,256,1], index: 4, kind: output, shape index: {1}]
  %5 = xla_tuple %s3, %s4
  %s6 = sld [smem:[#allocation0]]
  $region53: #{mlp_forward.3} parent=0
    _
  %s8 = ssub.s32 1, %s6
  %s9 = scalar_select 0, %s8, %s6
  loop: start=0, step=1, limit=4
  $region2: #{mlp_forward.3} parent=0 // loop_pre_header
    _
  $region3: #{mlp_forward.3} parent=0 // loop_header
    %s11 = sphi 0, %s15
    %p12 = scmp.ge.s32.totalorder %s11, 4
    %s18 = sphi 0, %s30
    %s19 = sphi 0, %s26
    %s20 = sphi 0, %s18
    %s21 = sphi 0, %s19
    %s22 = sphi 0, %s20
    %s23 = sphi 0, %s21
    %s35 = sphi 0, %s37
    %s38 = sphi 0, %s35
    %s39 = sphi 0, %s38
    %s55 = sphi 0, %s39
    %s59 = sphi 0, %s59
    %s61 = sphi 0, %s59
    %s62 = sphi 0, %s61
    %s76 = sphi 0, %s62
    %s80 = sphi 0, %s80
    %s82 = sphi 0, %s80
    %s83 = sphi 0, %s82
    %s97 = sphi 0, %s83
    %s105 = sphi 0, %s107
    %s108 = sphi 0, %s105
    %s109 = sphi 0, %s108
    %s125 = sphi 0, %s109
    %s133 = sphi 0, %s135
    %s136 = sphi 0, %s133
    %s137 = sphi 0, %s136
    %s153 = sphi 0, %s137
  $region4: #{mlp_forward.3} parent=0 // loop_header_branch
    %14 = sbr.rel (%p12) target = $region8
  $region5: #{mlp_forward.3} parent=0 // loop_body
    %s16 = ssub.s32 %s11, 1
    %s17 = ssub.s32 %s11, 2
    %s24 = sadd.s32 1, %s19
    %p25 = scmp.ge.s32.totalorder %s24, 1
    %s26 = scalar_select %p25, 0, %s24
    %s27 = sadd.s32 1, %s18
    %s28 = scalar_select %p25, %s27, %s18
    %p29 = scmp.ge.s32.totalorder %s28, 2
    %s30 = scalar_select %p29, 0, %s28
    %s31 = ssub.s32 %s18, %s30
    %s32 = ssub.s32 %s19, %s26
    %s33 = sor.u32 %s31, %s32
    %p34 = scmp.eq.s32.totalorder %s33, 0
    %s36 = sadd.s32 %s35, 1
    %s37 = scalar_select %p34, %s35, %s36
    %p40 = pneg %p34
    %p41 = scmp.eq.s32.totalorder %s11, 1
    %p42 = por %p40, %p41
    %p43 = scmp.ne.s32.totalorder %s35, %s38
    %p44 = scmp.eq.s32.totalorder %s11, 0
    %p45 = por %p43, %p44
    %p46 = scmp.ne.s32.totalorder %s35, %s38
    %p47 = scmp.eq.s32.totalorder %s16, 1
    %p48 = por %p46, %p47
    %p49 = scmp.ne.s32.totalorder %s38, %s39
    %p50 = scmp.eq.s32.totalorder %s16, 0
    %p51 = por %p49, %p50
    %p52 = scmp.ne.s32.totalorder %s38, %s39
    %p53 = scmp.eq.s32.totalorder %s17, 1
    %p54 = por %p52, %p53
    %p56 = scmp.ne.s32.totalorder %s39, %s55
    %p57 = scmp.eq.s32.totalorder %s17, 0
    %p58 = por %p56, %p57
    %s60 = sadd.s32 %s59, 1
    %p63 = scmp.eq.s32.totalorder %s11, 1
    %p64 = scmp.ne.s32.totalorder %s59, %s61
    %p65 = scmp.eq.s32.totalorder %s11, 0
    %p66 = por %p64, %p65
    %p67 = scmp.ne.s32.totalorder %s59, %s61
    %p68 = scmp.eq.s32.totalorder %s16, 1
    %p69 = por %p67, %p68
    %p70 = scmp.ne.s32.totalorder %s61, %s62
    %p71 = scmp.eq.s32.totalorder %s16, 0
    %p72 = por %p70, %p71
    %p73 = scmp.ne.s32.totalorder %s61, %s62
    %p74 = scmp.eq.s32.totalorder %s17, 1
    %p75 = por %p73, %p74
    %p77 = scmp.ne.s32.totalorder %s62, %s76
    %p78 = scmp.eq.s32.totalorder %s17, 0
    %p79 = por %p77, %p78
    %s81 = sadd.s32 %s80, 1
    %p84 = scmp.eq.s32.totalorder %s11, 1
    %p85 = scmp.ne.s32.totalorder %s80, %s82
    %p86 = scmp.eq.s32.totalorder %s11, 0
    %p87 = por %p85, %p86
    %p88 = scmp.ne.s32.totalorder %s80, %s82
    %p89 = scmp.eq.s32.totalorder %s16, 1
    %p90 = por %p88, %p89
    %p91 = scmp.ne.s32.totalorder %s82, %s83
    %p92 = scmp.eq.s32.totalorder %s16, 0
    %p93 = por %p91, %p92
    %p94 = scmp.ne.s32.totalorder %s82, %s83
    %p95 = scmp.eq.s32.totalorder %s17, 1
    %p96 = por %p94, %p95
    %p98 = scmp.ne.s32.totalorder %s83, %s97
    %p99 = scmp.eq.s32.totalorder %s17, 0
    %p100 = por %p98, %p99
    %s101 = ssub.s32 %s18, %s30
    %s102 = ssub.s32 %s19, %s26
    %s103 = sor.u32 %s101, %s102
    %p104 = scmp.eq.s32.totalorder %s103, 0
    %s106 = sadd.s32 %s105, 1
    %s107 = scalar_select %p104, %s105, %s106
    %p110 = pneg %p104
    %p111 = scmp.eq.s32.totalorder %s11, 1
    %p112 = por %p110, %p111
    %p113 = scmp.ne.s32.totalorder %s105, %s108
    %p114 = scmp.eq.s32.totalorder %s11, 0
    %p115 = por %p113, %p114
    %p116 = scmp.ne.s32.totalorder %s105, %s108
    %p117 = scmp.eq.s32.totalorder %s16, 1
    %p118 = por %p116, %p117
    %p119 = scmp.ne.s32.totalorder %s108, %s109
    %p120 = scmp.eq.s32.totalorder %s16, 0
    %p121 = por %p119, %p120
    %p122 = scmp.ne.s32.totalorder %s108, %s109
    %p123 = scmp.eq.s32.totalorder %s17, 1
    %p124 = por %p122, %p123
    %p126 = scmp.ne.s32.totalorder %s109, %s125
    %p127 = scmp.eq.s32.totalorder %s17, 0
    %p128 = por %p126, %p127
    %s129 = ssub.s32 %s18, %s30
    %s130 = ssub.s32 %s19, %s26
    %s131 = sor.u32 %s129, %s130
    %p132 = scmp.eq.s32.totalorder %s131, 0
    %s134 = sadd.s32 %s133, 1
    %s135 = scalar_select %p132, %s133, %s134
    %p138 = pneg %p132
    %p139 = scmp.eq.s32.totalorder %s11, 1
    %p140 = por %p138, %p139
    %p141 = scmp.ne.s32.totalorder %s133, %s136
    %p142 = scmp.eq.s32.totalorder %s11, 0
    %p143 = por %p141, %p142
    %p144 = scmp.ne.s32.totalorder %s133, %s136
    %p145 = scmp.eq.s32.totalorder %s16, 1
    %p146 = por %p144, %p145
    %p147 = scmp.ne.s32.totalorder %s136, %s137
    %p148 = scmp.eq.s32.totalorder %s16, 0
    %p149 = por %p147, %p148
    %p150 = scmp.ne.s32.totalorder %s136, %s137
    %p151 = scmp.eq.s32.totalorder %s17, 1
    %p152 = por %p150, %p151
    %p154 = scmp.ne.s32.totalorder %s137, %s153
    %p155 = scmp.eq.s32.totalorder %s17, 0
    %p156 = por %p154, %p155
    %p157 = scmp.le.s32.totalorder 1, %s11
    %p158 = scmp.lt.s32.totalorder %s11, 3
    %p159 = pnand %p157, %p158
    %p160 = pneg %p159
    // Predicated region
    $region9: #{mlp_forward.3} parent=5 // pred_check
      _
    $region10: #{mlp_forward.3} parent=5 // pred_check_branch
      %162 = sbr.rel (%p159) target = $region12
    $region11: #{mlp_forward.3} parent=5 // pred_region
      %s163 = ssub.s32 %s11, 1
      // Predicated region
      $region13: #{mlp_forward.3} parent=11 // pred_check
        %p164 = pneg %p72
      $region14: #{mlp_forward.3} parent=11 // pred_check_branch
        %166 = sbr.rel (%p164) target = $region16
      $region15: #{mlp_forward.3} parent=11 // pred_region
        _
      $region16: #{mlp_forward.3} parent=11 // pred_fallthru
        _
      // Predicated region
      $region17: #{mlp_forward.3} parent=11 // pred_check
        %p167 = pneg %p93
      $region18: #{mlp_forward.3} parent=11 // pred_check_branch
        %169 = sbr.rel (%p167) target = $region20
      $region19: #{mlp_forward.3} parent=11 // pred_region
        _
      $region20: #{mlp_forward.3} parent=11 // pred_fallthru
        _
    $region12: #{mlp_forward.3} parent=5 // pred_fallthru
      _
    %p170 = scmp.lt.s32.totalorder %s11, 2
    // Predicated region
    $region21: #{mlp_forward.3} parent=5 // pred_check
      %p171 = pneg %p170
    $region22: #{mlp_forward.3} parent=5 // pred_check_branch
      %173 = sbr.rel (%p171) target = $region24
    $region23: #{mlp_forward.3} parent=5 // pred_region
      // Predicated region
      $region25: #{mlp_forward.3} parent=23 // pred_check
        %p174 = pneg %p45
      $region26: #{mlp_forward.3} parent=23 // pred_check_branch
        %176 = sbr.rel (%p174) target = $region28
      $region27: #{mlp_forward.3} parent=23 // pred_region
        %s177 = smul.u32 2, %s19
        %p178 = scmp.lt.s32.totalorder %s18, 1
        %s179 = scalar_select %p178, %s18, 1
        %p180 = scmp.lt.s32.totalorder %s177, 1
        %s181 = scalar_select %p180, %s177, 1
        %s182 = smul.addr %s179, 6
        %s183 = sadd.s32 %s181, %s182
        %s184 = smul.addr %s183, 8
        %s185 = scalar_lea.vmem %s0, %s184
        %s186 = smul.u32 2, %s19
      $region28: #{mlp_forward.3} parent=23 // pred_fallthru
        _
    $region24: #{mlp_forward.3} parent=5 // pred_fallthru
      _
    %p187 = scmp.le.s32.totalorder 1, %s11
    %p188 = scmp.lt.s32.totalorder %s11, 3
    %p189 = pnand %p187, %p188
    %p190 = pneg %p189
    // Predicated region
    $region29: #{mlp_forward.3} parent=5 // pred_check
      _
    $region30: #{mlp_forward.3} parent=5 // pred_check_branch
      %192 = sbr.rel (%p189) target = $region32
    $region31: #{mlp_forward.3} parent=5 // pred_region
      %s193 = ssub.s32 %s11, 1
      %s194 = smul.u32 2, %s21
      %p195 = scmp.lt.s32.totalorder %s20, 1
      %s196 = scalar_select %p195, %s20, 1
      %p197 = scmp.lt.s32.totalorder %s194, 1
      %s198 = scalar_select %p197, %s194, 1
      %s199 = smul.addr %s196, 6
      %s200 = sadd.s32 %s198, %s199
      %s201 = smul.addr %s200, 8
      %s202 = scalar_lea.vmem %s0, %s201
      %p203 = pneg %p51
      %p204 = pneg %p48
      %p205 = pneg %p72
      %p206 = pneg %p69
      %p207 = pneg %p93
      %p208 = pneg %p90
      %p209 = pneg %p121
      %p210 = pneg %p118
      %p211 = scmp.lt.s32.totalorder %s20, 1
      %s212 = scalar_select %p211, %s20, 1
      %p213 = scmp.lt.s32.totalorder %s21, 0
      %s214 = scalar_select %p213, %s21, 0
      %s215 = smul.addr %s214, 32
      %s216 = smul.addr %s212, 32
      %s217 = sadd.s32 %s215, %s216
      %s218 = smul.addr %s217, 8
      %s219 = scalar_lea.vmem %s3, %s218
      %p220 = pneg %p149
      %p221 = pneg %p146
      %p222 = scmp.lt.s32.totalorder %s20, 1
      %s223 = scalar_select %p222, %s20, 1
      %p224 = scmp.lt.s32.totalorder %s21, 0
      %s225 = scalar_select %p224, %s21, 0
      %s226 = smul.addr %s225, 32
      %s227 = smul.addr %s223, 32
      %s228 = sadd.s32 %s226, %s227
      %s229 = smul.addr %s228, 8
      %s230 = scalar_lea.vmem %s4, %s229
      %s231 = smul.u32 2, %s21
      %p232 = scmp.lt.s32.totalorder %s20, 1
      %s233 = scalar_select %p232, %s20, 1
      %p234 = scmp.lt.s32.totalorder %s231, 1
      %s235 = scalar_select %p234, %s231, 1
      %s236 = smul.addr %s233, 6
      %s237 = sadd.s32 %s235, %s236
      %s238 = smul.addr %s237, 8
      %s239 = scalar_lea.vmem %s0, %s238
      %s240 = smul.u32 2, %s21
      %p241 = scmp.lt.s32.totalorder %s20, 1
      %s242 = scalar_select %p241, %s20, 1
      %p243 = scmp.lt.s32.totalorder %s21, 0
      %s244 = scalar_select %p243, %s21, 0
      %s245 = smul.addr %s244, 32
      %s246 = smul.addr %s242, 32
      %s247 = sadd.s32 %s245, %s246
      %s248 = smul.addr %s247, 8
      %s249 = scalar_lea.vmem %s3, %s248
      %p250 = scmp.lt.s32.totalorder %s20, 1
      %s251 = scalar_select %p250, %s20, 1
      %p252 = scmp.lt.s32.totalorder %s21, 0
      %s253 = scalar_select %p252, %s21, 0
      %s254 = smul.addr %s253, 32
      %s255 = smul.addr %s251, 32
      %s256 = sadd.s32 %s254, %s255
      %s257 = smul.addr %s256, 8
      %s258 = scalar_lea.vmem %s4, %s257
      %v259 = vld [vmem:[%s239] sm:$0xff]
      %v260 = vld [vmem:[%s239 + $0x8] sm:$0xff]
      %v261 = vld [vmem:[%s239 + $0x10] sm:$0xff]
      %v262 = vld [vmem:[%s239 + $0x18] sm:$0xff]
      %v263 = vld [vmem:[%s239 + $0x20] sm:$0xff]
      %v264 = vld [vmem:[%s239 + $0x28] sm:$0xff]
      %v265 = vld [vmem:[%s1] sm:$0xff]
      %v266 = vld [vmem:[%s1 + $0x8] sm:$0xff]
      %v267 = vld [vmem:[%s1 + $0x10] sm:$0xff]
      %v268 = vld [vmem:[%s1 + $0x18] sm:$0xff]
      %v269 = vld [vmem:[%s1 + $0x20] sm:$0xff]
      %v270 = vld [vmem:[%s1 + $0x28] sm:$0xff]
      %v271 = vld [vmem:[%s1 + $0x30] sm:$0xff]
      %v272 = vld [vmem:[%s1 + $0x38] sm:$0xff]
      %v273 = vld [vmem:[%s1 + $0x40] sm:$0xff]
      %v274 = vld [vmem:[%s1 + $0x48] sm:$0xff]
      %v275 = vld [vmem:[%s1 + $0x50] sm:$0xff]
      %v276 = vld [vmem:[%s1 + $0x58] sm:$0xff]
      %v277 = vld [vmem:[%s1 + $0x60] sm:$0xff]
      %v278 = vld [vmem:[%s1 + $0x68] sm:$0xff]
      %v279 = vld [vmem:[%s1 + $0x70] sm:$0xff]
      %v280 = vld [vmem:[%s1 + $0x78] sm:$0xff]
      %v281 = vld [vmem:[%s1 + $0x80] sm:$0xff]
      %v282 = vld [vmem:[%s1 + $0x88] sm:$0xff]
      %v283 = vld [vmem:[%s1 + $0x90] sm:$0xff]
      %v284 = vld [vmem:[%s1 + $0x98] sm:$0xff]
      %v285 = vld [vmem:[%s1 + $0xa0] sm:$0xff]
      %v286 = vld [vmem:[%s1 + $0xa8] sm:$0xff]
      %v287 = vld [vmem:[%s1 + $0xb0] sm:$0xff]
      %v288 = vld [vmem:[%s1 + $0xb8] sm:$0xff]
      %v289 = vld [vmem:[%s1 + $0xc0] sm:$0xff]
      %v290 = vld [vmem:[%s1 + $0xc8] sm:$0xff]
      %v291 = vld [vmem:[%s1 + $0xd0] sm:$0xff]
      %v292 = vld [vmem:[%s1 + $0xd8] sm:$0xff]
      %v293 = vld [vmem:[%s1 + $0xe0] sm:$0xff]
      %v294 = vld [vmem:[%s1 + $0xe8] sm:$0xff]
      %v295 = vld [vmem:[%s1 + $0xf0] sm:$0xff]
      %v296 = vld [vmem:[%s1 + $0xf8] sm:$0xff]
      %v297 = vld [vmem:[%s2] sm:$0xff]
      %v298 = vld [vmem:[%s2 + $0x8] sm:$0xff]
      %v299 = vld [vmem:[%s2 + $0x10] sm:$0xff]
      %v300 = vld [vmem:[%s2 + $0x18] sm:$0xff]
      %v301 = vld [vmem:[%s2 + $0x20] sm:$0xff]
      %v302 = vld [vmem:[%s2 + $0x28] sm:$0xff]
      %v303 = vld [vmem:[%s2 + $0x30] sm:$0xff]
      %v304 = vld [vmem:[%s2 + $0x38] sm:$0xff]
      %v305 = vld [vmem:[%s2 + $0x40] sm:$0xff]
      %v306 = vld [vmem:[%s2 + $0x48] sm:$0xff]
      %v307 = vld [vmem:[%s2 + $0x50] sm:$0xff]
      %v308 = vld [vmem:[%s2 + $0x58] sm:$0xff]
      %v309 = vld [vmem:[%s2 + $0x60] sm:$0xff]
      %v310 = vld [vmem:[%s2 + $0x68] sm:$0xff]
      %v311 = vld [vmem:[%s2 + $0x70] sm:$0xff]
      %v312 = vld [vmem:[%s2 + $0x78] sm:$0xff]
      %v313 = vld [vmem:[%s2 + $0x80] sm:$0xff]
      %v314 = vld [vmem:[%s2 + $0x88] sm:$0xff]
      %v315 = vld [vmem:[%s2 + $0x90] sm:$0xff]
      %v316 = vld [vmem:[%s2 + $0x98] sm:$0xff]
      %v317 = vld [vmem:[%s2 + $0xa0] sm:$0xff]
      %v318 = vld [vmem:[%s2 + $0xa8] sm:$0xff]
      %v319 = vld [vmem:[%s2 + $0xb0] sm:$0xff]
      %v320 = vld [vmem:[%s2 + $0xb8] sm:$0xff]
      %v321 = vld [vmem:[%s2 + $0xc0] sm:$0xff]
      %v322 = vld [vmem:[%s2 + $0xc8] sm:$0xff]
      %v323 = vld [vmem:[%s2 + $0xd0] sm:$0xff]
      %v324 = vld [vmem:[%s2 + $0xd8] sm:$0xff]
      %v325 = vld [vmem:[%s2 + $0xe0] sm:$0xff]
      %v326 = vld [vmem:[%s2 + $0xe8] sm:$0xff]
      %v327 = vld [vmem:[%s2 + $0xf0] sm:$0xff]
      %v328 = vld [vmem:[%s2 + $0xf8] sm:$0xff]
      %330 = vset.pattern.permute.xlu0 0
      %331 = vperm.xlu0 %330, %v297
      %v332 = vpop.permute.xlu0 %331
      %335 = vset.pattern.permute.xlu0 0
      %336 = vperm.xlu0 %335, %v298
      %v337 = vpop.permute.xlu0 %336
      %340 = vset.pattern.permute.xlu0 0
      %341 = vperm.xlu0 %340, %v299
      %v342 = vpop.permute.xlu0 %341
      %345 = vset.pattern.permute.xlu0 0
      %346 = vperm.xlu0 %345, %v300
      %v347 = vpop.permute.xlu0 %346
      %350 = vset.pattern.permute.xlu0 0
      %351 = vperm.xlu0 %350, %v301
      %v352 = vpop.permute.xlu0 %351
      %355 = vset.pattern.permute.xlu0 0
      %356 = vperm.xlu0 %355, %v302
      %v357 = vpop.permute.xlu0 %356
      %360 = vset.pattern.permute.xlu0 0
      %361 = vperm.xlu0 %360, %v303
      %v362 = vpop.permute.xlu0 %361
      %365 = vset.pattern.permute.xlu0 0
      %366 = vperm.xlu0 %365, %v304
      %v367 = vpop.permute.xlu0 %366
      %370 = vset.pattern.permute.xlu0 0
      %371 = vperm.xlu0 %370, %v305
      %v372 = vpop.permute.xlu0 %371
      %375 = vset.pattern.permute.xlu0 0
      %376 = vperm.xlu0 %375, %v306
      %v377 = vpop.permute.xlu0 %376
      %380 = vset.pattern.permute.xlu0 0
      %381 = vperm.xlu0 %380, %v307
      %v382 = vpop.permute.xlu0 %381
      %385 = vset.pattern.permute.xlu0 0
      %386 = vperm.xlu0 %385, %v308
      %v387 = vpop.permute.xlu0 %386
      %390 = vset.pattern.permute.xlu0 0
      %391 = vperm.xlu0 %390, %v309
      %v392 = vpop.permute.xlu0 %391
      %395 = vset.pattern.permute.xlu0 0
      %396 = vperm.xlu0 %395, %v310
      %v397 = vpop.permute.xlu0 %396
      %400 = vset.pattern.permute.xlu0 0
      %401 = vperm.xlu0 %400, %v311
      %v402 = vpop.permute.xlu0 %401
      %405 = vset.pattern.permute.xlu0 0
      %406 = vperm.xlu0 %405, %v312
      %v407 = vpop.permute.xlu0 %406
      %410 = vset.pattern.permute.xlu0 0
      %411 = vperm.xlu0 %410, %v313
      %v412 = vpop.permute.xlu0 %411
      %415 = vset.pattern.permute.xlu0 0
      %416 = vperm.xlu0 %415, %v314
      %v417 = vpop.permute.xlu0 %416
      %420 = vset.pattern.permute.xlu0 0
      %421 = vperm.xlu0 %420, %v315
      %v422 = vpop.permute.xlu0 %421
      %425 = vset.pattern.permute.xlu0 0
      %426 = vperm.xlu0 %425, %v316
      %v427 = vpop.permute.xlu0 %426
      %430 = vset.pattern.permute.xlu0 0
      %431 = vperm.xlu0 %430, %v317
      %v432 = vpop.permute.xlu0 %431
      %435 = vset.pattern.permute.xlu0 0
      %436 = vperm.xlu0 %435, %v318
      %v437 = vpop.permute.xlu0 %436
      %440 = vset.pattern.permute.xlu0 0
      %441 = vperm.xlu0 %440, %v319
      %v442 = vpop.permute.xlu0 %441
      %445 = vset.pattern.permute.xlu0 0
      %446 = vperm.xlu0 %445, %v320
      %v447 = vpop.permute.xlu0 %446
      %450 = vset.pattern.permute.xlu0 0
      %451 = vperm.xlu0 %450, %v321
      %v452 = vpop.permute.xlu0 %451
      %455 = vset.pattern.permute.xlu0 0
      %456 = vperm.xlu0 %455, %v322
      %v457 = vpop.permute.xlu0 %456
      %460 = vset.pattern.permute.xlu0 0
      %461 = vperm.xlu0 %460, %v323
      %v462 = vpop.permute.xlu0 %461
      %465 = vset.pattern.permute.xlu0 0
      %466 = vperm.xlu0 %465, %v324
      %v467 = vpop.permute.xlu0 %466
      %470 = vset.pattern.permute.xlu0 0
      %471 = vperm.xlu0 %470, %v325
      %v472 = vpop.permute.xlu0 %471
      %475 = vset.pattern.permute.xlu0 0
      %476 = vperm.xlu0 %475, %v326
      %v477 = vpop.permute.xlu0 %476
      %480 = vset.pattern.permute.xlu0 0
      %481 = vperm.xlu0 %480, %v327
      %v482 = vpop.permute.xlu0 %481
      %485 = vset.pattern.permute.xlu0 0
      %486 = vperm.xlu0 %485, %v328
      %v487 = vpop.permute.xlu0 %486
      %vm489 = vcmask 195584
      %v491 = vsel %vm489, %v265, 0
      %v494 = vsel %vm489, %v266, 0
      %v497 = vsel %vm489, %v267, 0
      %v500 = vsel %vm489, %v268, 0
      %v503 = vsel %vm489, %v269, 0
      %v506 = vsel %vm489, %v270, 0
      %v509 = vsel %vm489, %v271, 0
      %v512 = vsel %vm489, %v272, 0
      %v515 = vsel %vm489, %v273, 0
      %v518 = vsel %vm489, %v274, 0
      %v521 = vsel %vm489, %v275, 0
      %v524 = vsel %vm489, %v276, 0
      %v527 = vsel %vm489, %v277, 0
      %v530 = vsel %vm489, %v278, 0
      %v533 = vsel %vm489, %v279, 0
      %v536 = vsel %vm489, %v280, 0
      %v539 = vsel %vm489, %v281, 0
      %v542 = vsel %vm489, %v282, 0
      %v545 = vsel %vm489, %v283, 0
      %v548 = vsel %vm489, %v284, 0
      %v551 = vsel %vm489, %v285, 0
      %v554 = vsel %vm489, %v286, 0
      %v557 = vsel %vm489, %v287, 0
      %v560 = vsel %vm489, %v288, 0
      %v563 = vsel %vm489, %v289, 0
      %v566 = vsel %vm489, %v290, 0
      %v569 = vsel %vm489, %v291, 0
      %v572 = vsel %vm489, %v292, 0
      %v575 = vsel %vm489, %v293, 0
      %v578 = vsel %vm489, %v294, 0
      %v581 = vsel %vm489, %v295, 0
      %v584 = vsel %vm489, %v296, 0
      %586 = vmatprep.subr.mxu0 %v260
      %587 = vmatpush1.msra.mxu0 %v259
      %588 = vmatprep.subr.mxu0 %v262
      %589 = vmatpush1.msra.mxu0 %v261
      %590 = vmatprep.subr.mxu0 %v264
      %591 = vmatpush1.msra.mxu0 %v263
      %592 = vmatprep.subr.mxu0 0.0
      %593 = vmatpush1.msra.mxu0 0.0
      %594 = vmatprep.subr.mxu0 0.0
      %595 = vmatpush1.msra.mxu0 0.0
      %596 = vmatprep.subr.mxu0 0.0
      %597 = vmatpush1.msra.mxu0 0.0
      %598 = vmatprep.subr.mxu0 0.0
      %599 = vmatpush1.msra.mxu0 0.0
      %600 = vmatprep.subr.mxu0 0.0
      %601 = vmatpush1.msra.mxu0 0.0
      %602 = vmatprep.subr.mxu0 0.0
      %603 = vmatpush1.msra.mxu0 0.0
      %604 = vmatprep.subr.mxu0 0.0
      %605 = vmatpush1.msra.mxu0 0.0
      %606 = vmatprep.subr.mxu0 0.0
      %607 = vmatpush1.msra.mxu0 0.0
      %608 = vmatprep.subr.mxu0 0.0
      %609 = vmatpush1.msra.mxu0 0.0
      %610 = vmatprep.subr.mxu0 0.0
      %611 = vmatpush1.msra.mxu0 0.0
      %612 = vmatprep.subr.mxu0 0.0
      %613 = vmatpush1.msra.mxu0 0.0
      %614 = vmatprep.subr.mxu0 0.0
      %615 = vmatpush1.msra.mxu0 0.0
      %616 = vmatprep.subr.mxu0 0.0
      %617 = vmatpush1.msra.mxu0 0.0
      %618 = vmatprep.subr.mxu0 0.0
      %619 = vmatpush1.msra.mxu0 0.0
      %620 = vmatprep.subr.mxu0 0.0
      %621 = vmatpush1.msra.mxu0 0.0
      %622 = vmatprep.subr.mxu0 0.0
      %623 = vmatpush1.msra.mxu0 0.0
      %624 = vmatprep.subr.mxu0 0.0
      %625 = vmatpush1.msra.mxu0 0.0
      %626 = vmatprep.subr.mxu0 0.0
      %627 = vmatpush1.msra.mxu0 0.0
      %628 = vmatprep.subr.mxu0 0.0
      %629 = vmatpush1.msra.mxu0 0.0
      %630 = vmatprep.subr.mxu0 0.0
      %631 = vmatpush1.msra.mxu0 0.0
      %632 = vmatprep.subr.mxu0 0.0
      %633 = vmatpush1.msra.mxu0 0.0
      %634 = vmatprep.subr.mxu0 0.0
      %635 = vmatpush1.msra.mxu0 0.0
      %636 = vmatprep.subr.mxu0 0.0
      %637 = vmatpush1.msra.mxu0 0.0
      %638 = vmatprep.subr.mxu0 0.0
      %639 = vmatpush1.msra.mxu0 0.0
      %640 = vmatprep.subr.mxu0 0.0
      %641 = vmatpush1.msra.mxu0 0.0
      %642 = vmatprep.subr.mxu0 0.0
      %643 = vmatpush1.msra.mxu0 0.0
      %644 = vmatprep.subr.mxu0 0.0
      %645 = vmatpush1.msra.mxu0 0.0
      %646 = vmatprep.subr.mxu0 0.0
      %647 = vmatpush1.msra.mxu0 0.0
      %648 = vmatprep.subr.mxu0 0.0
      %649 = vmatpush1.msra.mxu0 0.0
      %650 = vmatprep.mubr.f32.mxu0 0.0
      %651 = vmatmul.mubr.f32.gmra.mrb[0].mxu0 %v491
      %v652 = vpop.f32.mrb[0].mxu0
      %v653 = vadd.f32 %v332, %v652
      %v654 = vpop.f32.mrb[0].mxu0
      %v655 = vadd.f32 %v332, %v654
      %656 = vmatprep.mubr.f32.mxu0 0.0
      %657 = vmatmul.mubr.f32.gmra.mrb[0].mxu0 %v494
      %v658 = vpop.f32.mrb[0].mxu0
      %v659 = vadd.f32 %v337, %v658
      %v660 = vpop.f32.mrb[0].mxu0
      %v661 = vadd.f32 %v337, %v660
      %662 = vmatprep.mubr.f32.mxu0 0.0
      %663 = vmatmul.mubr.f32.gmra.mrb[0].mxu0 %v497
      %v664 = vpop.f32.mrb[0].mxu0
      %v665 = vadd.f32 %v342, %v664
      %v666 = vpop.f32.mrb[0].mxu0
      %v667 = vadd.f32 %v342, %v666
      %668 = vmatprep.mubr.f32.mxu0 0.0
      %669 = vmatmul.mubr.f32.gmra.mrb[0].mxu0 %v500
      %v670 = vpop.f32.mrb[0].mxu0
      %v671 = vadd.f32 %v347, %v670
      %v672 = vpop.f32.mrb[0].mxu0
      %v673 = vadd.f32 %v347, %v672
      %674 = vmatprep.mubr.f32.mxu0 0.0
      %675 = vmatmul.mubr.f32.gmra.mrb[0].mxu0 %v503
      %v676 = vpop.f32.mrb[0].mxu0
      %v677 = vadd.f32 %v352, %v676
      %v678 = vpop.f32.mrb[0].mxu0
      %v679 = vadd.f32 %v352, %v678
      %680 = vmatprep.mubr.f32.mxu0 0.0
      %681 = vmatmul.mubr.f32.gmra.mrb[0].mxu0 %v506
      %v682 = vpop.f32.mrb[0].mxu0
      %v683 = vadd.f32 %v357, %v682
      %v684 = vpop.f32.mrb[0].mxu0
      %v685 = vadd.f32 %v357, %v684
      %686 = vmatprep.mubr.f32.mxu0 0.0
      %687 = vmatmul.mubr.f32.gmra.mrb[0].mxu0 %v509
      %v688 = vpop.f32.mrb[0].mxu0
      %v689 = vadd.f32 %v362, %v688
      %v690 = vpop.f32.mrb[0].mxu0
      %v691 = vadd.f32 %v362, %v690
      %692 = vmatprep.mubr.f32.mxu0 0.0
      %693 = vmatmul.mubr.f32.gmra.mrb[0].mxu0 %v512
      %v694 = vpop.f32.mrb[0].mxu0
      %v695 = vadd.f32 %v367, %v694
      %v696 = vpop.f32.mrb[0].mxu0
      %v697 = vadd.f32 %v367, %v696
      %698 = vmatprep.mubr.f32.mxu0 0.0
      %699 = vmatmul.mubr.f32.gmra.mrb[0].mxu0 %v515
      %v700 = vpop.f32.mrb[0].mxu0
      %v701 = vadd.f32 %v372, %v700
      %v702 = vpop.f32.mrb[0].mxu0
      %v703 = vadd.f32 %v372, %v702
      %704 = vmatprep.mubr.f32.mxu0 0.0
      %705 = vmatmul.mubr.f32.gmra.mrb[0].mxu0 %v518
      %v706 = vpop.f32.mrb[0].mxu0
      %v707 = vadd.f32 %v377, %v706
      %v708 = vpop.f32.mrb[0].mxu0
      %v709 = vadd.f32 %v377, %v708
      %710 = vmatprep.mubr.f32.mxu0 0.0
      %711 = vmatmul.mubr.f32.gmra.mrb[0].mxu0 %v521
      %v712 = vpop.f32.mrb[0].mxu0
      %v713 = vadd.f32 %v382, %v712
      %v714 = vpop.f32.mrb[0].mxu0
      %v715 = vadd.f32 %v382, %v714
      %716 = vmatprep.mubr.f32.mxu0 0.0
      %717 = vmatmul.mubr.f32.gmra.mrb[0].mxu0 %v524
      %v718 = vpop.f32.mrb[0].mxu0
      %v719 = vadd.f32 %v387, %v718
      %v720 = vpop.f32.mrb[0].mxu0
      %v721 = vadd.f32 %v387, %v720
      %722 = vmatprep.mubr.f32.mxu0 0.0
      %723 = vmatmul.mubr.f32.gmra.mrb[0].mxu0 %v527
      %v724 = vpop.f32.mrb[0].mxu0
      %v725 = vadd.f32 %v392, %v724
      %v726 = vpop.f32.mrb[0].mxu0
      %v727 = vadd.f32 %v392, %v726
      %728 = vmatprep.mubr.f32.mxu0 0.0
      %729 = vmatmul.mubr.f32.gmra.mrb[0].mxu0 %v530
      %v730 = vpop.f32.mrb[0].mxu0
      %v731 = vadd.f32 %v397, %v730
      %v732 = vpop.f32.mrb[0].mxu0
      %v733 = vadd.f32 %v397, %v732
      %734 = vmatprep.mubr.f32.mxu0 0.0
      %735 = vmatmul.mubr.f32.gmra.mrb[0].mxu0 %v533
      %v736 = vpop.f32.mrb[0].mxu0
      %v737 = vadd.f32 %v402, %v736
      %v738 = vpop.f32.mrb[0].mxu0
      %v739 = vadd.f32 %v402, %v738
      %740 = vmatprep.mubr.f32.mxu0 0.0
      %741 = vmatmul.mubr.f32.gmra.mrb[0].mxu0 %v536
      %v742 = vpop.f32.mrb[0].mxu0
      %v743 = vadd.f32 %v407, %v742
      %v744 = vpop.f32.mrb[0].mxu0
      %v745 = vadd.f32 %v407, %v744
      %746 = vmatprep.mubr.f32.mxu0 0.0
      %747 = vmatmul.mubr.f32.gmra.mrb[0].mxu0 %v539
      %v748 = vpop.f32.mrb[0].mxu0
      %v749 = vadd.f32 %v412, %v748
      %v750 = vpop.f32.mrb[0].mxu0
      %v751 = vadd.f32 %v412, %v750
      %752 = vmatprep.mubr.f32.mxu0 0.0
      %753 = vmatmul.mubr.f32.gmra.mrb[0].mxu0 %v542
      %v754 = vpop.f32.mrb[0].mxu0
      %v755 = vadd.f32 %v417, %v754
      %v756 = vpop.f32.mrb[0].mxu0
      %v757 = vadd.f32 %v417, %v756
      %758 = vmatprep.mubr.f32.mxu0 0.0
      %759 = vmatmul.mubr.f32.gmra.mrb[0].mxu0 %v545
      %v760 = vpop.f32.mrb[0].mxu0
      %v761 = vadd.f32 %v422, %v760
      %v762 = vpop.f32.mrb[0].mxu0
      %v763 = vadd.f32 %v422, %v762
      %764 = vmatprep.mubr.f32.mxu0 0.0
      %765 = vmatmul.mubr.f32.gmra.mrb[0].mxu0 %v548
      %v766 = vpop.f32.mrb[0].mxu0
      %v767 = vadd.f32 %v427, %v766
      %v768 = vpop.f32.mrb[0].mxu0
      %v769 = vadd.f32 %v427, %v768
      %770 = vmatprep.mubr.f32.mxu0 0.0
      %771 = vmatmul.mubr.f32.gmra.mrb[0].mxu0 %v551
      %v772 = vpop.f32.mrb[0].mxu0
      %v773 = vadd.f32 %v432, %v772
      %v774 = vpop.f32.mrb[0].mxu0
      %v775 = vadd.f32 %v432, %v774
      %776 = vmatprep.mubr.f32.mxu0 0.0
      %777 = vmatmul.mubr.f32.gmra.mrb[0].mxu0 %v554
      %v778 = vpop.f32.mrb[0].mxu0
      %v779 = vadd.f32 %v437, %v778
      %v780 = vpop.f32.mrb[0].mxu0
      %v781 = vadd.f32 %v437, %v780
      %782 = vmatprep.mubr.f32.mxu0 0.0
      %783 = vmatmul.mubr.f32.gmra.mrb[0].mxu0 %v557
      %v784 = vpop.f32.mrb[0].mxu0
      %v785 = vadd.f32 %v442, %v784
      %v786 = vpop.f32.mrb[0].mxu0
      %v787 = vadd.f32 %v442, %v786
      %788 = vmatprep.mubr.f32.mxu0 0.0
      %789 = vmatmul.mubr.f32.gmra.mrb[0].mxu0 %v560
      %v790 = vpop.f32.mrb[0].mxu0
      %v791 = vadd.f32 %v447, %v790
      %v792 = vpop.f32.mrb[0].mxu0
      %v793 = vadd.f32 %v447, %v792
      %794 = vmatprep.mubr.f32.mxu0 0.0
      %795 = vmatmul.mubr.f32.gmra.mrb[0].mxu0 %v563
      %v796 = vpop.f32.mrb[0].mxu0
      %v797 = vadd.f32 %v452, %v796
      %v798 = vpop.f32.mrb[0].mxu0
      %v799 = vadd.f32 %v452, %v798
      %800 = vmatprep.mubr.f32.mxu0 0.0
      %801 = vmatmul.mubr.f32.gmra.mrb[0].mxu0 %v566
      %v802 = vpop.f32.mrb[0].mxu0
      %v803 = vadd.f32 %v457, %v802
      %v804 = vpop.f32.mrb[0].mxu0
      %v805 = vadd.f32 %v457, %v804
      %806 = vmatprep.mubr.f32.mxu0 0.0
      %807 = vmatmul.mubr.f32.gmra.mrb[0].mxu0 %v569
      %v808 = vpop.f32.mrb[0].mxu0
      %v809 = vadd.f32 %v462, %v808
      %v810 = vpop.f32.mrb[0].mxu0
      %v811 = vadd.f32 %v462, %v810
      %812 = vmatprep.mubr.f32.mxu0 0.0
      %813 = vmatmul.mubr.f32.gmra.mrb[0].mxu0 %v572
      %v814 = vpop.f32.mrb[0].mxu0
      %v815 = vadd.f32 %v467, %v814
      %v816 = vpop.f32.mrb[0].mxu0
      %v817 = vadd.f32 %v467, %v816
      %818 = vmatprep.mubr.f32.mxu0 0.0
      %819 = vmatmul.mubr.f32.gmra.mrb[0].mxu0 %v575
      %v820 = vpop.f32.mrb[0].mxu0
      %v821 = vadd.f32 %v472, %v820
      %v822 = vpop.f32.mrb[0].mxu0
      %v823 = vadd.f32 %v472, %v822
      %824 = vmatprep.mubr.f32.mxu0 0.0
      %825 = vmatmul.mubr.f32.gmra.mrb[0].mxu0 %v578
      %v826 = vpop.f32.mrb[0].mxu0
      %v827 = vadd.f32 %v477, %v826
      %v828 = vpop.f32.mrb[0].mxu0
      %v829 = vadd.f32 %v477, %v828
      %830 = vmatprep.mubr.f32.mxu0 0.0
      %831 = vmatmul.mubr.f32.gmra.mrb[0].mxu0 %v581
      %v832 = vpop.f32.mrb[0].mxu0
      %v833 = vadd.f32 %v482, %v832
      %v834 = vpop.f32.mrb[0].mxu0
      %v835 = vadd.f32 %v482, %v834
      %836 = vmatprep.mubr.f32.mxu0 0.0
      %837 = vmatmul.mubr.f32.gmra.mrb[0].mxu0 %v584
      %v838 = vpop.f32.mrb[0].mxu0
      %v839 = vadd.f32 %v487, %v838
      %v840 = vpop.f32.mrb[0].mxu0
      %v841 = vadd.f32 %v487, %v840
      %842 = vdwg.mxu0
      %v843 = vmax.f32 %v653, 0.0
      %v844 = vmax.f32 %v655, 0.0
      %v845 = vmax.f32 %v659, 0.0
      %v846 = vmax.f32 %v661, 0.0
      %v847 = vmax.f32 %v665, 0.0
      %v848 = vmax.f32 %v667, 0.0
      %v849 = vmax.f32 %v671, 0.0
      %v850 = vmax.f32 %v673, 0.0
      %v851 = vmax.f32 %v677, 0.0
      %v852 = vmax.f32 %v679, 0.0
      %v853 = vmax.f32 %v683, 0.0
      %v854 = vmax.f32 %v685, 0.0
      %v855 = vmax.f32 %v689, 0.0
      %v856 = vmax.f32 %v691, 0.0
      %v857 = vmax.f32 %v695, 0.0
      %v858 = vmax.f32 %v697, 0.0
      %v859 = vmax.f32 %v701, 0.0
      %v860 = vmax.f32 %v703, 0.0
      %v861 = vmax.f32 %v707, 0.0
      %v862 = vmax.f32 %v709, 0.0
      %v863 = vmax.f32 %v713, 0.0
      %v864 = vmax.f32 %v715, 0.0
      %v865 = vmax.f32 %v719, 0.0
      %v866 = vmax.f32 %v721, 0.0
      %v867 = vmax.f32 %v725, 0.0
      %v868 = vmax.f32 %v727, 0.0
      %v869 = vmax.f32 %v731, 0.0
      %v870 = vmax.f32 %v733, 0.0
      %v871 = vmax.f32 %v737, 0.0
      %v872 = vmax.f32 %v739, 0.0
      %v873 = vmax.f32 %v743, 0.0
      %v874 = vmax.f32 %v745, 0.0
      %v875 = vmax.f32 %v749, 0.0
      %v876 = vmax.f32 %v751, 0.0
      %v877 = vmax.f32 %v755, 0.0
      %v878 = vmax.f32 %v757, 0.0
      %v879 = vmax.f32 %v761, 0.0
      %v880 = vmax.f32 %v763, 0.0
      %v881 = vmax.f32 %v767, 0.0
      %v882 = vmax.f32 %v769, 0.0
      %v883 = vmax.f32 %v773, 0.0
      %v884 = vmax.f32 %v775, 0.0
      %v885 = vmax.f32 %v779, 0.0
      %v886 = vmax.f32 %v781, 0.0
      %v887 = vmax.f32 %v785, 0.0
      %v888 = vmax.f32 %v787, 0.0
      %v889 = vmax.f32 %v791, 0.0
      %v890 = vmax.f32 %v793, 0.0
      %v891 = vmax.f32 %v797, 0.0
      %v892 = vmax.f32 %v799, 0.0
      %v893 = vmax.f32 %v803, 0.0
      %v894 = vmax.f32 %v805, 0.0
      %v895 = vmax.f32 %v809, 0.0
      %v896 = vmax.f32 %v811, 0.0
      %v897 = vmax.f32 %v815, 0.0
      %v898 = vmax.f32 %v817, 0.0
      %v899 = vmax.f32 %v821, 0.0
      %v900 = vmax.f32 %v823, 0.0
      %v901 = vmax.f32 %v827, 0.0
      %v902 = vmax.f32 %v829, 0.0
      %v903 = vmax.f32 %v833, 0.0
      %v904 = vmax.f32 %v835, 0.0
      %v905 = vmax.f32 %v839, 0.0
      %v906 = vmax.f32 %v841, 0.0
      %v907 = vlaneseq
      %v908 = vand.u32 %v907, 127
      %v909 = vadd.s32 %v908, 128
      %s910 = smul.u32 %s21, 256
      %v911 = vstv %s910
      %v912 = vadd.s32 %v911, %v908
      %v913 = vadd.s32 %v911, %v909
      %vm914 = vcmp.lt.s32.totalorder %v912, 200
      %vm915 = vcmp.lt.s32.totalorder %v913, 200
      %v916 = vsel %vm914, 1, 0
      %v917 = vsel %vm915, 1, 0
      %vm918 = vcmp.eq.s32.totalorder %v916, 1
      %vm919 = vcmp.eq.s32.totalorder %v917, 1
      %v920 = vsel %vm918, %v843, 0.0
      %v921 = vsel %vm919, %v844, 0.0
      %v922 = vsel %vm918, %v845, 0.0
      %v923 = vsel %vm919, %v846, 0.0
      %v924 = vsel %vm918, %v847, 0.0
      %v925 = vsel %vm919, %v848, 0.0
      %v926 = vsel %vm918, %v849, 0.0
      %v927 = vsel %vm919, %v850, 0.0
      %v928 = vsel %vm918, %v851, 0.0
      %v929 = vsel %vm919, %v852, 0.0
      %v930 = vsel %vm918, %v853, 0.0
      %v931 = vsel %vm919, %v854, 0.0
      %v932 = vsel %vm918, %v855, 0.0
      %v933 = vsel %vm919, %v856, 0.0
      %v934 = vsel %vm918, %v857, 0.0
      %v935 = vsel %vm919, %v858, 0.0
      %v936 = vsel %vm918, %v859, 0.0
      %v937 = vsel %vm919, %v860, 0.0
      %v938 = vsel %vm918, %v861, 0.0
      %v939 = vsel %vm919, %v862, 0.0
      %v940 = vsel %vm918, %v863, 0.0
      %v941 = vsel %vm919, %v864, 0.0
      %v942 = vsel %vm918, %v865, 0.0
      %v943 = vsel %vm919, %v866, 0.0
      %v944 = vsel %vm918, %v867, 0.0
      %v945 = vsel %vm919, %v868, 0.0
      %v946 = vsel %vm918, %v869, 0.0
      %v947 = vsel %vm919, %v870, 0.0
      %v948 = vsel %vm918, %v871, 0.0
      %v949 = vsel %vm919, %v872, 0.0
      %v950 = vsel %vm918, %v873, 0.0
      %v951 = vsel %vm919, %v874, 0.0
      %v952 = vsel %vm918, %v875, 0.0
      %v953 = vsel %vm919, %v876, 0.0
      %v954 = vsel %vm918, %v877, 0.0
      %v955 = vsel %vm919, %v878, 0.0
      %v956 = vsel %vm918, %v879, 0.0
      %v957 = vsel %vm919, %v880, 0.0
      %v958 = vsel %vm918, %v881, 0.0
      %v959 = vsel %vm919, %v882, 0.0
      %v960 = vsel %vm918, %v883, 0.0
      %v961 = vsel %vm919, %v884, 0.0
      %v962 = vsel %vm918, %v885, 0.0
      %v963 = vsel %vm919, %v886, 0.0
      %v964 = vsel %vm918, %v887, 0.0
      %v965 = vsel %vm919, %v888, 0.0
      %v966 = vsel %vm918, %v889, 0.0
      %v967 = vsel %vm919, %v890, 0.0
      %v968 = vsel %vm918, %v891, 0.0
      %v969 = vsel %vm919, %v892, 0.0
      %v970 = vsel %vm918, %v893, 0.0
      %v971 = vsel %vm919, %v894, 0.0
      %v972 = vsel %vm918, %v895, 0.0
      %v973 = vsel %vm919, %v896, 0.0
      %v974 = vsel %vm918, %v897, 0.0
      %v975 = vsel %vm919, %v898, 0.0
      %v976 = vsel %vm918, %v899, 0.0
      %v977 = vsel %vm919, %v900, 0.0
      %v978 = vsel %vm918, %v901, 0.0
      %v979 = vsel %vm919, %v902, 0.0
      %v980 = vsel %vm918, %v903, 0.0
      %v981 = vsel %vm919, %v904, 0.0
      %v982 = vsel %vm918, %v905, 0.0
      %v983 = vsel %vm919, %v906, 0.0
      %v984 = vadd.f32 %v920, %v921
      %985 = vadd.xlane.f32.xlu0 %v984
      %v986 = vpop.xlane.xlu0 %985
      %v987 = vadd.f32 %v922, %v923
      %988 = vadd.xlane.f32.xlu0 %v987
      %v989 = vpop.xlane.xlu0 %988
      %v990 = vadd.f32 %v924, %v925
      %991 = vadd.xlane.f32.xlu0 %v990
      %v992 = vpop.xlane.xlu0 %991
      %v993 = vadd.f32 %v926, %v927
      %994 = vadd.xlane.f32.xlu0 %v993
      %v995 = vpop.xlane.xlu0 %994
      %v996 = vadd.f32 %v928, %v929
      %997 = vadd.xlane.f32.xlu0 %v996
      %v998 = vpop.xlane.xlu0 %997
      %v999 = vadd.f32 %v930, %v931
      %1000 = vadd.xlane.f32.xlu0 %v999
      %v1001 = vpop.xlane.xlu0 %1000
      %v1002 = vadd.f32 %v932, %v933
      %1003 = vadd.xlane.f32.xlu0 %v1002
      %v1004 = vpop.xlane.xlu0 %1003
      %v1005 = vadd.f32 %v934, %v935
      %1006 = vadd.xlane.f32.xlu0 %v1005
      %v1007 = vpop.xlane.xlu0 %1006
      %v1008 = vadd.f32 %v936, %v937
      %1009 = vadd.xlane.f32.xlu0 %v1008
      %v1010 = vpop.xlane.xlu0 %1009
      %v1011 = vadd.f32 %v938, %v939
      %1012 = vadd.xlane.f32.xlu0 %v1011
      %v1013 = vpop.xlane.xlu0 %1012
      %v1014 = vadd.f32 %v940, %v941
      %1015 = vadd.xlane.f32.xlu0 %v1014
      %v1016 = vpop.xlane.xlu0 %1015
      %v1017 = vadd.f32 %v942, %v943
      %1018 = vadd.xlane.f32.xlu0 %v1017
      %v1019 = vpop.xlane.xlu0 %1018
      %v1020 = vadd.f32 %v944, %v945
      %1021 = vadd.xlane.f32.xlu0 %v1020
      %v1022 = vpop.xlane.xlu0 %1021
      %v1023 = vadd.f32 %v946, %v947
      %1024 = vadd.xlane.f32.xlu0 %v1023
      %v1025 = vpop.xlane.xlu0 %1024
      %v1026 = vadd.f32 %v948, %v949
      %1027 = vadd.xlane.f32.xlu0 %v1026
      %v1028 = vpop.xlane.xlu0 %1027
      %v1029 = vadd.f32 %v950, %v951
      %1030 = vadd.xlane.f32.xlu0 %v1029
      %v1031 = vpop.xlane.xlu0 %1030
      %v1032 = vadd.f32 %v952, %v953
      %1033 = vadd.xlane.f32.xlu0 %v1032
      %v1034 = vpop.xlane.xlu0 %1033
      %v1035 = vadd.f32 %v954, %v955
      %1036 = vadd.xlane.f32.xlu0 %v1035
      %v1037 = vpop.xlane.xlu0 %1036
      %v1038 = vadd.f32 %v956, %v957
      %1039 = vadd.xlane.f32.xlu0 %v1038
      %v1040 = vpop.xlane.xlu0 %1039
      %v1041 = vadd.f32 %v958, %v959
      %1042 = vadd.xlane.f32.xlu0 %v1041
      %v1043 = vpop.xlane.xlu0 %1042
      %v1044 = vadd.f32 %v960, %v961
      %1045 = vadd.xlane.f32.xlu0 %v1044
      %v1046 = vpop.xlane.xlu0 %1045
      %v1047 = vadd.f32 %v962, %v963
      %1048 = vadd.xlane.f32.xlu0 %v1047
      %v1049 = vpop.xlane.xlu0 %1048
      %v1050 = vadd.f32 %v964, %v965
      %1051 = vadd.xlane.f32.xlu0 %v1050
      %v1052 = vpop.xlane.xlu0 %1051
      %v1053 = vadd.f32 %v966, %v967
      %1054 = vadd.xlane.f32.xlu0 %v1053
      %v1055 = vpop.xlane.xlu0 %1054
      %v1056 = vadd.f32 %v968, %v969
      %1057 = vadd.xlane.f32.xlu0 %v1056
      %v1058 = vpop.xlane.xlu0 %1057
      %v1059 = vadd.f32 %v970, %v971
      %1060 = vadd.xlane.f32.xlu0 %v1059
      %v1061 = vpop.xlane.xlu0 %1060
      %v1062 = vadd.f32 %v972, %v973
      %1063 = vadd.xlane.f32.xlu0 %v1062
      %v1064 = vpop.xlane.xlu0 %1063
      %v1065 = vadd.f32 %v974, %v975
      %1066 = vadd.xlane.f32.xlu0 %v1065
      %v1067 = vpop.xlane.xlu0 %1066
      %v1068 = vadd.f32 %v976, %v977
      %1069 = vadd.xlane.f32.xlu0 %v1068
      %v1070 = vpop.xlane.xlu0 %1069
      %v1071 = vadd.f32 %v978, %v979
      %1072 = vadd.xlane.f32.xlu0 %v1071
      %v1073 = vpop.xlane.xlu0 %1072
      %v1074 = vadd.f32 %v980, %v981
      %1075 = vadd.xlane.f32.xlu0 %v1074
      %v1076 = vpop.xlane.xlu0 %1075
      %v1077 = vadd.f32 %v982, %v983
      %1078 = vadd.xlane.f32.xlu0 %v1077
      %v1079 = vpop.xlane.xlu0 %1078
      %vm1080 = vcmask 7168
      %1081 = vst.msk [vmem:[%s249] sm:$0xff] %vm1080, %v986
      %1082 = vst.msk [vmem:[%s249 + $0x8] sm:$0xff] %vm1080, %v989
      %1083 = vst.msk [vmem:[%s249 + $0x10] sm:$0xff] %vm1080, %v992
      %1084 = vst.msk [vmem:[%s249 + $0x18] sm:$0xff] %vm1080, %v995
      %1085 = vst.msk [vmem:[%s249 + $0x20] sm:$0xff] %vm1080, %v998
      %1086 = vst.msk [vmem:[%s249 + $0x28] sm:$0xff] %vm1080, %v1001
      %1087 = vst.msk [vmem:[%s249 + $0x30] sm:$0xff] %vm1080, %v1004
      %1088 = vst.msk [vmem:[%s249 + $0x38] sm:$0xff] %vm1080, %v1007
      %1089 = vst.msk [vmem:[%s249 + $0x40] sm:$0xff] %vm1080, %v1010
      %1090 = vst.msk [vmem:[%s249 + $0x48] sm:$0xff] %vm1080, %v1013
      %1091 = vst.msk [vmem:[%s249 + $0x50] sm:$0xff] %vm1080, %v1016
      %1092 = vst.msk [vmem:[%s249 + $0x58] sm:$0xff] %vm1080, %v1019
      %1093 = vst.msk [vmem:[%s249 + $0x60] sm:$0xff] %vm1080, %v1022
      %1094 = vst.msk [vmem:[%s249 + $0x68] sm:$0xff] %vm1080, %v1025
      %1095 = vst.msk [vmem:[%s249 + $0x70] sm:$0xff] %vm1080, %v1028
      %1096 = vst.msk [vmem:[%s249 + $0x78] sm:$0xff] %vm1080, %v1031
      %1097 = vst.msk [vmem:[%s249 + $0x80] sm:$0xff] %vm1080, %v1034
      %1098 = vst.msk [vmem:[%s249 + $0x88] sm:$0xff] %vm1080, %v1037
      %1099 = vst.msk [vmem:[%s249 + $0x90] sm:$0xff] %vm1080, %v1040
      %1100 = vst.msk [vmem:[%s249 + $0x98] sm:$0xff] %vm1080, %v1043
      %1101 = vst.msk [vmem:[%s249 + $0xa0] sm:$0xff] %vm1080, %v1046
      %1102 = vst.msk [vmem:[%s249 + $0xa8] sm:$0xff] %vm1080, %v1049
      %1103 = vst.msk [vmem:[%s249 + $0xb0] sm:$0xff] %vm1080, %v1052
      %1104 = vst.msk [vmem:[%s249 + $0xb8] sm:$0xff] %vm1080, %v1055
      %1105 = vst.msk [vmem:[%s249 + $0xc0] sm:$0xff] %vm1080, %v1058
      %1106 = vst.msk [vmem:[%s249 + $0xc8] sm:$0xff] %vm1080, %v1061
      %1107 = vst.msk [vmem:[%s249 + $0xd0] sm:$0xff] %vm1080, %v1064
      %1108 = vst.msk [vmem:[%s249 + $0xd8] sm:$0xff] %vm1080, %v1067
      %1109 = vst.msk [vmem:[%s249 + $0xe0] sm:$0xff] %vm1080, %v1070
      %1110 = vst.msk [vmem:[%s249 + $0xe8] sm:$0xff] %vm1080, %v1073
      %1111 = vst.msk [vmem:[%s249 + $0xf0] sm:$0xff] %vm1080, %v1076
      %1112 = vst.msk [vmem:[%s249 + $0xf8] sm:$0xff] %vm1080, %v1079
      %v1113 = vmul.f32 %v920, %v920
      %v1114 = vmul.f32 %v921, %v921
      %v1115 = vmul.f32 %v922, %v922
      %v1116 = vmul.f32 %v923, %v923
      %v1117 = vmul.f32 %v924, %v924
      %v1118 = vmul.f32 %v925, %v925
      %v1119 = vmul.f32 %v926, %v926
      %v1120 = vmul.f32 %v927, %v927
      %v1121 = vmul.f32 %v928, %v928
      %v1122 = vmul.f32 %v929, %v929
      %v1123 = vmul.f32 %v930, %v930
      %v1124 = vmul.f32 %v931, %v931
      %v1125 = vmul.f32 %v932, %v932
      %v1126 = vmul.f32 %v933, %v933
      %v1127 = vmul.f32 %v934, %v934
      %v1128 = vmul.f32 %v935, %v935
      %v1129 = vmul.f32 %v936, %v936
      %v1130 = vmul.f32 %v937, %v937
      %v1131 = vmul.f32 %v938, %v938
      %v1132 = vmul.f32 %v939, %v939
      %v1133 = vmul.f32 %v940, %v940
      %v1134 = vmul.f32 %v941, %v941
      %v1135 = vmul.f32 %v942, %v942
      %v1136 = vmul.f32 %v943, %v943
      %v1137 = vmul.f32 %v944, %v944
      %v1138 = vmul.f32 %v945, %v945
      %v1139 = vmul.f32 %v946, %v946
      %v1140 = vmul.f32 %v947, %v947
      %v1141 = vmul.f32 %v948, %v948
      %v1142 = vmul.f32 %v949, %v949
      %v1143 = vmul.f32 %v950, %v950
      %v1144 = vmul.f32 %v951, %v951
      %v1145 = vmul.f32 %v952, %v952
      %v1146 = vmul.f32 %v953, %v953
      %v1147 = vmul.f32 %v954, %v954
      %v1148 = vmul.f32 %v955, %v955
      %v1149 = vmul.f32 %v956, %v956
      %v1150 = vmul.f32 %v957, %v957
      %v1151 = vmul.f32 %v958, %v958
      %v1152 = vmul.f32 %v959, %v959
      %v1153 = vmul.f32 %v960, %v960
      %v1154 = vmul.f32 %v961, %v961
      %v1155 = vmul.f32 %v962, %v962
      %v1156 = vmul.f32 %v963, %v963
      %v1157 = vmul.f32 %v964, %v964
      %v1158 = vmul.f32 %v965, %v965
      %v1159 = vmul.f32 %v966, %v966
      %v1160 = vmul.f32 %v967, %v967
      %v1161 = vmul.f32 %v968, %v968
      %v1162 = vmul.f32 %v969, %v969
      %v1163 = vmul.f32 %v970, %v970
      %v1164 = vmul.f32 %v971, %v971
      %v1165 = vmul.f32 %v972, %v972
      %v1166 = vmul.f32 %v973, %v973
      %v1167 = vmul.f32 %v974, %v974
      %v1168 = vmul.f32 %v975, %v975
      %v1169 = vmul.f32 %v976, %v976
      %v1170 = vmul.f32 %v977, %v977
      %v1171 = vmul.f32 %v978, %v978
      %v1172 = vmul.f32 %v979, %v979
      %v1173 = vmul.f32 %v980, %v980
      %v1174 = vmul.f32 %v981, %v981
      %v1175 = vmul.f32 %v982, %v982
      %v1176 = vmul.f32 %v983, %v983
      %v1177 = vadd.f32 %v1113, %v1114
      %1178 = vadd.xlane.f32.xlu0 %v1177
      %v1179 = vpop.xlane.xlu0 %1178
      %v1180 = vadd.f32 %v1115, %v1116
      %1181 = vadd.xlane.f32.xlu0 %v1180
      %v1182 = vpop.xlane.xlu0 %1181
      %v1183 = vadd.f32 %v1117, %v1118
      %1184 = vadd.xlane.f32.xlu0 %v1183
      %v1185 = vpop.xlane.xlu0 %1184
      %v1186 = vadd.f32 %v1119, %v1120
      %1187 = vadd.xlane.f32.xlu0 %v1186
      %v1188 = vpop.xlane.xlu0 %1187
      %v1189 = vadd.f32 %v1121, %v1122
      %1190 = vadd.xlane.f32.xlu0 %v1189
      %v1191 = vpop.xlane.xlu0 %1190
      %v1192 = vadd.f32 %v1123, %v1124
      %1193 = vadd.xlane.f32.xlu0 %v1192
      %v1194 = vpop.xlane.xlu0 %1193
      %v1195 = vadd.f32 %v1125, %v1126
      %1196 = vadd.xlane.f32.xlu0 %v1195
      %v1197 = vpop.xlane.xlu0 %1196
      %v1198 = vadd.f32 %v1127, %v1128
      %1199 = vadd.xlane.f32.xlu0 %v1198
      %v1200 = vpop.xlane.xlu0 %1199
      %v1201 = vadd.f32 %v1129, %v1130
      %1202 = vadd.xlane.f32.xlu0 %v1201
      %v1203 = vpop.xlane.xlu0 %1202
      %v1204 = vadd.f32 %v1131, %v1132
      %1205 = vadd.xlane.f32.xlu0 %v1204
      %v1206 = vpop.xlane.xlu0 %1205
      %v1207 = vadd.f32 %v1133, %v1134
      %1208 = vadd.xlane.f32.xlu0 %v1207
      %v1209 = vpop.xlane.xlu0 %1208
      %v1210 = vadd.f32 %v1135, %v1136
      %1211 = vadd.xlane.f32.xlu0 %v1210
      %v1212 = vpop.xlane.xlu0 %1211
      %v1213 = vadd.f32 %v1137, %v1138
      %1214 = vadd.xlane.f32.xlu0 %v1213
      %v1215 = vpop.xlane.xlu0 %1214
      %v1216 = vadd.f32 %v1139, %v1140
      %1217 = vadd.xlane.f32.xlu0 %v1216
      %v1218 = vpop.xlane.xlu0 %1217
      %v1219 = vadd.f32 %v1141, %v1142
      %1220 = vadd.xlane.f32.xlu0 %v1219
      %v1221 = vpop.xlane.xlu0 %1220
      %v1222 = vadd.f32 %v1143, %v1144
      %1223 = vadd.xlane.f32.xlu0 %v1222
      %v1224 = vpop.xlane.xlu0 %1223
      %v1225 = vadd.f32 %v1145, %v1146
      %1226 = vadd.xlane.f32.xlu0 %v1225
      %v1227 = vpop.xlane.xlu0 %1226
      %v1228 = vadd.f32 %v1147, %v1148
      %1229 = vadd.xlane.f32.xlu0 %v1228
      %v1230 = vpop.xlane.xlu0 %1229
      %v1231 = vadd.f32 %v1149, %v1150
      %1232 = vadd.xlane.f32.xlu0 %v1231
      %v1233 = vpop.xlane.xlu0 %1232
      %v1234 = vadd.f32 %v1151, %v1152
      %1235 = vadd.xlane.f32.xlu0 %v1234
      %v1236 = vpop.xlane.xlu0 %1235
      %v1237 = vadd.f32 %v1153, %v1154
      %1238 = vadd.xlane.f32.xlu0 %v1237
      %v1239 = vpop.xlane.xlu0 %1238
      %v1240 = vadd.f32 %v1155, %v1156
      %1241 = vadd.xlane.f32.xlu0 %v1240
      %v1242 = vpop.xlane.xlu0 %1241
      %v1243 = vadd.f32 %v1157, %v1158
      %1244 = vadd.xlane.f32.xlu0 %v1243
      %v1245 = vpop.xlane.xlu0 %1244
      %v1246 = vadd.f32 %v1159, %v1160
      %1247 = vadd.xlane.f32.xlu0 %v1246
      %v1248 = vpop.xlane.xlu0 %1247
      %v1249 = vadd.f32 %v1161, %v1162
      %1250 = vadd.xlane.f32.xlu0 %v1249
      %v1251 = vpop.xlane.xlu0 %1250
      %v1252 = vadd.f32 %v1163, %v1164
      %1253 = vadd.xlane.f32.xlu0 %v1252
      %v1254 = vpop.xlane.xlu0 %1253
      %v1255 = vadd.f32 %v1165, %v1166
      %1256 = vadd.xlane.f32.xlu0 %v1255
      %v1257 = vpop.xlane.xlu0 %1256
      %v1258 = vadd.f32 %v1167, %v1168
      %1259 = vadd.xlane.f32.xlu0 %v1258
      %v1260 = vpop.xlane.xlu0 %1259
      %v1261 = vadd.f32 %v1169, %v1170
      %1262 = vadd.xlane.f32.xlu0 %v1261
      %v1263 = vpop.xlane.xlu0 %1262
      %v1264 = vadd.f32 %v1171, %v1172
      %1265 = vadd.xlane.f32.xlu0 %v1264
      %v1266 = vpop.xlane.xlu0 %1265
      %v1267 = vadd.f32 %v1173, %v1174
      %1268 = vadd.xlane.f32.xlu0 %v1267
      %v1269 = vpop.xlane.xlu0 %1268
      %v1270 = vadd.f32 %v1175, %v1176
      %1271 = vadd.xlane.f32.xlu0 %v1270
      %v1272 = vpop.xlane.xlu0 %1271
      %1273 = vst.msk [vmem:[%s258] sm:$0xff] %vm1080, %v1179
      %1274 = vst.msk [vmem:[%s258 + $0x8] sm:$0xff] %vm1080, %v1182
      %1275 = vst.msk [vmem:[%s258 + $0x10] sm:$0xff] %vm1080, %v1185
      %1276 = vst.msk [vmem:[%s258 + $0x18] sm:$0xff] %vm1080, %v1188
      %1277 = vst.msk [vmem:[%s258 + $0x20] sm:$0xff] %vm1080, %v1191
      %1278 = vst.msk [vmem:[%s258 + $0x28] sm:$0xff] %vm1080, %v1194
      %1279 = vst.msk [vmem:[%s258 + $0x30] sm:$0xff] %vm1080, %v1197
      %1280 = vst.msk [vmem:[%s258 + $0x38] sm:$0xff] %vm1080, %v1200
      %1281 = vst.msk [vmem:[%s258 + $0x40] sm:$0xff] %vm1080, %v1203
      %1282 = vst.msk [vmem:[%s258 + $0x48] sm:$0xff] %vm1080, %v1206
      %1283 = vst.msk [vmem:[%s258 + $0x50] sm:$0xff] %vm1080, %v1209
      %1284 = vst.msk [vmem:[%s258 + $0x58] sm:$0xff] %vm1080, %v1212
      %1285 = vst.msk [vmem:[%s258 + $0x60] sm:$0xff] %vm1080, %v1215
      %1286 = vst.msk [vmem:[%s258 + $0x68] sm:$0xff] %vm1080, %v1218
      %1287 = vst.msk [vmem:[%s258 + $0x70] sm:$0xff] %vm1080, %v1221
      %1288 = vst.msk [vmem:[%s258 + $0x78] sm:$0xff] %vm1080, %v1224
      %1289 = vst.msk [vmem:[%s258 + $0x80] sm:$0xff] %vm1080, %v1227
      %1290 = vst.msk [vmem:[%s258 + $0x88] sm:$0xff] %vm1080, %v1230
      %1291 = vst.msk [vmem:[%s258 + $0x90] sm:$0xff] %vm1080, %v1233
      %1292 = vst.msk [vmem:[%s258 + $0x98] sm:$0xff] %vm1080, %v1236
      %1293 = vst.msk [vmem:[%s258 + $0xa0] sm:$0xff] %vm1080, %v1239
      %1294 = vst.msk [vmem:[%s258 + $0xa8] sm:$0xff] %vm1080, %v1242
      %1295 = vst.msk [vmem:[%s258 + $0xb0] sm:$0xff] %vm1080, %v1245
      %1296 = vst.msk [vmem:[%s258 + $0xb8] sm:$0xff] %vm1080, %v1248
      %1297 = vst.msk [vmem:[%s258 + $0xc0] sm:$0xff] %vm1080, %v1251
      %1298 = vst.msk [vmem:[%s258 + $0xc8] sm:$0xff] %vm1080, %v1254
      %1299 = vst.msk [vmem:[%s258 + $0xd0] sm:$0xff] %vm1080, %v1257
      %1300 = vst.msk [vmem:[%s258 + $0xd8] sm:$0xff] %vm1080, %v1260
      %1301 = vst.msk [vmem:[%s258 + $0xe0] sm:$0xff] %vm1080, %v1263
      %1302 = vst.msk [vmem:[%s258 + $0xe8] sm:$0xff] %vm1080, %v1266
      %1303 = vst.msk [vmem:[%s258 + $0xf0] sm:$0xff] %vm1080, %v1269
      %1304 = vst.msk [vmem:[%s258 + $0xf8] sm:$0xff] %vm1080, %v1272
      %p1305 = scmp.lt.s32.totalorder %s20, 1
      %s1306 = scalar_select %p1305, %s20, 1
      %p1307 = scmp.lt.s32.totalorder %s21, 0
      %s1308 = scalar_select %p1307, %s21, 0
      %s1309 = smul.addr %s1308, 32
      %s1310 = smul.addr %s1306, 32
      %s1311 = sadd.s32 %s1309, %s1310
      %s1312 = smul.addr %s1311, 8
      %s1313 = scalar_lea.vmem %s3, %s1312
      %p1314 = scmp.lt.s32.totalorder %s20, 1
      %s1315 = scalar_select %p1314, %s20, 1
      %p1316 = scmp.lt.s32.totalorder %s21, 0
      %s1317 = scalar_select %p1316, %s21, 0
      %s1318 = smul.addr %s1317, 32
      %s1319 = smul.addr %s1315, 32
      %s1320 = sadd.s32 %s1318, %s1319
      %s1321 = smul.addr %s1320, 8
      %s1322 = scalar_lea.vmem %s4, %s1321
      // Predicated region
      $region33: #{mlp_forward.3} parent=31 // pred_check
        %p1323 = pneg %p118
      $region34: #{mlp_forward.3} parent=31 // pred_check_branch
        %1325 = sbr.rel (%p1323) target = $region36
      $region35: #{mlp_forward.3} parent=31 // pred_region
        _
      $region36: #{mlp_forward.3} parent=31 // pred_fallthru
        _
      // Predicated region
      $region37: #{mlp_forward.3} parent=31 // pred_check
        %p1326 = pneg %p146
      $region38: #{mlp_forward.3} parent=31 // pred_check_branch
        %1328 = sbr.rel (%p1326) target = $region40
      $region39: #{mlp_forward.3} parent=31 // pred_region
        _
      $region40: #{mlp_forward.3} parent=31 // pred_fallthru
        _
    $region32: #{mlp_forward.3} parent=5 // pred_fallthru
      _
    %p1329 = scmp.le.s32.totalorder 2, %s11
    // Predicated region
    $region41: #{mlp_forward.3} parent=5 // pred_check
      %p1330 = pneg %p1329
    $region42: #{mlp_forward.3} parent=5 // pred_check_branch
      %1332 = sbr.rel (%p1330) target = $region44
    $region43: #{mlp_forward.3} parent=5 // pred_region
      %s1333 = ssub.s32 %s11, 2
      // Predicated region
      $region45: #{mlp_forward.3} parent=43 // pred_check
        %p1334 = pneg %p124
      $region46: #{mlp_forward.3} parent=43 // pred_check_branch
        %1336 = sbr.rel (%p1334) target = $region48
      $region47: #{mlp_forward.3} parent=43 // pred_region
        %p1337 = scmp.lt.s32.totalorder %s22, 1
        %s1338 = scalar_select %p1337, %s22, 1
        %p1339 = scmp.lt.s32.totalorder %s23, 0
        %s1340 = scalar_select %p1339, %s23, 0
        %s1341 = smul.addr %s1340, 32
        %s1342 = smul.addr %s1338, 32
        %s1343 = sadd.s32 %s1341, %s1342
        %s1344 = smul.addr %s1343, 8
        %s1345 = scalar_lea.vmem %s3, %s1344
      $region48: #{mlp_forward.3} parent=43 // pred_fallthru
        _
      // Predicated region
      $region49: #{mlp_forward.3} parent=43 // pred_check
        %p1346 = pneg %p152
      $region50: #{mlp_forward.3} parent=43 // pred_check_branch
        %1348 = sbr.rel (%p1346) target = $region52
      $region51: #{mlp_forward.3} parent=43 // pred_region
        %p1349 = scmp.lt.s32.totalorder %s22, 1
        %s1350 = scalar_select %p1349, %s22, 1
        %p1351 = scmp.lt.s32.totalorder %s23, 0
        %s1352 = scalar_select %p1351, %s23, 0
        %s1353 = smul.addr %s1352, 32
        %s1354 = smul.addr %s1350, 32
        %s1355 = sadd.s32 %s1353, %s1354
        %s1356 = smul.addr %s1355, 8
        %s1357 = scalar_lea.vmem %s4, %s1356
      $region52: #{mlp_forward.3} parent=43 // pred_fallthru
        _
    $region44: #{mlp_forward.3} parent=5 // pred_fallthru
      _
  $region6: #{mlp_forward.3} parent=0 // loop_footer
    %s15 = sadd.s32 1, %s11
  $region7: #{mlp_forward.3} parent=0 // loop_footer_branch
    %10 = sbr.rel target = $region3
  $region8: #{mlp_forward.3} parent=0 // loop_exit
    _

// kernel: mlp_forward.5
$region0: #{mlp_forward.5}
  #allocation0 [shape = 'u32[]', space=smem, size = 0x4, offset = 0x4, fixed_abs, tag = 'smem constant byte address 0x4 - core index']
  #allocation1 [shape = 'u32[144,128]{1,0:T(1,128)}', space=vmem, size = 0x12000, scoped, tag = 'internal scratch']
  %s0 = inlined_call_operand.vmem [shape: f32[2,24,256], index: 0, kind: input, shape index: {}]
  %s1 = inlined_call_operand.vmem [shape: f32[256,24], index: 1, kind: input, shape index: {}]
  %s2 = inlined_call_operand.vmem [shape: f32[256,1], index: 2, kind: input, shape index: {}]
  %s3 = inlined_call_operand.vmem [shape: f32[128,256], index: 3, kind: input, shape index: {}]
  %s4 = inlined_call_operand.vmem [shape: f32[128,1], index: 4, kind: input, shape index: {}]
  %s5 = inlined_call_operand.vmem [shape: f32[5,128], index: 5, kind: input, shape index: {}]
  %s6 = inlined_call_operand.vmem [shape: f32[5,1], index: 6, kind: input, shape index: {}]
  %s7 = inlined_call_operand.vmem [shape: f32[2,5,256], index: 7, kind: output, shape index: {}]
  %s8 = sld [smem:[#allocation0]]
  $region61: #{mlp_forward.5} parent=0
    _
  %s10 = ssub.s32 1, %s8
  %s11 = scalar_select 0, %s10, %s8
  loop: start=0, step=1, limit=4
  $region2: #{mlp_forward.5} parent=0 // loop_pre_header
    _
  $region3: #{mlp_forward.5} parent=0 // loop_header
    %s13 = sphi 0, %s17
    %p14 = scmp.ge.s32.totalorder %s13, 4
    %s20 = sphi 0, %s32
    %s21 = sphi 0, %s28
    %s22 = sphi 0, %s20
    %s23 = sphi 0, %s21
    %s24 = sphi 0, %s22
    %s25 = sphi 0, %s23
    %s37 = sphi 0, %s39
    %s40 = sphi 0, %s37
    %s41 = sphi 0, %s40
    %s57 = sphi 0, %s41
    %s61 = sphi 0, %s61
    %s63 = sphi 0, %s61
    %s64 = sphi 0, %s63
    %s78 = sphi 0, %s64
    %s82 = sphi 0, %s82
    %s84 = sphi 0, %s82
    %s85 = sphi 0, %s84
    %s99 = sphi 0, %s85
    %s103 = sphi 0, %s103
    %s105 = sphi 0, %s103
    %s106 = sphi 0, %s105
    %s120 = sphi 0, %s106
    %s124 = sphi 0, %s124
    %s126 = sphi 0, %s124
    %s127 = sphi 0, %s126
    %s141 = sphi 0, %s127
    %s145 = sphi 0, %s145
    %s147 = sphi 0, %s145
    %s148 = sphi 0, %s147
    %s162 = sphi 0, %s148
    %s166 = sphi 0, %s166
    %s168 = sphi 0, %s166
    %s169 = sphi 0, %s168
    %s183 = sphi 0, %s169
    %s191 = sphi 0, %s193
    %s194 = sphi 0, %s191
    %s195 = sphi 0, %s194
    %s211 = sphi 0, %s195
  $region4: #{mlp_forward.5} parent=0 // loop_header_branch
    %16 = sbr.rel (%p14) target = $region8
  $region5: #{mlp_forward.5} parent=0 // loop_body
    %s18 = ssub.s32 %s13, 1
    %s19 = ssub.s32 %s13, 2
    %s26 = sadd.s32 1, %s21
    %p27 = scmp.ge.s32.totalorder %s26, 1
    %s28 = scalar_select %p27, 0, %s26
    %s29 = sadd.s32 1, %s20
    %s30 = scalar_select %p27, %s29, %s20
    %p31 = scmp.ge.s32.totalorder %s30, 2
    %s32 = scalar_select %p31, 0, %s30
    %s33 = ssub.s32 %s20, %s32
    %s34 = ssub.s32 %s21, %s28
    %s35 = sor.u32 %s33, %s34
    %p36 = scmp.eq.s32.totalorder %s35, 0
    %s38 = sadd.s32 %s37, 1
    %s39 = scalar_select %p36, %s37, %s38
    %p42 = pneg %p36
    %p43 = scmp.eq.s32.totalorder %s13, 1
    %p44 = por %p42, %p43
    %p45 = scmp.ne.s32.totalorder %s37, %s40
    %p46 = scmp.eq.s32.totalorder %s13, 0
    %p47 = por %p45, %p46
    %p48 = scmp.ne.s32.totalorder %s37, %s40
    %p49 = scmp.eq.s32.totalorder %s18, 1
    %p50 = por %p48, %p49
    %p51 = scmp.ne.s32.totalorder %s40, %s41
    %p52 = scmp.eq.s32.totalorder %s18, 0
    %p53 = por %p51, %p52
    %p54 = scmp.ne.s32.totalorder %s40, %s41
    %p55 = scmp.eq.s32.totalorder %s19, 1
    %p56 = por %p54, %p55
    %p58 = scmp.ne.s32.totalorder %s41, %s57
    %p59 = scmp.eq.s32.totalorder %s19, 0
    %p60 = por %p58, %p59
    %s62 = sadd.s32 %s61, 1
    %p65 = scmp.eq.s32.totalorder %s13, 1
    %p66 = scmp.ne.s32.totalorder %s61, %s63
    %p67 = scmp.eq.s32.totalorder %s13, 0
    %p68 = por %p66, %p67
    %p69 = scmp.ne.s32.totalorder %s61, %s63
    %p70 = scmp.eq.s32.totalorder %s18, 1
    %p71 = por %p69, %p70
    %p72 = scmp.ne.s32.totalorder %s63, %s64
    %p73 = scmp.eq.s32.totalorder %s18, 0
    %p74 = por %p72, %p73
    %p75 = scmp.ne.s32.totalorder %s63, %s64
    %p76 = scmp.eq.s32.totalorder %s19, 1
    %p77 = por %p75, %p76
    %p79 = scmp.ne.s32.totalorder %s64, %s78
    %p80 = scmp.eq.s32.totalorder %s19, 0
    %p81 = por %p79, %p80
    %s83 = sadd.s32 %s82, 1
    %p86 = scmp.eq.s32.totalorder %s13, 1
    %p87 = scmp.ne.s32.totalorder %s82, %s84
    %p88 = scmp.eq.s32.totalorder %s13, 0
    %p89 = por %p87, %p88
    %p90 = scmp.ne.s32.totalorder %s82, %s84
    %p91 = scmp.eq.s32.totalorder %s18, 1
    %p92 = por %p90, %p91
    %p93 = scmp.ne.s32.totalorder %s84, %s85
    %p94 = scmp.eq.s32.totalorder %s18, 0
    %p95 = por %p93, %p94
    %p96 = scmp.ne.s32.totalorder %s84, %s85
    %p97 = scmp.eq.s32.totalorder %s19, 1
    %p98 = por %p96, %p97
    %p100 = scmp.ne.s32.totalorder %s85, %s99
    %p101 = scmp.eq.s32.totalorder %s19, 0
    %p102 = por %p100, %p101
    %s104 = sadd.s32 %s103, 1
    %p107 = scmp.eq.s32.totalorder %s13, 1
    %p108 = scmp.ne.s32.totalorder %s103, %s105
    %p109 = scmp.eq.s32.totalorder %s13, 0
    %p110 = por %p108, %p109
    %p111 = scmp.ne.s32.totalorder %s103, %s105
    %p112 = scmp.eq.s32.totalorder %s18, 1
    %p113 = por %p111, %p112
    %p114 = scmp.ne.s32.totalorder %s105, %s106
    %p115 = scmp.eq.s32.totalorder %s18, 0
    %p116 = por %p114, %p115
    %p117 = scmp.ne.s32.totalorder %s105, %s106
    %p118 = scmp.eq.s32.totalorder %s19, 1
    %p119 = por %p117, %p118
    %p121 = scmp.ne.s32.totalorder %s106, %s120
    %p122 = scmp.eq.s32.totalorder %s19, 0
    %p123 = por %p121, %p122
    %s125 = sadd.s32 %s124, 1
    %p128 = scmp.eq.s32.totalorder %s13, 1
    %p129 = scmp.ne.s32.totalorder %s124, %s126
    %p130 = scmp.eq.s32.totalorder %s13, 0
    %p131 = por %p129, %p130
    %p132 = scmp.ne.s32.totalorder %s124, %s126
    %p133 = scmp.eq.s32.totalorder %s18, 1
    %p134 = por %p132, %p133
    %p135 = scmp.ne.s32.totalorder %s126, %s127
    %p136 = scmp.eq.s32.totalorder %s18, 0
    %p137 = por %p135, %p136
    %p138 = scmp.ne.s32.totalorder %s126, %s127
    %p139 = scmp.eq.s32.totalorder %s19, 1
    %p140 = por %p138, %p139
    %p142 = scmp.ne.s32.totalorder %s127, %s141
    %p143 = scmp.eq.s32.totalorder %s19, 0
    %p144 = por %p142, %p143
    %s146 = sadd.s32 %s145, 1
    %p149 = scmp.eq.s32.totalorder %s13, 1
    %p150 = scmp.ne.s32.totalorder %s145, %s147
    %p151 = scmp.eq.s32.totalorder %s13, 0
    %p152 = por %p150, %p151
    %p153 = scmp.ne.s32.totalorder %s145, %s147
    %p154 = scmp.eq.s32.totalorder %s18, 1
    %p155 = por %p153, %p154
    %p156 = scmp.ne.s32.totalorder %s147, %s148
    %p157 = scmp.eq.s32.totalorder %s18, 0
    %p158 = por %p156, %p157
    %p159 = scmp.ne.s32.totalorder %s147, %s148
    %p160 = scmp.eq.s32.totalorder %s19, 1
    %p161 = por %p159, %p160
    %p163 = scmp.ne.s32.totalorder %s148, %s162
    %p164 = scmp.eq.s32.totalorder %s19, 0
    %p165 = por %p163, %p164
    %s167 = sadd.s32 %s166, 1
    %p170 = scmp.eq.s32.totalorder %s13, 1
    %p171 = scmp.ne.s32.totalorder %s166, %s168
    %p172 = scmp.eq.s32.totalorder %s13, 0
    %p173 = por %p171, %p172
    %p174 = scmp.ne.s32.totalorder %s166, %s168
    %p175 = scmp.eq.s32.totalorder %s18, 1
    %p176 = por %p174, %p175
    %p177 = scmp.ne.s32.totalorder %s168, %s169
    %p178 = scmp.eq.s32.totalorder %s18, 0
    %p179 = por %p177, %p178
    %p180 = scmp.ne.s32.totalorder %s168, %s169
    %p181 = scmp.eq.s32.totalorder %s19, 1
    %p182 = por %p180, %p181
    %p184 = scmp.ne.s32.totalorder %s169, %s183
    %p185 = scmp.eq.s32.totalorder %s19, 0
    %p186 = por %p184, %p185
    %s187 = ssub.s32 %s20, %s32
    %s188 = ssub.s32 %s21, %s28
    %s189 = sor.u32 %s187, %s188
    %p190 = scmp.eq.s32.totalorder %s189, 0
    %s192 = sadd.s32 %s191, 1
    %s193 = scalar_select %p190, %s191, %s192
    %p196 = pneg %p190
    %p197 = scmp.eq.s32.totalorder %s13, 1
    %p198 = por %p196, %p197
    %p199 = scmp.ne.s32.totalorder %s191, %s194
    %p200 = scmp.eq.s32.totalorder %s13, 0
    %p201 = por %p199, %p200
    %p202 = scmp.ne.s32.totalorder %s191, %s194
    %p203 = scmp.eq.s32.totalorder %s18, 1
    %p204 = por %p202, %p203
    %p205 = scmp.ne.s32.totalorder %s194, %s195
    %p206 = scmp.eq.s32.totalorder %s18, 0
    %p207 = por %p205, %p206
    %p208 = scmp.ne.s32.totalorder %s194, %s195
    %p209 = scmp.eq.s32.totalorder %s19, 1
    %p210 = por %p208, %p209
    %p212 = scmp.ne.s32.totalorder %s195, %s211
    %p213 = scmp.eq.s32.totalorder %s19, 0
    %p214 = por %p212, %p213
    %p215 = scmp.le.s32.totalorder 1, %s13
    %p216 = scmp.lt.s32.totalorder %s13, 3
    %p217 = pnand %p215, %p216
    %p218 = pneg %p217
    // Predicated region
    $region9: #{mlp_forward.5} parent=5 // pred_check
      _
    $region10: #{mlp_forward.5} parent=5 // pred_check_branch
      %220 = sbr.rel (%p217) target = $region12
    $region11: #{mlp_forward.5} parent=5 // pred_region
      %s221 = ssub.s32 %s13, 1
      // Predicated region
      $region13: #{mlp_forward.5} parent=11 // pred_check
        %p222 = pneg %p74
      $region14: #{mlp_forward.5} parent=11 // pred_check_branch
        %224 = sbr.rel (%p222) target = $region16
      $region15: #{mlp_forward.5} parent=11 // pred_region
        _
      $region16: #{mlp_forward.5} parent=11 // pred_fallthru
        _
      // Predicated region
      $region17: #{mlp_forward.5} parent=11 // pred_check
        %p225 = pneg %p95
      $region18: #{mlp_forward.5} parent=11 // pred_check_branch
        %227 = sbr.rel (%p225) target = $region20
      $region19: #{mlp_forward.5} parent=11 // pred_region
        _
      $region20: #{mlp_forward.5} parent=11 // pred_fallthru
        _
      // Predicated region
      $region21: #{mlp_forward.5} parent=11 // pred_check
        %p228 = pneg %p116
      $region22: #{mlp_forward.5} parent=11 // pred_check_branch
        %230 = sbr.rel (%p228) target = $region24
      $region23: #{mlp_forward.5} parent=11 // pred_region
        _
      $region24: #{mlp_forward.5} parent=11 // pred_fallthru
        _
      // Predicated region
      $region25: #{mlp_forward.5} parent=11 // pred_check
        %p231 = pneg %p137
      $region26: #{mlp_forward.5} parent=11 // pred_check_branch
        %233 = sbr.rel (%p231) target = $region28
      $region27: #{mlp_forward.5} parent=11 // pred_region
        _
      $region28: #{mlp_forward.5} parent=11 // pred_fallthru
        _
      // Predicated region
      $region29: #{mlp_forward.5} parent=11 // pred_check
        %p234 = pneg %p158
      $region30: #{mlp_forward.5} parent=11 // pred_check_branch
        %236 = sbr.rel (%p234) target = $region32
      $region31: #{mlp_forward.5} parent=11 // pred_region
        _
      $region32: #{mlp_forward.5} parent=11 // pred_fallthru
        _
      // Predicated region
      $region33: #{mlp_forward.5} parent=11 // pred_check
        %p237 = pneg %p179
      $region34: #{mlp_forward.5} parent=11 // pred_check_branch
        %239 = sbr.rel (%p237) target = $region36
      $region35: #{mlp_forward.5} parent=11 // pred_region
        _
      $region36: #{mlp_forward.5} parent=11 // pred_fallthru
        _
    $region12: #{mlp_forward.5} parent=5 // pred_fallthru
      _
    %p240 = scmp.lt.s32.totalorder %s13, 2
    // Predicated region
    $region37: #{mlp_forward.5} parent=5 // pred_check
      %p241 = pneg %p240
    $region38: #{mlp_forward.5} parent=5 // pred_check_branch
      %243 = sbr.rel (%p241) target = $region40
    $region39: #{mlp_forward.5} parent=5 // pred_region
      // Predicated region
      $region41: #{mlp_forward.5} parent=39 // pred_check
        %p244 = pneg %p47
      $region42: #{mlp_forward.5} parent=39 // pred_check_branch
        %246 = sbr.rel (%p244) target = $region44
      $region43: #{mlp_forward.5} parent=39 // pred_region
        %s247 = smul.u32 2, %s21
        %p248 = scmp.lt.s32.totalorder %s20, 1
        %s249 = scalar_select %p248, %s20, 1
        %p250 = scmp.lt.s32.totalorder %s247, 1
        %s251 = scalar_select %p250, %s247, 1
        %s252 = smul.addr %s249, 6
        %s253 = sadd.s32 %s251, %s252
        %s254 = smul.addr %s253, 8
        %s255 = scalar_lea.vmem %s0, %s254
        %s256 = smul.u32 2, %s21
      $region44: #{mlp_forward.5} parent=39 // pred_fallthru
        _
    $region40: #{mlp_forward.5} parent=5 // pred_fallthru
      _
    %p257 = scmp.le.s32.totalorder 1, %s13
    %p258 = scmp.lt.s32.totalorder %s13, 3
    %p259 = pnand %p257, %p258
    %p260 = pneg %p259
    // Predicated region
    $region45: #{mlp_forward.5} parent=5 // pred_check
      _
    $region46: #{mlp_forward.5} parent=5 // pred_check_branch
      %262 = sbr.rel (%p259) target = $region48
    $region47: #{mlp_forward.5} parent=5 // pred_region
      %s263 = ssub.s32 %s13, 1
      %s264 = smul.u32 2, %s23
      %p265 = scmp.lt.s32.totalorder %s22, 1
      %s266 = scalar_select %p265, %s22, 1
      %p267 = scmp.lt.s32.totalorder %s264, 1
      %s268 = scalar_select %p267, %s264, 1
      %s269 = smul.addr %s266, 6
      %s270 = sadd.s32 %s268, %s269
      %s271 = smul.addr %s270, 8
      %s272 = scalar_lea.vmem %s0, %s271
      %p273 = pneg %p53
      %p274 = pneg %p50
      %p275 = pneg %p74
      %p276 = pneg %p71
      %p277 = pneg %p95
      %p278 = pneg %p92
      %p279 = pneg %p116
      %p280 = pneg %p113
      %p281 = pneg %p137
      %p282 = pneg %p134
      %p283 = pneg %p158
      %p284 = pneg %p155
      %p285 = pneg %p179
      %p286 = pneg %p176
      %p287 = pneg %p207
      %p288 = pneg %p204
      %s289 = smul.u32 2, %s23
      %p290 = scmp.lt.s32.totalorder %s22, 1
      %s291 = scalar_select %p290, %s22, 1
      %p292 = scmp.lt.s32.totalorder %s289, 1
      %s293 = scalar_select %p292, %s289, 1
      %s294 = smul.addr %s291, 2
      %s295 = sadd.s32 %s293, %s294
      %s296 = smul.addr %s295, 8
      %s297 = scalar_lea.vmem %s7, %s296
      %s298 = smul.u32 2, %s23
      %p299 = scmp.lt.s32.totalorder %s22, 1
      %s300 = scalar_select %p299, %s22, 1
      %p301 = scmp.lt.s32.totalorder %s298, 1
      %s302 = scalar_select %p301, %s298, 1
      %s303 = smul.addr %s300, 6
      %s304 = sadd.s32 %s302, %s303
      %s305 = smul.addr %s304, 8
      %s306 = scalar_lea.vmem %s0, %s305
      %s307 = smul.u32 2, %s23
      %s308 = smul.u32 2, %s23
      %p309 = scmp.lt.s32.totalorder %s22, 1
      %s310 = scalar_select %p309, %s22, 1
      %p311 = scmp.lt.s32.totalorder %s308, 1
      %s312 = scalar_select %p311, %s308, 1
      %s313 = smul.addr %s310, 2
      %s314 = sadd.s32 %s312, %s313
      %s315 = smul.addr %s314, 8
      %s316 = scalar_lea.vmem %s7, %s315
      %s317 = smul.u32 2, %s23
      %v318 = vld [vmem:[%s306] sm:$0xff]
      %v319 = vld [vmem:[%s306 + $0x8] sm:$0xff]
      %v320 = vld [vmem:[%s306 + $0x10] sm:$0xff]
      %v321 = vld [vmem:[%s306 + $0x18] sm:$0xff]
      %v322 = vld [vmem:[%s306 + $0x20] sm:$0xff]
      %v323 = vld [vmem:[%s306 + $0x28] sm:$0xff]
      %v324 = vld [vmem:[%s1] sm:$0xff]
      %v325 = vld [vmem:[%s1 + $0x8] sm:$0xff]
      %v326 = vld [vmem:[%s1 + $0x10] sm:$0xff]
      %v327 = vld [vmem:[%s1 + $0x18] sm:$0xff]
      %v328 = vld [vmem:[%s1 + $0x20] sm:$0xff]
      %v329 = vld [vmem:[%s1 + $0x28] sm:$0xff]
      %v330 = vld [vmem:[%s1 + $0x30] sm:$0xff]
      %v331 = vld [vmem:[%s1 + $0x38] sm:$0xff]
      %v332 = vld [vmem:[%s1 + $0x40] sm:$0xff]
      %v333 = vld [vmem:[%s1 + $0x48] sm:$0xff]
      %v334 = vld [vmem:[%s1 + $0x50] sm:$0xff]
      %v335 = vld [vmem:[%s1 + $0x58] sm:$0xff]
      %v336 = vld [vmem:[%s1 + $0x60] sm:$0xff]
      %v337 = vld [vmem:[%s1 + $0x68] sm:$0xff]
      %v338 = vld [vmem:[%s1 + $0x70] sm:$0xff]
      %v339 = vld [vmem:[%s1 + $0x78] sm:$0xff]
      %v340 = vld [vmem:[%s1 + $0x80] sm:$0xff]
      %v341 = vld [vmem:[%s1 + $0x88] sm:$0xff]
      %v342 = vld [vmem:[%s1 + $0x90] sm:$0xff]
      %v343 = vld [vmem:[%s1 + $0x98] sm:$0xff]
      %v344 = vld [vmem:[%s1 + $0xa0] sm:$0xff]
      %v345 = vld [vmem:[%s1 + $0xa8] sm:$0xff]
      %v346 = vld [vmem:[%s1 + $0xb0] sm:$0xff]
      %v347 = vld [vmem:[%s1 + $0xb8] sm:$0xff]
      %v348 = vld [vmem:[%s1 + $0xc0] sm:$0xff]
      %v349 = vld [vmem:[%s1 + $0xc8] sm:$0xff]
      %v350 = vld [vmem:[%s1 + $0xd0] sm:$0xff]
      %v351 = vld [vmem:[%s1 + $0xd8] sm:$0xff]
      %v352 = vld [vmem:[%s1 + $0xe0] sm:$0xff]
      %v353 = vld [vmem:[%s1 + $0xe8] sm:$0xff]
      %v354 = vld [vmem:[%s1 + $0xf0] sm:$0xff]
      %v355 = vld [vmem:[%s1 + $0xf8] sm:$0xff]
      %v356 = vld [vmem:[%s2] sm:$0xff]
      %v357 = vld [vmem:[%s2 + $0x8] sm:$0xff]
      %v358 = vld [vmem:[%s2 + $0x10] sm:$0xff]
      %v359 = vld [vmem:[%s2 + $0x18] sm:$0xff]
      %v360 = vld [vmem:[%s2 + $0x20] sm:$0xff]
      %v361 = vld [vmem:[%s2 + $0x28] sm:$0xff]
      %v362 = vld [vmem:[%s2 + $0x30] sm:$0xff]
      %v363 = vld [vmem:[%s2 + $0x38] sm:$0xff]
      %v364 = vld [vmem:[%s2 + $0x40] sm:$0xff]
      %v365 = vld [vmem:[%s2 + $0x48] sm:$0xff]
      %v366 = vld [vmem:[%s2 + $0x50] sm:$0xff]
      %v367 = vld [vmem:[%s2 + $0x58] sm:$0xff]
      %v368 = vld [vmem:[%s2 + $0x60] sm:$0xff]
      %v369 = vld [vmem:[%s2 + $0x68] sm:$0xff]
      %v370 = vld [vmem:[%s2 + $0x70] sm:$0xff]
      %v371 = vld [vmem:[%s2 + $0x78] sm:$0xff]
      %v372 = vld [vmem:[%s2 + $0x80] sm:$0xff]
      %v373 = vld [vmem:[%s2 + $0x88] sm:$0xff]
      %v374 = vld [vmem:[%s2 + $0x90] sm:$0xff]
      %v375 = vld [vmem:[%s2 + $0x98] sm:$0xff]
      %v376 = vld [vmem:[%s2 + $0xa0] sm:$0xff]
      %v377 = vld [vmem:[%s2 + $0xa8] sm:$0xff]
      %v378 = vld [vmem:[%s2 + $0xb0] sm:$0xff]
      %v379 = vld [vmem:[%s2 + $0xb8] sm:$0xff]
      %v380 = vld [vmem:[%s2 + $0xc0] sm:$0xff]
      %v381 = vld [vmem:[%s2 + $0xc8] sm:$0xff]
      %v382 = vld [vmem:[%s2 + $0xd0] sm:$0xff]
      %v383 = vld [vmem:[%s2 + $0xd8] sm:$0xff]
      %v384 = vld [vmem:[%s2 + $0xe0] sm:$0xff]
      %v385 = vld [vmem:[%s2 + $0xe8] sm:$0xff]
      %v386 = vld [vmem:[%s2 + $0xf0] sm:$0xff]
      %v387 = vld [vmem:[%s2 + $0xf8] sm:$0xff]
      %389 = vset.pattern.permute.xlu0 0
      %390 = vperm.xlu0 %389, %v356
      %v391 = vpop.permute.xlu0 %390
      %394 = vset.pattern.permute.xlu0 0
      %395 = vperm.xlu0 %394, %v357
      %v396 = vpop.permute.xlu0 %395
      %399 = vset.pattern.permute.xlu0 0
      %400 = vperm.xlu0 %399, %v358
      %v401 = vpop.permute.xlu0 %400
      %404 = vset.pattern.permute.xlu0 0
      %405 = vperm.xlu0 %404, %v359
      %v406 = vpop.permute.xlu0 %405
      %409 = vset.pattern.permute.xlu0 0
      %410 = vperm.xlu0 %409, %v360
      %v411 = vpop.permute.xlu0 %410
      %414 = vset.pattern.permute.xlu0 0
      %415 = vperm.xlu0 %414, %v361
      %v416 = vpop.permute.xlu0 %415
      %419 = vset.pattern.permute.xlu0 0
      %420 = vperm.xlu0 %419, %v362
      %v421 = vpop.permute.xlu0 %420
      %424 = vset.pattern.permute.xlu0 0
      %425 = vperm.xlu0 %424, %v363
      %v426 = vpop.permute.xlu0 %425
      %429 = vset.pattern.permute.xlu0 0
      %430 = vperm.xlu0 %429, %v364
      %v431 = vpop.permute.xlu0 %430
      %434 = vset.pattern.permute.xlu0 0
      %435 = vperm.xlu0 %434, %v365
      %v436 = vpop.permute.xlu0 %435
      %439 = vset.pattern.permute.xlu0 0
      %440 = vperm.xlu0 %439, %v366
      %v441 = vpop.permute.xlu0 %440
      %444 = vset.pattern.permute.xlu0 0
      %445 = vperm.xlu0 %444, %v367
      %v446 = vpop.permute.xlu0 %445
      %449 = vset.pattern.permute.xlu0 0
      %450 = vperm.xlu0 %449, %v368
      %v451 = vpop.permute.xlu0 %450
      %454 = vset.pattern.permute.xlu0 0
      %455 = vperm.xlu0 %454, %v369
      %v456 = vpop.permute.xlu0 %455
      %459 = vset.pattern.permute.xlu0 0
      %460 = vperm.xlu0 %459, %v370
      %v461 = vpop.permute.xlu0 %460
      %464 = vset.pattern.permute.xlu0 0
      %465 = vperm.xlu0 %464, %v371
      %v466 = vpop.permute.xlu0 %465
      %469 = vset.pattern.permute.xlu0 0
      %470 = vperm.xlu0 %469, %v372
      %v471 = vpop.permute.xlu0 %470
      %474 = vset.pattern.permute.xlu0 0
      %475 = vperm.xlu0 %474, %v373
      %v476 = vpop.permute.xlu0 %475
      %479 = vset.pattern.permute.xlu0 0
      %480 = vperm.xlu0 %479, %v374
      %v481 = vpop.permute.xlu0 %480
      %484 = vset.pattern.permute.xlu0 0
      %485 = vperm.xlu0 %484, %v375
      %v486 = vpop.permute.xlu0 %485
      %489 = vset.pattern.permute.xlu0 0
      %490 = vperm.xlu0 %489, %v376
      %v491 = vpop.permute.xlu0 %490
      %494 = vset.pattern.permute.xlu0 0
      %495 = vperm.xlu0 %494, %v377
      %v496 = vpop.permute.xlu0 %495
      %499 = vset.pattern.permute.xlu0 0
      %500 = vperm.xlu0 %499, %v378
      %v501 = vpop.permute.xlu0 %500
      %504 = vset.pattern.permute.xlu0 0
      %505 = vperm.xlu0 %504, %v379
      %v506 = vpop.permute.xlu0 %505
      %509 = vset.pattern.permute.xlu0 0
      %510 = vperm.xlu0 %509, %v380
      %v511 = vpop.permute.xlu0 %510
      %514 = vset.pattern.permute.xlu0 0
      %515 = vperm.xlu0 %514, %v381
      %v516 = vpop.permute.xlu0 %515
      %519 = vset.pattern.permute.xlu0 0
      %520 = vperm.xlu0 %519, %v382
      %v521 = vpop.permute.xlu0 %520
      %524 = vset.pattern.permute.xlu0 0
      %525 = vperm.xlu0 %524, %v383
      %v526 = vpop.permute.xlu0 %525
      %529 = vset.pattern.permute.xlu0 0
      %530 = vperm.xlu0 %529, %v384
      %v531 = vpop.permute.xlu0 %530
      %534 = vset.pattern.permute.xlu0 0
      %535 = vperm.xlu0 %534, %v385
      %v536 = vpop.permute.xlu0 %535
      %539 = vset.pattern.permute.xlu0 0
      %540 = vperm.xlu0 %539, %v386
      %v541 = vpop.permute.xlu0 %540
      %544 = vset.pattern.permute.xlu0 0
      %545 = vperm.xlu0 %544, %v387
      %v546 = vpop.permute.xlu0 %545
      %vm548 = vcmask 195584
      %v550 = vsel %vm548, %v324, 0
      %v553 = vsel %vm548, %v325, 0
      %v556 = vsel %vm548, %v326, 0
      %v559 = vsel %vm548, %v327, 0
      %v562 = vsel %vm548, %v328, 0
      %v565 = vsel %vm548, %v329, 0
      %v568 = vsel %vm548, %v330, 0
      %v571 = vsel %vm548, %v331, 0
      %v574 = vsel %vm548, %v332, 0
      %v577 = vsel %vm548, %v333, 0
      %v580 = vsel %vm548, %v334, 0
      %v583 = vsel %vm548, %v335, 0
      %v586 = vsel %vm548, %v336, 0
      %v589 = vsel %vm548, %v337, 0
      %v592 = vsel %vm548, %v338, 0
      %v595 = vsel %vm548, %v339, 0
      %v598 = vsel %vm548, %v340, 0
      %v601 = vsel %vm548, %v341, 0
      %v604 = vsel %vm548, %v342, 0
      %v607 = vsel %vm548, %v343, 0
      %v610 = vsel %vm548, %v344, 0
      %v613 = vsel %vm548, %v345, 0
      %v616 = vsel %vm548, %v346, 0
      %v619 = vsel %vm548, %v347, 0
      %v622 = vsel %vm548, %v348, 0
      %v625 = vsel %vm548, %v349, 0
      %v628 = vsel %vm548, %v350, 0
      %v631 = vsel %vm548, %v351, 0
      %v634 = vsel %vm548, %v352, 0
      %v637 = vsel %vm548, %v353, 0
      %v640 = vsel %vm548, %v354, 0
      %v643 = vsel %vm548, %v355, 0
      %645 = vmatprep.subr.mxu0 %v319
      %646 = vmatpush1.msra.mxu0 %v318
      %647 = vmatprep.subr.mxu0 %v321
      %648 = vmatpush1.msra.mxu0 %v320
      %649 = vmatprep.subr.mxu0 %v323
      %650 = vmatpush1.msra.mxu0 %v322
      %651 = vmatprep.subr.mxu0 0.0
      %652 = vmatpush1.msra.mxu0 0.0
      %653 = vmatprep.subr.mxu0 0.0
      %654 = vmatpush1.msra.mxu0 0.0
      %655 = vmatprep.subr.mxu0 0.0
      %656 = vmatpush1.msra.mxu0 0.0
      %657 = vmatprep.subr.mxu0 0.0
      %658 = vmatpush1.msra.mxu0 0.0
      %659 = vmatprep.subr.mxu0 0.0
      %660 = vmatpush1.msra.mxu0 0.0
      %661 = vmatprep.subr.mxu0 0.0
      %662 = vmatpush1.msra.mxu0 0.0
      %663 = vmatprep.subr.mxu0 0.0
      %664 = vmatpush1.msra.mxu0 0.0
      %665 = vmatprep.subr.mxu0 0.0
      %666 = vmatpush1.msra.mxu0 0.0
      %667 = vmatprep.subr.mxu0 0.0
      %668 = vmatpush1.msra.mxu0 0.0
      %669 = vmatprep.subr.mxu0 0.0
      %670 = vmatpush1.msra.mxu0 0.0
      %671 = vmatprep.subr.mxu0 0.0
      %672 = vmatpush1.msra.mxu0 0.0
      %673 = vmatprep.subr.mxu0 0.0
      %674 = vmatpush1.msra.mxu0 0.0
      %675 = vmatprep.subr.mxu0 0.0
      %676 = vmatpush1.msra.mxu0 0.0
      %677 = vmatprep.subr.mxu0 0.0
      %678 = vmatpush1.msra.mxu0 0.0
      %679 = vmatprep.subr.mxu0 0.0
      %680 = vmatpush1.msra.mxu0 0.0
      %681 = vmatprep.subr.mxu0 0.0
      %682 = vmatpush1.msra.mxu0 0.0
      %683 = vmatprep.subr.mxu0 0.0
      %684 = vmatpush1.msra.mxu0 0.0
      %685 = vmatprep.subr.mxu0 0.0
      %686 = vmatpush1.msra.mxu0 0.0
      %687 = vmatprep.subr.mxu0 0.0
      %688 = vmatpush1.msra.mxu0 0.0
      %689 = vmatprep.subr.mxu0 0.0
      %690 = vmatpush1.msra.mxu0 0.0
      %691 = vmatprep.subr.mxu0 0.0
      %692 = vmatpush1.msra.mxu0 0.0
      %693 = vmatprep.subr.mxu0 0.0
      %694 = vmatpush1.msra.mxu0 0.0
      %695 = vmatprep.subr.mxu0 0.0
      %696 = vmatpush1.msra.mxu0 0.0
      %697 = vmatprep.subr.mxu0 0.0
      %698 = vmatpush1.msra.mxu0 0.0
      %699 = vmatprep.subr.mxu0 0.0
      %700 = vmatpush1.msra.mxu0 0.0
      %701 = vmatprep.subr.mxu0 0.0
      %702 = vmatpush1.msra.mxu0 0.0
      %703 = vmatprep.subr.mxu0 0.0
      %704 = vmatpush1.msra.mxu0 0.0
      %705 = vmatprep.subr.mxu0 0.0
      %706 = vmatpush1.msra.mxu0 0.0
      %707 = vmatprep.subr.mxu0 0.0
      %708 = vmatpush1.msra.mxu0 0.0
      %709 = vmatprep.mubr.f32.mxu0 0.0
      %710 = vmatmul.mubr.f32.gmra.mrb[0].mxu0 %v550
      %v711 = vpop.f32.mrb[0].mxu0
      %v712 = vadd.f32 %v391, %v711
      %v713 = vpop.f32.mrb[0].mxu0
      %v714 = vadd.f32 %v391, %v713
      %715 = vmatprep.mubr.f32.mxu0 0.0
      %716 = vmatmul.mubr.f32.gmra.mrb[0].mxu0 %v553
      %v717 = vpop.f32.mrb[0].mxu0
      %v718 = vadd.f32 %v396, %v717
      %v719 = vpop.f32.mrb[0].mxu0
      %v720 = vadd.f32 %v396, %v719
      %721 = vmatprep.mubr.f32.mxu0 0.0
      %722 = vmatmul.mubr.f32.gmra.mrb[0].mxu0 %v556
      %v723 = vpop.f32.mrb[0].mxu0
      %v724 = vadd.f32 %v401, %v723
      %v725 = vpop.f32.mrb[0].mxu0
      %v726 = vadd.f32 %v401, %v725
      %727 = vmatprep.mubr.f32.mxu0 0.0
      %728 = vmatmul.mubr.f32.gmra.mrb[0].mxu0 %v559
      %v729 = vpop.f32.mrb[0].mxu0
      %v730 = vadd.f32 %v406, %v729
      %v731 = vpop.f32.mrb[0].mxu0
      %v732 = vadd.f32 %v406, %v731
      %733 = vmatprep.mubr.f32.mxu0 0.0
      %734 = vmatmul.mubr.f32.gmra.mrb[0].mxu0 %v562
      %v735 = vpop.f32.mrb[0].mxu0
      %v736 = vadd.f32 %v411, %v735
      %v737 = vpop.f32.mrb[0].mxu0
      %v738 = vadd.f32 %v411, %v737
      %739 = vmatprep.mubr.f32.mxu0 0.0
      %740 = vmatmul.mubr.f32.gmra.mrb[0].mxu0 %v565
      %v741 = vpop.f32.mrb[0].mxu0
      %v742 = vadd.f32 %v416, %v741
      %v743 = vpop.f32.mrb[0].mxu0
      %v744 = vadd.f32 %v416, %v743
      %745 = vmatprep.mubr.f32.mxu0 0.0
      %746 = vmatmul.mubr.f32.gmra.mrb[0].mxu0 %v568
      %v747 = vpop.f32.mrb[0].mxu0
      %v748 = vadd.f32 %v421, %v747
      %v749 = vpop.f32.mrb[0].mxu0
      %v750 = vadd.f32 %v421, %v749
      %751 = vmatprep.mubr.f32.mxu0 0.0
      %752 = vmatmul.mubr.f32.gmra.mrb[0].mxu0 %v571
      %v753 = vpop.f32.mrb[0].mxu0
      %v754 = vadd.f32 %v426, %v753
      %v755 = vpop.f32.mrb[0].mxu0
      %v756 = vadd.f32 %v426, %v755
      %757 = vmatprep.mubr.f32.mxu0 0.0
      %758 = vmatmul.mubr.f32.gmra.mrb[0].mxu0 %v574
      %v759 = vpop.f32.mrb[0].mxu0
      %v760 = vadd.f32 %v431, %v759
      %v761 = vpop.f32.mrb[0].mxu0
      %v762 = vadd.f32 %v431, %v761
      %763 = vmatprep.mubr.f32.mxu0 0.0
      %764 = vmatmul.mubr.f32.gmra.mrb[0].mxu0 %v577
      %v765 = vpop.f32.mrb[0].mxu0
      %v766 = vadd.f32 %v436, %v765
      %v767 = vpop.f32.mrb[0].mxu0
      %v768 = vadd.f32 %v436, %v767
      %769 = vmatprep.mubr.f32.mxu0 0.0
      %770 = vmatmul.mubr.f32.gmra.mrb[0].mxu0 %v580
      %v771 = vpop.f32.mrb[0].mxu0
      %v772 = vadd.f32 %v441, %v771
      %v773 = vpop.f32.mrb[0].mxu0
      %v774 = vadd.f32 %v441, %v773
      %775 = vmatprep.mubr.f32.mxu0 0.0
      %776 = vmatmul.mubr.f32.gmra.mrb[0].mxu0 %v583
      %v777 = vpop.f32.mrb[0].mxu0
      %v778 = vadd.f32 %v446, %v777
      %v779 = vpop.f32.mrb[0].mxu0
      %v780 = vadd.f32 %v446, %v779
      %781 = vmatprep.mubr.f32.mxu0 0.0
      %782 = vmatmul.mubr.f32.gmra.mrb[0].mxu0 %v586
      %v783 = vpop.f32.mrb[0].mxu0
      %v784 = vadd.f32 %v451, %v783
      %v785 = vpop.f32.mrb[0].mxu0
      %v786 = vadd.f32 %v451, %v785
      %787 = vmatprep.mubr.f32.mxu0 0.0
      %788 = vmatmul.mubr.f32.gmra.mrb[0].mxu0 %v589
      %v789 = vpop.f32.mrb[0].mxu0
      %v790 = vadd.f32 %v456, %v789
      %v791 = vpop.f32.mrb[0].mxu0
      %v792 = vadd.f32 %v456, %v791
      %793 = vmatprep.mubr.f32.mxu0 0.0
      %794 = vmatmul.mubr.f32.gmra.mrb[0].mxu0 %v592
      %v795 = vpop.f32.mrb[0].mxu0
      %v796 = vadd.f32 %v461, %v795
      %v797 = vpop.f32.mrb[0].mxu0
      %v798 = vadd.f32 %v461, %v797
      %799 = vmatprep.mubr.f32.mxu0 0.0
      %800 = vmatmul.mubr.f32.gmra.mrb[0].mxu0 %v595
      %v801 = vpop.f32.mrb[0].mxu0
      %v802 = vadd.f32 %v466, %v801
      %v803 = vpop.f32.mrb[0].mxu0
      %v804 = vadd.f32 %v466, %v803
      %805 = vmatprep.mubr.f32.mxu0 0.0
      %806 = vmatmul.mubr.f32.gmra.mrb[0].mxu0 %v598
      %v807 = vpop.f32.mrb[0].mxu0
      %v808 = vadd.f32 %v471, %v807
      %v809 = vpop.f32.mrb[0].mxu0
      %v810 = vadd.f32 %v471, %v809
      %811 = vmatprep.mubr.f32.mxu0 0.0
      %812 = vmatmul.mubr.f32.gmra.mrb[0].mxu0 %v601
      %v813 = vpop.f32.mrb[0].mxu0
      %v814 = vadd.f32 %v476, %v813
      %v815 = vpop.f32.mrb[0].mxu0
      %v816 = vadd.f32 %v476, %v815
      %817 = vmatprep.mubr.f32.mxu0 0.0
      %818 = vmatmul.mubr.f32.gmra.mrb[0].mxu0 %v604
      %v819 = vpop.f32.mrb[0].mxu0
      %v820 = vadd.f32 %v481, %v819
      %v821 = vpop.f32.mrb[0].mxu0
      %v822 = vadd.f32 %v481, %v821
      %823 = vmatprep.mubr.f32.mxu0 0.0
      %824 = vmatmul.mubr.f32.gmra.mrb[0].mxu0 %v607
      %v825 = vpop.f32.mrb[0].mxu0
      %v826 = vadd.f32 %v486, %v825
      %v827 = vpop.f32.mrb[0].mxu0
      %v828 = vadd.f32 %v486, %v827
      %829 = vmatprep.mubr.f32.mxu0 0.0
      %830 = vmatmul.mubr.f32.gmra.mrb[0].mxu0 %v610
      %v831 = vpop.f32.mrb[0].mxu0
      %v832 = vadd.f32 %v491, %v831
      %v833 = vpop.f32.mrb[0].mxu0
      %v834 = vadd.f32 %v491, %v833
      %835 = vmatprep.mubr.f32.mxu0 0.0
      %836 = vmatmul.mubr.f32.gmra.mrb[0].mxu0 %v613
      %v837 = vpop.f32.mrb[0].mxu0
      %v838 = vadd.f32 %v496, %v837
      %v839 = vpop.f32.mrb[0].mxu0
      %v840 = vadd.f32 %v496, %v839
      %841 = vmatprep.mubr.f32.mxu0 0.0
      %842 = vmatmul.mubr.f32.gmra.mrb[0].mxu0 %v616
      %v843 = vpop.f32.mrb[0].mxu0
      %v844 = vadd.f32 %v501, %v843
      %v845 = vpop.f32.mrb[0].mxu0
      %v846 = vadd.f32 %v501, %v845
      %847 = vmatprep.mubr.f32.mxu0 0.0
      %848 = vmatmul.mubr.f32.gmra.mrb[0].mxu0 %v619
      %v849 = vpop.f32.mrb[0].mxu0
      %v850 = vadd.f32 %v506, %v849
      %v851 = vpop.f32.mrb[0].mxu0
      %v852 = vadd.f32 %v506, %v851
      %853 = vmatprep.mubr.f32.mxu0 0.0
      %854 = vmatmul.mubr.f32.gmra.mrb[0].mxu0 %v622
      %v855 = vpop.f32.mrb[0].mxu0
      %v856 = vadd.f32 %v511, %v855
      %v857 = vpop.f32.mrb[0].mxu0
      %v858 = vadd.f32 %v511, %v857
      %859 = vmatprep.mubr.f32.mxu0 0.0
      %860 = vmatmul.mubr.f32.gmra.mrb[0].mxu0 %v625
      %v861 = vpop.f32.mrb[0].mxu0
      %v862 = vadd.f32 %v516, %v861
      %v863 = vpop.f32.mrb[0].mxu0
      %v864 = vadd.f32 %v516, %v863
      %865 = vmatprep.mubr.f32.mxu0 0.0
      %866 = vmatmul.mubr.f32.gmra.mrb[0].mxu0 %v628
      %v867 = vpop.f32.mrb[0].mxu0
      %v868 = vadd.f32 %v521, %v867
      %v869 = vpop.f32.mrb[0].mxu0
      %v870 = vadd.f32 %v521, %v869
      %871 = vmatprep.mubr.f32.mxu0 0.0
      %872 = vmatmul.mubr.f32.gmra.mrb[0].mxu0 %v631
      %v873 = vpop.f32.mrb[0].mxu0
      %v874 = vadd.f32 %v526, %v873
      %v875 = vpop.f32.mrb[0].mxu0
      %v876 = vadd.f32 %v526, %v875
      %877 = vmatprep.mubr.f32.mxu0 0.0
      %878 = vmatmul.mubr.f32.gmra.mrb[0].mxu0 %v634
      %v879 = vpop.f32.mrb[0].mxu0
      %v880 = vadd.f32 %v531, %v879
      %v881 = vpop.f32.mrb[0].mxu0
      %v882 = vadd.f32 %v531, %v881
      %883 = vmatprep.mubr.f32.mxu0 0.0
      %884 = vmatmul.mubr.f32.gmra.mrb[0].mxu0 %v637
      %v885 = vpop.f32.mrb[0].mxu0
      %v886 = vadd.f32 %v536, %v885
      %v887 = vpop.f32.mrb[0].mxu0
      %v888 = vadd.f32 %v536, %v887
      %889 = vmatprep.mubr.f32.mxu0 0.0
      %890 = vmatmul.mubr.f32.gmra.mrb[0].mxu0 %v640
      %v891 = vpop.f32.mrb[0].mxu0
      %v892 = vadd.f32 %v541, %v891
      %v893 = vpop.f32.mrb[0].mxu0
      %v894 = vadd.f32 %v541, %v893
      %895 = vmatprep.mubr.f32.mxu0 0.0
      %896 = vmatmul.mubr.f32.gmra.mrb[0].mxu0 %v643
      %v897 = vpop.f32.mrb[0].mxu0
      %v898 = vadd.f32 %v546, %v897
      %v899 = vpop.f32.mrb[0].mxu0
      %v900 = vadd.f32 %v546, %v899
      %901 = vdwg.mxu0
      %v902 = vmax.f32 %v712, 0.0
      %v903 = vmax.f32 %v714, 0.0
      %v904 = vmax.f32 %v718, 0.0
      %v905 = vmax.f32 %v720, 0.0
      %v906 = vmax.f32 %v724, 0.0
      %v907 = vmax.f32 %v726, 0.0
      %v908 = vmax.f32 %v730, 0.0
      %v909 = vmax.f32 %v732, 0.0
      %v910 = vmax.f32 %v736, 0.0
      %v911 = vmax.f32 %v738, 0.0
      %v912 = vmax.f32 %v742, 0.0
      %v913 = vmax.f32 %v744, 0.0
      %v914 = vmax.f32 %v748, 0.0
      %v915 = vmax.f32 %v750, 0.0
      %v916 = vmax.f32 %v754, 0.0
      %v917 = vmax.f32 %v756, 0.0
      %v918 = vmax.f32 %v760, 0.0
      %v919 = vmax.f32 %v762, 0.0
      %v920 = vmax.f32 %v766, 0.0
      %v921 = vmax.f32 %v768, 0.0
      %v922 = vmax.f32 %v772, 0.0
      %v923 = vmax.f32 %v774, 0.0
      %v924 = vmax.f32 %v778, 0.0
      %v925 = vmax.f32 %v780, 0.0
      %v926 = vmax.f32 %v784, 0.0
      %v927 = vmax.f32 %v786, 0.0
      %v928 = vmax.f32 %v790, 0.0
      %v929 = vmax.f32 %v792, 0.0
      %v930 = vmax.f32 %v796, 0.0
      %v931 = vmax.f32 %v798, 0.0
      %v932 = vmax.f32 %v802, 0.0
      %v933 = vmax.f32 %v804, 0.0
      %v934 = vmax.f32 %v808, 0.0
      %v935 = vmax.f32 %v810, 0.0
      %v936 = vmax.f32 %v814, 0.0
      %v937 = vmax.f32 %v816, 0.0
      %v938 = vmax.f32 %v820, 0.0
      %v939 = vmax.f32 %v822, 0.0
      %v940 = vmax.f32 %v826, 0.0
      %v941 = vmax.f32 %v828, 0.0
      %v942 = vmax.f32 %v832, 0.0
      %v943 = vmax.f32 %v834, 0.0
      %v944 = vmax.f32 %v838, 0.0
      %v945 = vmax.f32 %v840, 0.0
      %v946 = vmax.f32 %v844, 0.0
      %v947 = vmax.f32 %v846, 0.0
      %v948 = vmax.f32 %v850, 0.0
      %v949 = vmax.f32 %v852, 0.0
      %v950 = vmax.f32 %v856, 0.0
      %v951 = vmax.f32 %v858, 0.0
      %v952 = vmax.f32 %v862, 0.0
      %v953 = vmax.f32 %v864, 0.0
      %v954 = vmax.f32 %v868, 0.0
      %v955 = vmax.f32 %v870, 0.0
      %v956 = vmax.f32 %v874, 0.0
      %v957 = vmax.f32 %v876, 0.0
      %v958 = vmax.f32 %v880, 0.0
      %v959 = vmax.f32 %v882, 0.0
      %v960 = vmax.f32 %v886, 0.0
      %v961 = vmax.f32 %v888, 0.0
      %v962 = vmax.f32 %v892, 0.0
      %v963 = vmax.f32 %v894, 0.0
      %v964 = vmax.f32 %v898, 0.0
      %v965 = vmax.f32 %v900, 0.0
      %v966 = vld [vmem:[%s3] sm:$0xff]
      %v967 = vld [vmem:[%s3 + $0x8] sm:$0xff]
      %v968 = vld [vmem:[%s3 + $0x10] sm:$0xff]
      %v969 = vld [vmem:[%s3 + $0x18] sm:$0xff]
      %v970 = vld [vmem:[%s3 + $0x20] sm:$0xff]
      %v971 = vld [vmem:[%s3 + $0x28] sm:$0xff]
      %v972 = vld [vmem:[%s3 + $0x30] sm:$0xff]
      %v973 = vld [vmem:[%s3 + $0x38] sm:$0xff]
      %v974 = vld [vmem:[%s3 + $0x40] sm:$0xff]
      %v975 = vld [vmem:[%s3 + $0x48] sm:$0xff]
      %v976 = vld [vmem:[%s3 + $0x50] sm:$0xff]
      %v977 = vld [vmem:[%s3 + $0x58] sm:$0xff]
      %v978 = vld [vmem:[%s3 + $0x60] sm:$0xff]
      %v979 = vld [vmem:[%s3 + $0x68] sm:$0xff]
      %v980 = vld [vmem:[%s3 + $0x70] sm:$0xff]
      %v981 = vld [vmem:[%s3 + $0x78] sm:$0xff]
      %v982 = vld [vmem:[%s3 + $0x80] sm:$0xff]
      %v983 = vld [vmem:[%s3 + $0x88] sm:$0xff]
      %v984 = vld [vmem:[%s3 + $0x90] sm:$0xff]
      %v985 = vld [vmem:[%s3 + $0x98] sm:$0xff]
      %v986 = vld [vmem:[%s3 + $0xa0] sm:$0xff]
      %v987 = vld [vmem:[%s3 + $0xa8] sm:$0xff]
      %v988 = vld [vmem:[%s3 + $0xb0] sm:$0xff]
      %v989 = vld [vmem:[%s3 + $0xb8] sm:$0xff]
      %v990 = vld [vmem:[%s3 + $0xc0] sm:$0xff]
      %v991 = vld [vmem:[%s3 + $0xc8] sm:$0xff]
      %v992 = vld [vmem:[%s3 + $0xd0] sm:$0xff]
      %v993 = vld [vmem:[%s3 + $0xd8] sm:$0xff]
      %v994 = vld [vmem:[%s3 + $0xe0] sm:$0xff]
      %v995 = vld [vmem:[%s3 + $0xe8] sm:$0xff]
      %v996 = vld [vmem:[%s3 + $0xf0] sm:$0xff]
      %v997 = vld [vmem:[%s3 + $0xf8] sm:$0xff]
      %v998 = vld [vmem:[%s4] sm:$0xff]
      %v999 = vld [vmem:[%s4 + $0x8] sm:$0xff]
      %v1000 = vld [vmem:[%s4 + $0x10] sm:$0xff]
      %v1001 = vld [vmem:[%s4 + $0x18] sm:$0xff]
      %v1002 = vld [vmem:[%s4 + $0x20] sm:$0xff]
      %v1003 = vld [vmem:[%s4 + $0x28] sm:$0xff]
      %v1004 = vld [vmem:[%s4 + $0x30] sm:$0xff]
      %v1005 = vld [vmem:[%s4 + $0x38] sm:$0xff]
      %v1006 = vld [vmem:[%s4 + $0x40] sm:$0xff]
      %v1007 = vld [vmem:[%s4 + $0x48] sm:$0xff]
      %v1008 = vld [vmem:[%s4 + $0x50] sm:$0xff]
      %v1009 = vld [vmem:[%s4 + $0x58] sm:$0xff]
      %v1010 = vld [vmem:[%s4 + $0x60] sm:$0xff]
      %v1011 = vld [vmem:[%s4 + $0x68] sm:$0xff]
      %v1012 = vld [vmem:[%s4 + $0x70] sm:$0xff]
      %v1013 = vld [vmem:[%s4 + $0x78] sm:$0xff]
      %1015 = vset.pattern.permute.xlu0 0
      %1016 = vperm.xlu0 %1015, %v998
      %v1017 = vpop.permute.xlu0 %1016
      %1020 = vset.pattern.permute.xlu0 0
      %1021 = vperm.xlu0 %1020, %v999
      %v1022 = vpop.permute.xlu0 %1021
      %1025 = vset.pattern.permute.xlu0 0
      %1026 = vperm.xlu0 %1025, %v1000
      %v1027 = vpop.permute.xlu0 %1026
      %1030 = vset.pattern.permute.xlu0 0
      %1031 = vperm.xlu0 %1030, %v1001
      %v1032 = vpop.permute.xlu0 %1031
      %1035 = vset.pattern.permute.xlu0 0
      %1036 = vperm.xlu0 %1035, %v1002
      %v1037 = vpop.permute.xlu0 %1036
      %1040 = vset.pattern.permute.xlu0 0
      %1041 = vperm.xlu0 %1040, %v1003
      %v1042 = vpop.permute.xlu0 %1041
      %1045 = vset.pattern.permute.xlu0 0
      %1046 = vperm.xlu0 %1045, %v1004
      %v1047 = vpop.permute.xlu0 %1046
      %1050 = vset.pattern.permute.xlu0 0
      %1051 = vperm.xlu0 %1050, %v1005
      %v1052 = vpop.permute.xlu0 %1051
      %1055 = vset.pattern.permute.xlu0 0
      %1056 = vperm.xlu0 %1055, %v1006
      %v1057 = vpop.permute.xlu0 %1056
      %1060 = vset.pattern.permute.xlu0 0
      %1061 = vperm.xlu0 %1060, %v1007
      %v1062 = vpop.permute.xlu0 %1061
      %1065 = vset.pattern.permute.xlu0 0
      %1066 = vperm.xlu0 %1065, %v1008
      %v1067 = vpop.permute.xlu0 %1066
      %1070 = vset.pattern.permute.xlu0 0
      %1071 = vperm.xlu0 %1070, %v1009
      %v1072 = vpop.permute.xlu0 %1071
      %1075 = vset.pattern.permute.xlu0 0
      %1076 = vperm.xlu0 %1075, %v1010
      %v1077 = vpop.permute.xlu0 %1076
      %1080 = vset.pattern.permute.xlu0 0
      %1081 = vperm.xlu0 %1080, %v1011
      %v1082 = vpop.permute.xlu0 %1081
      %1085 = vset.pattern.permute.xlu0 0
      %1086 = vperm.xlu0 %1085, %v1012
      %v1087 = vpop.permute.xlu0 %1086
      %1090 = vset.pattern.permute.xlu0 0
      %1091 = vperm.xlu0 %1090, %v1013
      %v1092 = vpop.permute.xlu0 %1091
      %1094 = vmatprep.subr.mxu0 %v903
      %1095 = vmatpush1.msra.mxu0 %v902
      %1096 = vmatprep.subr.mxu0 %v905
      %1097 = vmatpush1.msra.mxu0 %v904
      %1098 = vmatprep.subr.mxu0 %v907
      %1099 = vmatpush1.msra.mxu0 %v906
      %1100 = vmatprep.subr.mxu0 %v909
      %1101 = vmatpush1.msra.mxu0 %v908
      %1102 = vmatprep.subr.mxu0 %v911
      %1103 = vmatpush1.msra.mxu0 %v910
      %1104 = vmatprep.subr.mxu0 %v913
      %1105 = vmatpush1.msra.mxu0 %v912
      %1106 = vmatprep.subr.mxu0 %v915
      %1107 = vmatpush1.msra.mxu0 %v914
      %1108 = vmatprep.subr.mxu0 %v917
      %1109 = vmatpush1.msra.mxu0 %v916
      %1110 = vmatprep.subr.mxu0 %v919
      %1111 = vmatpush1.msra.mxu0 %v918
      %1112 = vmatprep.subr.mxu0 %v921
      %1113 = vmatpush1.msra.mxu0 %v920
      %1114 = vmatprep.subr.mxu0 %v923
      %1115 = vmatpush1.msra.mxu0 %v922
      %1116 = vmatprep.subr.mxu0 %v925
      %1117 = vmatpush1.msra.mxu0 %v924
      %1118 = vmatprep.subr.mxu0 %v927
      %1119 = vmatpush1.msra.mxu0 %v926
      %1120 = vmatprep.subr.mxu0 %v929
      %1121 = vmatpush1.msra.mxu0 %v928
      %1122 = vmatprep.subr.mxu0 %v931
      %1123 = vmatpush1.msra.mxu0 %v930
      %1124 = vmatprep.subr.mxu0 %v933
      %1125 = vmatpush1.msra.mxu0 %v932
      %1126 = vmatprep.subr.mxu0 %v935
      %1127 = vmatpush1.msra.mxu0 %v934
      %1128 = vmatprep.subr.mxu0 %v937
      %1129 = vmatpush1.msra.mxu0 %v936
      %1130 = vmatprep.subr.mxu0 %v939
      %1131 = vmatpush1.msra.mxu0 %v938
      %1132 = vmatprep.subr.mxu0 %v941
      %1133 = vmatpush1.msra.mxu0 %v940
      %1134 = vmatprep.subr.mxu0 %v943
      %1135 = vmatpush1.msra.mxu0 %v942
      %1136 = vmatprep.subr.mxu0 %v945
      %1137 = vmatpush1.msra.mxu0 %v944
      %1138 = vmatprep.subr.mxu0 %v947
      %1139 = vmatpush1.msra.mxu0 %v946
      %1140 = vmatprep.subr.mxu0 %v949
      %1141 = vmatpush1.msra.mxu0 %v948
      %1142 = vmatprep.subr.mxu0 %v951
      %1143 = vmatpush1.msra.mxu0 %v950
      %1144 = vmatprep.subr.mxu0 %v953
      %1145 = vmatpush1.msra.mxu0 %v952
      %1146 = vmatprep.subr.mxu0 %v955
      %1147 = vmatpush1.msra.mxu0 %v954
      %1148 = vmatprep.subr.mxu0 %v957
      %1149 = vmatpush1.msra.mxu0 %v956
      %1150 = vmatprep.subr.mxu0 %v959
      %1151 = vmatpush1.msra.mxu0 %v958
      %1152 = vmatprep.subr.mxu0 %v961
      %1153 = vmatpush1.msra.mxu0 %v960
      %1154 = vmatprep.subr.mxu0 %v963
      %1155 = vmatpush1.msra.mxu0 %v962
      %1156 = vmatprep.subr.mxu0 %v965
      %1157 = vmatpush1.msra.mxu0 %v964
      %1158 = vmatprep.mubr.f32.mxu0 %v967
      %1159 = vmatmul.mubr.f32.gmra.mrb[0].mxu0 %v966
      %v1160 = vpop.f32.mrb[0].mxu0
      %v1161 = vadd.f32 %v1017, %v1160
      %v1162 = vpop.f32.mrb[0].mxu0
      %v1163 = vadd.f32 %v1017, %v1162
      %1164 = vmatprep.mubr.f32.mxu0 %v969
      %1165 = vmatmul.mubr.f32.gmra.mrb[0].mxu0 %v968
      %v1166 = vpop.f32.mrb[0].mxu0
      %v1167 = vadd.f32 %v1022, %v1166
      %v1168 = vpop.f32.mrb[0].mxu0
      %v1169 = vadd.f32 %v1022, %v1168
      %1170 = vmatprep.mubr.f32.mxu0 %v971
      %1171 = vmatmul.mubr.f32.gmra.mrb[0].mxu0 %v970
      %v1172 = vpop.f32.mrb[0].mxu0
      %v1173 = vadd.f32 %v1027, %v1172
      %v1174 = vpop.f32.mrb[0].mxu0
      %v1175 = vadd.f32 %v1027, %v1174
      %1176 = vmatprep.mubr.f32.mxu0 %v973
      %1177 = vmatmul.mubr.f32.gmra.mrb[0].mxu0 %v972
      %v1178 = vpop.f32.mrb[0].mxu0
      %v1179 = vadd.f32 %v1032, %v1178
      %v1180 = vpop.f32.mrb[0].mxu0
      %v1181 = vadd.f32 %v1032, %v1180
      %1182 = vmatprep.mubr.f32.mxu0 %v975
      %1183 = vmatmul.mubr.f32.gmra.mrb[0].mxu0 %v974
      %v1184 = vpop.f32.mrb[0].mxu0
      %v1185 = vadd.f32 %v1037, %v1184
      %v1186 = vpop.f32.mrb[0].mxu0
      %v1187 = vadd.f32 %v1037, %v1186
      %1188 = vmatprep.mubr.f32.mxu0 %v977
      %1189 = vmatmul.mubr.f32.gmra.mrb[0].mxu0 %v976
      %v1190 = vpop.f32.mrb[0].mxu0
      %v1191 = vadd.f32 %v1042, %v1190
      %v1192 = vpop.f32.mrb[0].mxu0
      %v1193 = vadd.f32 %v1042, %v1192
      %1194 = vmatprep.mubr.f32.mxu0 %v979
      %1195 = vmatmul.mubr.f32.gmra.mrb[0].mxu0 %v978
      %v1196 = vpop.f32.mrb[0].mxu0
      %v1197 = vadd.f32 %v1047, %v1196
      %v1198 = vpop.f32.mrb[0].mxu0
      %v1199 = vadd.f32 %v1047, %v1198
      %1200 = vmatprep.mubr.f32.mxu0 %v981
      %1201 = vmatmul.mubr.f32.gmra.mrb[0].mxu0 %v980
      %v1202 = vpop.f32.mrb[0].mxu0
      %v1203 = vadd.f32 %v1052, %v1202
      %v1204 = vpop.f32.mrb[0].mxu0
      %v1205 = vadd.f32 %v1052, %v1204
      %1206 = vmatprep.mubr.f32.mxu0 %v983
      %1207 = vmatmul.mubr.f32.gmra.mrb[0].mxu0 %v982
      %v1208 = vpop.f32.mrb[0].mxu0
      %v1209 = vadd.f32 %v1057, %v1208
      %v1210 = vpop.f32.mrb[0].mxu0
      %v1211 = vadd.f32 %v1057, %v1210
      %1212 = vmatprep.mubr.f32.mxu0 %v985
      %1213 = vmatmul.mubr.f32.gmra.mrb[0].mxu0 %v984
      %v1214 = vpop.f32.mrb[0].mxu0
      %v1215 = vadd.f32 %v1062, %v1214
      %v1216 = vpop.f32.mrb[0].mxu0
      %v1217 = vadd.f32 %v1062, %v1216
      %1218 = vmatprep.mubr.f32.mxu0 %v987
      %1219 = vmatmul.mubr.f32.gmra.mrb[0].mxu0 %v986
      %v1220 = vpop.f32.mrb[0].mxu0
      %v1221 = vadd.f32 %v1067, %v1220
      %v1222 = vpop.f32.mrb[0].mxu0
      %v1223 = vadd.f32 %v1067, %v1222
      %1224 = vmatprep.mubr.f32.mxu0 %v989
      %1225 = vmatmul.mubr.f32.gmra.mrb[0].mxu0 %v988
      %v1226 = vpop.f32.mrb[0].mxu0
      %v1227 = vadd.f32 %v1072, %v1226
      %v1228 = vpop.f32.mrb[0].mxu0
      %v1229 = vadd.f32 %v1072, %v1228
      %1230 = vmatprep.mubr.f32.mxu0 %v991
      %1231 = vmatmul.mubr.f32.gmra.mrb[0].mxu0 %v990
      %v1232 = vpop.f32.mrb[0].mxu0
      %v1233 = vadd.f32 %v1077, %v1232
      %v1234 = vpop.f32.mrb[0].mxu0
      %v1235 = vadd.f32 %v1077, %v1234
      %1236 = vmatprep.mubr.f32.mxu0 %v993
      %1237 = vmatmul.mubr.f32.gmra.mrb[0].mxu0 %v992
      %v1238 = vpop.f32.mrb[0].mxu0
      %v1239 = vadd.f32 %v1082, %v1238
      %v1240 = vpop.f32.mrb[0].mxu0
      %v1241 = vadd.f32 %v1082, %v1240
      %1242 = vmatprep.mubr.f32.mxu0 %v995
      %1243 = vmatmul.mubr.f32.gmra.mrb[0].mxu0 %v994
      %v1244 = vpop.f32.mrb[0].mxu0
      %v1245 = vadd.f32 %v1087, %v1244
      %v1246 = vpop.f32.mrb[0].mxu0
      %v1247 = vadd.f32 %v1087, %v1246
      %1248 = vmatprep.mubr.f32.mxu0 %v997
      %1249 = vmatmul.mubr.f32.gmra.mrb[0].mxu0 %v996
      %v1250 = vpop.f32.mrb[0].mxu0
      %v1251 = vadd.f32 %v1092, %v1250
      %v1252 = vpop.f32.mrb[0].mxu0
      %v1253 = vadd.f32 %v1092, %v1252
      %1254 = vdwg.mxu0
      %v1255 = vmax.f32 %v1161, 0.0
      %v1256 = vmax.f32 %v1163, 0.0
      %v1257 = vmax.f32 %v1167, 0.0
      %v1258 = vmax.f32 %v1169, 0.0
      %v1259 = vmax.f32 %v1173, 0.0
      %v1260 = vmax.f32 %v1175, 0.0
      %v1261 = vmax.f32 %v1179, 0.0
      %v1262 = vmax.f32 %v1181, 0.0
      %v1263 = vmax.f32 %v1185, 0.0
      %v1264 = vmax.f32 %v1187, 0.0
      %v1265 = vmax.f32 %v1191, 0.0
      %v1266 = vmax.f32 %v1193, 0.0
      %v1267 = vmax.f32 %v1197, 0.0
      %v1268 = vmax.f32 %v1199, 0.0
      %v1269 = vmax.f32 %v1203, 0.0
      %v1270 = vmax.f32 %v1205, 0.0
      %v1271 = vmax.f32 %v1209, 0.0
      %v1272 = vmax.f32 %v1211, 0.0
      %v1273 = vmax.f32 %v1215, 0.0
      %v1274 = vmax.f32 %v1217, 0.0
      %v1275 = vmax.f32 %v1221, 0.0
      %v1276 = vmax.f32 %v1223, 0.0
      %v1277 = vmax.f32 %v1227, 0.0
      %v1278 = vmax.f32 %v1229, 0.0
      %v1279 = vmax.f32 %v1233, 0.0
      %v1280 = vmax.f32 %v1235, 0.0
      %v1281 = vmax.f32 %v1239, 0.0
      %v1282 = vmax.f32 %v1241, 0.0
      %v1283 = vmax.f32 %v1245, 0.0
      %v1284 = vmax.f32 %v1247, 0.0
      %v1285 = vmax.f32 %v1251, 0.0
      %v1286 = vmax.f32 %v1253, 0.0
      %v1287 = vld [vmem:[%s5] sm:$0x1f]
      %v1288 = vld [vmem:[%s6] sm:$0x1f]
      %1290 = vset.pattern.permute.xlu0 0
      %1291 = vperm.xlu0 %1290, %v1288
      %v1292 = vpop.permute.xlu0 %1291
      %1294 = vmatprep.subr.mxu0 %v1256
      %1295 = vmatpush1.msra.mxu0 %v1255
      %1296 = vmatprep.subr.mxu0 %v1258
      %1297 = vmatpush1.msra.mxu0 %v1257
      %1298 = vmatprep.subr.mxu0 %v1260
      %1299 = vmatpush1.msra.mxu0 %v1259
      %1300 = vmatprep.subr.mxu0 %v1262
      %1301 = vmatpush1.msra.mxu0 %v1261
      %1302 = vmatprep.subr.mxu0 %v1264
      %1303 = vmatpush1.msra.mxu0 %v1263
      %1304 = vmatprep.subr.mxu0 %v1266
      %1305 = vmatpush1.msra.mxu0 %v1265
      %1306 = vmatprep.subr.mxu0 %v1268
      %1307 = vmatpush1.msra.mxu0 %v1267
      %1308 = vmatprep.subr.mxu0 %v1270
      %1309 = vmatpush1.msra.mxu0 %v1269
      %1310 = vmatprep.subr.mxu0 %v1272
      %1311 = vmatpush1.msra.mxu0 %v1271
      %1312 = vmatprep.subr.mxu0 %v1274
      %1313 = vmatpush1.msra.mxu0 %v1273
      %1314 = vmatprep.subr.mxu0 %v1276
      %1315 = vmatpush1.msra.mxu0 %v1275
      %1316 = vmatprep.subr.mxu0 %v1278
      %1317 = vmatpush1.msra.mxu0 %v1277
      %1318 = vmatprep.subr.mxu0 %v1280
      %1319 = vmatpush1.msra.mxu0 %v1279
      %1320 = vmatprep.subr.mxu0 %v1282
      %1321 = vmatpush1.msra.mxu0 %v1281
      %1322 = vmatprep.subr.mxu0 %v1284
      %1323 = vmatpush1.msra.mxu0 %v1283
      %1324 = vmatprep.subr.mxu0 %v1286
      %1325 = vmatpush1.msra.mxu0 %v1285
      %1326 = vmatprep.subr.mxu0 0.0
      %1327 = vmatpush1.msra.mxu0 0.0
      %1328 = vmatprep.subr.mxu0 0.0
      %1329 = vmatpush1.msra.mxu0 0.0
      %1330 = vmatprep.subr.mxu0 0.0
      %1331 = vmatpush1.msra.mxu0 0.0
      %1332 = vmatprep.subr.mxu0 0.0
      %1333 = vmatpush1.msra.mxu0 0.0
      %1334 = vmatprep.subr.mxu0 0.0
      %1335 = vmatpush1.msra.mxu0 0.0
      %1336 = vmatprep.subr.mxu0 0.0
      %1337 = vmatpush1.msra.mxu0 0.0
      %1338 = vmatprep.subr.mxu0 0.0
      %1339 = vmatpush1.msra.mxu0 0.0
      %1340 = vmatprep.subr.mxu0 0.0
      %1341 = vmatpush1.msra.mxu0 0.0
      %1342 = vmatprep.subr.mxu0 0.0
      %1343 = vmatpush1.msra.mxu0 0.0
      %1344 = vmatprep.subr.mxu0 0.0
      %1345 = vmatpush1.msra.mxu0 0.0
      %1346 = vmatprep.subr.mxu0 0.0
      %1347 = vmatpush1.msra.mxu0 0.0
      %1348 = vmatprep.subr.mxu0 0.0
      %1349 = vmatpush1.msra.mxu0 0.0
      %1350 = vmatprep.subr.mxu0 0.0
      %1351 = vmatpush1.msra.mxu0 0.0
      %1352 = vmatprep.subr.mxu0 0.0
      %1353 = vmatpush1.msra.mxu0 0.0
      %1354 = vmatprep.subr.mxu0 0.0
      %1355 = vmatpush1.msra.mxu0 0.0
      %1356 = vmatprep.subr.mxu0 0.0
      %1357 = vmatpush1.msra.mxu0 0.0
      %1358 = vmatprep.mubr.f32.mxu0 0.0
      %1359 = vmatmul.mubr.f32.gmra.mrb[0].mxu0 %v1287
      %v1360 = vpop.f32.mrb[0].mxu0
      %v1361 = vadd.f32 %v1292, %v1360
      %v1362 = vpop.f32.mrb[0].mxu0
      %v1363 = vadd.f32 %v1292, %v1362
      %1364 = vdwg.mxu0
      %vm1365 = vcmask 1044480
      %v1366 = vsel %vm1365, %v1361, -inf
      %v1367 = vrot.slane %v1366, 4
      %v1368 = vmax.f32 %v1366, %v1367
      %v1369 = vrot.slane %v1368, 2
      %v1370 = vmax.f32 %v1368, %v1369
      %v1371 = vrot.slane %v1370, 1
      %v1372 = vmax.f32 %v1370, %v1371
      %v1373 = vsel %vm1365, %v1363, -inf
      %v1374 = vrot.slane %v1373, 4
      %v1375 = vmax.f32 %v1373, %v1374
      %v1376 = vrot.slane %v1375, 2
      %v1377 = vmax.f32 %v1375, %v1376
      %v1378 = vrot.slane %v1377, 1
      %v1379 = vmax.f32 %v1377, %v1378
      %v1380 = vsub.f32 %v1361, %v1372
      %v1381 = vsub.f32 %v1363, %v1379
      %v1382 = vmul.f32 %v1380, 1.442695
      %v1383 = vpow.pop %v1382
      %v1384 = vmul.f32 %v1381, 1.442695
      %v1385 = vpow.pop %v1384
      %v1386 = vsel %vm1365, %v1383, 0.0
      %v1387 = vrot.slane %v1386, 4
      %v1388 = vadd.f32 %v1386, %v1387
      %v1389 = vrot.slane %v1388, 2
      %v1390 = vadd.f32 %v1388, %v1389
      %v1391 = vrot.slane %v1390, 1
      %v1392 = vadd.f32 %v1390, %v1391
      %v1393 = vsel %vm1365, %v1385, 0.0
      %v1394 = vrot.slane %v1393, 4
      %v1395 = vadd.f32 %v1393, %v1394
      %v1396 = vrot.slane %v1395, 2
      %v1397 = vadd.f32 %v1395, %v1396
      %v1398 = vrot.slane %v1397, 1
      %v1399 = vadd.f32 %v1397, %v1398
      %v1400 = vrcp.pop %v1392
      %v1401 = vmul.f32 %v1383, %v1400
      %v1402 = vrcp.pop %v1399
      %v1403 = vmul.f32 %v1385, %v1402
      %1404 = vst [vmem:[%s316] sm:$0x1f] %v1401
      %1405 = vst [vmem:[%s316 + $0x8] sm:$0x1f] %v1403
      %s1406 = smul.u32 2, %s23
      %p1407 = scmp.lt.s32.totalorder %s22, 1
      %s1408 = scalar_select %p1407, %s22, 1
      %p1409 = scmp.lt.s32.totalorder %s1406, 1
      %s1410 = scalar_select %p1409, %s1406, 1
      %s1411 = smul.addr %s1408, 2
      %s1412 = sadd.s32 %s1410, %s1411
      %s1413 = smul.addr %s1412, 8
      %s1414 = scalar_lea.vmem %s7, %s1413
      // Predicated region
      $region49: #{mlp_forward.5} parent=47 // pred_check
        %p1415 = pneg %p204
      $region50: #{mlp_forward.5} parent=47 // pred_check_branch
        %1417 = sbr.rel (%p1415) target = $region52
      $region51: #{mlp_forward.5} parent=47 // pred_region
        %s1418 = smul.u32 2, %s23
      $region52: #{mlp_forward.5} parent=47 // pred_fallthru
        _
    $region48: #{mlp_forward.5} parent=5 // pred_fallthru
      _
    %p1419 = scmp.le.s32.totalorder 2, %s13
    // Predicated region
    $region53: #{mlp_forward.5} parent=5 // pred_check
      %p1420 = pneg %p1419
    $region54: #{mlp_forward.5} parent=5 // pred_check_branch
      %1422 = sbr.rel (%p1420) target = $region56
    $region55: #{mlp_forward.5} parent=5 // pred_region
      %s1423 = ssub.s32 %s13, 2
      // Predicated region
      $region57: #{mlp_forward.5} parent=55 // pred_check
        %p1424 = pneg %p210
      $region58: #{mlp_forward.5} parent=55 // pred_check_branch
        %1426 = sbr.rel (%p1424) target = $region60
      $region59: #{mlp_forward.5} parent=55 // pred_region
        %s1427 = smul.u32 2, %s25
        %p1428 = scmp.lt.s32.totalorder %s24, 1
        %s1429 = scalar_select %p1428, %s24, 1
        %p1430 = scmp.lt.s32.totalorder %s1427, 1
        %s1431 = scalar_select %p1430, %s1427, 1
        %s1432 = smul.addr %s1429, 2
        %s1433 = sadd.s32 %s1431, %s1432
        %s1434 = smul.addr %s1433, 8
        %s1435 = scalar_lea.vmem %s7, %s1434
      $region60: #{mlp_forward.5} parent=55 // pred_fallthru
        _
    $region56: #{mlp_forward.5} parent=5 // pred_fallthru
      _
  $region6: #{mlp_forward.5} parent=0 // loop_footer
    %s17 = sadd.s32 1, %s13
  $region7: #{mlp_forward.5} parent=0 // loop_footer_branch
    %12 = sbr.rel target = $region3
  $region8: #{mlp_forward.5} parent=0 // loop_exit
    _

// kernel: mlp_forward.4
$region0: #{mlp_forward.4}
  #allocation0 [shape = 'u32[]', space=smem, size = 0x4, offset = 0x4, fixed_abs, tag = 'smem constant byte address 0x4 - core index']
  #allocation1 [shape = 'u32[144,128]{1,0:T(1,128)}', space=vmem, size = 0x12000, scoped, tag = 'internal scratch']
  %s0 = inlined_call_operand.vmem [shape: f32[2,24,256], index: 0, kind: input, shape index: {}]
  %s1 = inlined_call_operand.vmem [shape: f32[256,24], index: 1, kind: input, shape index: {}]
  %s2 = inlined_call_operand.vmem [shape: f32[256,1], index: 2, kind: input, shape index: {}]
  %s3 = inlined_call_operand.vmem [shape: f32[128,256], index: 3, kind: input, shape index: {}]
  %s4 = inlined_call_operand.vmem [shape: f32[128,1], index: 4, kind: input, shape index: {}]
  %s5 = inlined_call_operand.vmem [shape: f32[2,1,128,1], index: 5, kind: output, shape index: {0}]
  %s6 = inlined_call_operand.vmem [shape: f32[2,1,128,1], index: 6, kind: output, shape index: {1}]
  %7 = xla_tuple %s5, %s6
  %s8 = sld [smem:[#allocation0]]
  $region61: #{mlp_forward.4} parent=0
    _
  %s10 = ssub.s32 1, %s8
  %s11 = scalar_select 0, %s10, %s8
  loop: start=0, step=1, limit=4
  $region2: #{mlp_forward.4} parent=0 // loop_pre_header
    _
  $region3: #{mlp_forward.4} parent=0 // loop_header
    %s13 = sphi 0, %s17
    %p14 = scmp.ge.s32.totalorder %s13, 4
    %s20 = sphi 0, %s32
    %s21 = sphi 0, %s28
    %s22 = sphi 0, %s20
    %s23 = sphi 0, %s21
    %s24 = sphi 0, %s22
    %s25 = sphi 0, %s23
    %s37 = sphi 0, %s39
    %s40 = sphi 0, %s37
    %s41 = sphi 0, %s40
    %s57 = sphi 0, %s41
    %s61 = sphi 0, %s61
    %s63 = sphi 0, %s61
    %s64 = sphi 0, %s63
    %s78 = sphi 0, %s64
    %s82 = sphi 0, %s82
    %s84 = sphi 0, %s82
    %s85 = sphi 0, %s84
    %s99 = sphi 0, %s85
    %s103 = sphi 0, %s103
    %s105 = sphi 0, %s103
    %s106 = sphi 0, %s105
    %s120 = sphi 0, %s106
    %s124 = sphi 0, %s124
    %s126 = sphi 0, %s124
    %s127 = sphi 0, %s126
    %s141 = sphi 0, %s127
    %s149 = sphi 0, %s151
    %s152 = sphi 0, %s149
    %s153 = sphi 0, %s152
    %s169 = sphi 0, %s153
    %s177 = sphi 0, %s179
    %s180 = sphi 0, %s177
    %s181 = sphi 0, %s180
    %s197 = sphi 0, %s181
  $region4: #{mlp_forward.4} parent=0 // loop_header_branch
    %16 = sbr.rel (%p14) target = $region8
  $region5: #{mlp_forward.4} parent=0 // loop_body
    %s18 = ssub.s32 %s13, 1
    %s19 = ssub.s32 %s13, 2
    %s26 = sadd.s32 1, %s21
    %p27 = scmp.ge.s32.totalorder %s26, 1
    %s28 = scalar_select %p27, 0, %s26
    %s29 = sadd.s32 1, %s20
    %s30 = scalar_select %p27, %s29, %s20
    %p31 = scmp.ge.s32.totalorder %s30, 2
    %s32 = scalar_select %p31, 0, %s30
    %s33 = ssub.s32 %s20, %s32
    %s34 = ssub.s32 %s21, %s28
    %s35 = sor.u32 %s33, %s34
    %p36 = scmp.eq.s32.totalorder %s35, 0
    %s38 = sadd.s32 %s37, 1
    %s39 = scalar_select %p36, %s37, %s38
    %p42 = pneg %p36
    %p43 = scmp.eq.s32.totalorder %s13, 1
    %p44 = por %p42, %p43
    %p45 = scmp.ne.s32.totalorder %s37, %s40
    %p46 = scmp.eq.s32.totalorder %s13, 0
    %p47 = por %p45, %p46
    %p48 = scmp.ne.s32.totalorder %s37, %s40
    %p49 = scmp.eq.s32.totalorder %s18, 1
    %p50 = por %p48, %p49
    %p51 = scmp.ne.s32.totalorder %s40, %s41
    %p52 = scmp.eq.s32.totalorder %s18, 0
    %p53 = por %p51, %p52
    %p54 = scmp.ne.s32.totalorder %s40, %s41
    %p55 = scmp.eq.s32.totalorder %s19, 1
    %p56 = por %p54, %p55
    %p58 = scmp.ne.s32.totalorder %s41, %s57
    %p59 = scmp.eq.s32.totalorder %s19, 0
    %p60 = por %p58, %p59
    %s62 = sadd.s32 %s61, 1
    %p65 = scmp.eq.s32.totalorder %s13, 1
    %p66 = scmp.ne.s32.totalorder %s61, %s63
    %p67 = scmp.eq.s32.totalorder %s13, 0
    %p68 = por %p66, %p67
    %p69 = scmp.ne.s32.totalorder %s61, %s63
    %p70 = scmp.eq.s32.totalorder %s18, 1
    %p71 = por %p69, %p70
    %p72 = scmp.ne.s32.totalorder %s63, %s64
    %p73 = scmp.eq.s32.totalorder %s18, 0
    %p74 = por %p72, %p73
    %p75 = scmp.ne.s32.totalorder %s63, %s64
    %p76 = scmp.eq.s32.totalorder %s19, 1
    %p77 = por %p75, %p76
    %p79 = scmp.ne.s32.totalorder %s64, %s78
    %p80 = scmp.eq.s32.totalorder %s19, 0
    %p81 = por %p79, %p80
    %s83 = sadd.s32 %s82, 1
    %p86 = scmp.eq.s32.totalorder %s13, 1
    %p87 = scmp.ne.s32.totalorder %s82, %s84
    %p88 = scmp.eq.s32.totalorder %s13, 0
    %p89 = por %p87, %p88
    %p90 = scmp.ne.s32.totalorder %s82, %s84
    %p91 = scmp.eq.s32.totalorder %s18, 1
    %p92 = por %p90, %p91
    %p93 = scmp.ne.s32.totalorder %s84, %s85
    %p94 = scmp.eq.s32.totalorder %s18, 0
    %p95 = por %p93, %p94
    %p96 = scmp.ne.s32.totalorder %s84, %s85
    %p97 = scmp.eq.s32.totalorder %s19, 1
    %p98 = por %p96, %p97
    %p100 = scmp.ne.s32.totalorder %s85, %s99
    %p101 = scmp.eq.s32.totalorder %s19, 0
    %p102 = por %p100, %p101
    %s104 = sadd.s32 %s103, 1
    %p107 = scmp.eq.s32.totalorder %s13, 1
    %p108 = scmp.ne.s32.totalorder %s103, %s105
    %p109 = scmp.eq.s32.totalorder %s13, 0
    %p110 = por %p108, %p109
    %p111 = scmp.ne.s32.totalorder %s103, %s105
    %p112 = scmp.eq.s32.totalorder %s18, 1
    %p113 = por %p111, %p112
    %p114 = scmp.ne.s32.totalorder %s105, %s106
    %p115 = scmp.eq.s32.totalorder %s18, 0
    %p116 = por %p114, %p115
    %p117 = scmp.ne.s32.totalorder %s105, %s106
    %p118 = scmp.eq.s32.totalorder %s19, 1
    %p119 = por %p117, %p118
    %p121 = scmp.ne.s32.totalorder %s106, %s120
    %p122 = scmp.eq.s32.totalorder %s19, 0
    %p123 = por %p121, %p122
    %s125 = sadd.s32 %s124, 1
    %p128 = scmp.eq.s32.totalorder %s13, 1
    %p129 = scmp.ne.s32.totalorder %s124, %s126
    %p130 = scmp.eq.s32.totalorder %s13, 0
    %p131 = por %p129, %p130
    %p132 = scmp.ne.s32.totalorder %s124, %s126
    %p133 = scmp.eq.s32.totalorder %s18, 1
    %p134 = por %p132, %p133
    %p135 = scmp.ne.s32.totalorder %s126, %s127
    %p136 = scmp.eq.s32.totalorder %s18, 0
    %p137 = por %p135, %p136
    %p138 = scmp.ne.s32.totalorder %s126, %s127
    %p139 = scmp.eq.s32.totalorder %s19, 1
    %p140 = por %p138, %p139
    %p142 = scmp.ne.s32.totalorder %s127, %s141
    %p143 = scmp.eq.s32.totalorder %s19, 0
    %p144 = por %p142, %p143
    %s145 = ssub.s32 %s20, %s32
    %s146 = ssub.s32 %s21, %s28
    %s147 = sor.u32 %s145, %s146
    %p148 = scmp.eq.s32.totalorder %s147, 0
    %s150 = sadd.s32 %s149, 1
    %s151 = scalar_select %p148, %s149, %s150
    %p154 = pneg %p148
    %p155 = scmp.eq.s32.totalorder %s13, 1
    %p156 = por %p154, %p155
    %p157 = scmp.ne.s32.totalorder %s149, %s152
    %p158 = scmp.eq.s32.totalorder %s13, 0
    %p159 = por %p157, %p158
    %p160 = scmp.ne.s32.totalorder %s149, %s152
    %p161 = scmp.eq.s32.totalorder %s18, 1
    %p162 = por %p160, %p161
    %p163 = scmp.ne.s32.totalorder %s152, %s153
    %p164 = scmp.eq.s32.totalorder %s18, 0
    %p165 = por %p163, %p164
    %p166 = scmp.ne.s32.totalorder %s152, %s153
    %p167 = scmp.eq.s32.totalorder %s19, 1
    %p168 = por %p166, %p167
    %p170 = scmp.ne.s32.totalorder %s153, %s169
    %p171 = scmp.eq.s32.totalorder %s19, 0
    %p172 = por %p170, %p171
    %s173 = ssub.s32 %s20, %s32
    %s174 = ssub.s32 %s21, %s28
    %s175 = sor.u32 %s173, %s174
    %p176 = scmp.eq.s32.totalorder %s175, 0
    %s178 = sadd.s32 %s177, 1
    %s179 = scalar_select %p176, %s177, %s178
    %p182 = pneg %p176
    %p183 = scmp.eq.s32.totalorder %s13, 1
    %p184 = por %p182, %p183
    %p185 = scmp.ne.s32.totalorder %s177, %s180
    %p186 = scmp.eq.s32.totalorder %s13, 0
    %p187 = por %p185, %p186
    %p188 = scmp.ne.s32.totalorder %s177, %s180
    %p189 = scmp.eq.s32.totalorder %s18, 1
    %p190 = por %p188, %p189
    %p191 = scmp.ne.s32.totalorder %s180, %s181
    %p192 = scmp.eq.s32.totalorder %s18, 0
    %p193 = por %p191, %p192
    %p194 = scmp.ne.s32.totalorder %s180, %s181
    %p195 = scmp.eq.s32.totalorder %s19, 1
    %p196 = por %p194, %p195
    %p198 = scmp.ne.s32.totalorder %s181, %s197
    %p199 = scmp.eq.s32.totalorder %s19, 0
    %p200 = por %p198, %p199
    %p201 = scmp.le.s32.totalorder 1, %s13
    %p202 = scmp.lt.s32.totalorder %s13, 3
    %p203 = pnand %p201, %p202
    %p204 = pneg %p203
    // Predicated region
    $region9: #{mlp_forward.4} parent=5 // pred_check
      _
    $region10: #{mlp_forward.4} parent=5 // pred_check_branch
      %206 = sbr.rel (%p203) target = $region12
    $region11: #{mlp_forward.4} parent=5 // pred_region
      %s207 = ssub.s32 %s13, 1
      // Predicated region
      $region13: #{mlp_forward.4} parent=11 // pred_check
        %p208 = pneg %p74
      $region14: #{mlp_forward.4} parent=11 // pred_check_branch
        %210 = sbr.rel (%p208) target = $region16
      $region15: #{mlp_forward.4} parent=11 // pred_region
        _
      $region16: #{mlp_forward.4} parent=11 // pred_fallthru
        _
      // Predicated region
      $region17: #{mlp_forward.4} parent=11 // pred_check
        %p211 = pneg %p95
      $region18: #{mlp_forward.4} parent=11 // pred_check_branch
        %213 = sbr.rel (%p211) target = $region20
      $region19: #{mlp_forward.4} parent=11 // pred_region
        _
      $region20: #{mlp_forward.4} parent=11 // pred_fallthru
        _
      // Predicated region
      $region21: #{mlp_forward.4} parent=11 // pred_check
        %p214 = pneg %p116
      $region22: #{mlp_forward.4} parent=11 // pred_check_branch
        %216 = sbr.rel (%p214) target = $region24
      $region23: #{mlp_forward.4} parent=11 // pred_region
        _
      $region24: #{mlp_forward.4} parent=11 // pred_fallthru
        _
      // Predicated region
      $region25: #{mlp_forward.4} parent=11 // pred_check
        %p217 = pneg %p137
      $region26: #{mlp_forward.4} parent=11 // pred_check_branch
        %219 = sbr.rel (%p217) target = $region28
      $region27: #{mlp_forward.4} parent=11 // pred_region
        _
      $region28: #{mlp_forward.4} parent=11 // pred_fallthru
        _
    $region12: #{mlp_forward.4} parent=5 // pred_fallthru
      _
    %p220 = scmp.lt.s32.totalorder %s13, 2
    // Predicated region
    $region29: #{mlp_forward.4} parent=5 // pred_check
      %p221 = pneg %p220
    $region30: #{mlp_forward.4} parent=5 // pred_check_branch
      %223 = sbr.rel (%p221) target = $region32
    $region31: #{mlp_forward.4} parent=5 // pred_region
      // Predicated region
      $region33: #{mlp_forward.4} parent=31 // pred_check
        %p224 = pneg %p47
      $region34: #{mlp_forward.4} parent=31 // pred_check_branch
        %226 = sbr.rel (%p224) target = $region36
      $region35: #{mlp_forward.4} parent=31 // pred_region
        %s227 = smul.u32 2, %s21
        %p228 = scmp.lt.s32.totalorder %s20, 1
        %s229 = scalar_select %p228, %s20, 1
        %p230 = scmp.lt.s32.totalorder %s227, 1
        %s231 = scalar_select %p230, %s227, 1
        %s232 = smul.addr %s229, 6
        %s233 = sadd.s32 %s231, %s232
        %s234 = smul.addr %s233, 8
        %s235 = scalar_lea.vmem %s0, %s234
        %s236 = smul.u32 2, %s21
      $region36: #{mlp_forward.4} parent=31 // pred_fallthru
        _
    $region32: #{mlp_forward.4} parent=5 // pred_fallthru
      _
    %p237 = scmp.le.s32.totalorder 1, %s13
    %p238 = scmp.lt.s32.totalorder %s13, 3
    %p239 = pnand %p237, %p238
    %p240 = pneg %p239
    // Predicated region
    $region37: #{mlp_forward.4} parent=5 // pred_check
      _
    $region38: #{mlp_forward.4} parent=5 // pred_check_branch
      %242 = sbr.rel (%p239) target = $region40
    $region39: #{mlp_forward.4} parent=5 // pred_region
      %s243 = ssub.s32 %s13, 1
      %s244 = smul.u32 2, %s23
      %p245 = scmp.lt.s32.totalorder %s22, 1
      %s246 = scalar_select %p245, %s22, 1
      %p247 = scmp.lt.s32.totalorder %s244, 1
      %s248 = scalar_select %p247, %s244, 1
      %s249 = smul.addr %s246, 6
      %s250 = sadd.s32 %s248, %s249
      %s251 = smul.addr %s250, 8
      %s252 = scalar_lea.vmem %s0, %s251
      %p253 = pneg %p53
      %p254 = pneg %p50
      %p255 = pneg %p74
      %p256 = pneg %p71
      %p257 = pneg %p95
      %p258 = pneg %p92
      %p259 = pneg %p116
      %p260 = pneg %p113
      %p261 = pneg %p137
      %p262 = pneg %p134
      %p263 = pneg %p165
      %p264 = pneg %p162
      %p265 = scmp.lt.s32.totalorder %s22, 1
      %s266 = scalar_select %p265, %s22, 1
      %p267 = scmp.lt.s32.totalorder %s23, 0
      %s268 = scalar_select %p267, %s23, 0
      %s269 = smul.addr %s268, 16
      %s270 = smul.addr %s266, 16
      %s271 = sadd.s32 %s269, %s270
      %s272 = smul.addr %s271, 8
      %s273 = scalar_lea.vmem %s5, %s272
      %p274 = pneg %p193
      %p275 = pneg %p190
      %p276 = scmp.lt.s32.totalorder %s22, 1
      %s277 = scalar_select %p276, %s22, 1
      %p278 = scmp.lt.s32.totalorder %s23, 0
      %s279 = scalar_select %p278, %s23, 0
      %s280 = smul.addr %s279, 16
      %s281 = smul.addr %s277, 16
      %s282 = sadd.s32 %s280, %s281
      %s283 = smul.addr %s282, 8
      %s284 = scalar_lea.vmem %s6, %s283
      %s285 = smul.u32 2, %s23
      %p286 = scmp.lt.s32.totalorder %s22, 1
      %s287 = scalar_select %p286, %s22, 1
      %p288 = scmp.lt.s32.totalorder %s285, 1
      %s289 = scalar_select %p288, %s285, 1
      %s290 = smul.addr %s287, 6
      %s291 = sadd.s32 %s289, %s290
      %s292 = smul.addr %s291, 8
      %s293 = scalar_lea.vmem %s0, %s292
      %s294 = smul.u32 2, %s23
      %p295 = scmp.lt.s32.totalorder %s22, 1
      %s296 = scalar_select %p295, %s22, 1
      %p297 = scmp.lt.s32.totalorder %s23, 0
      %s298 = scalar_select %p297, %s23, 0
      %s299 = smul.addr %s298, 16
      %s300 = smul.addr %s296, 16
      %s301 = sadd.s32 %s299, %s300
      %s302 = smul.addr %s301, 8
      %s303 = scalar_lea.vmem %s5, %s302
      %p304 = scmp.lt.s32.totalorder %s22, 1
      %s305 = scalar_select %p304, %s22, 1
      %p306 = scmp.lt.s32.totalorder %s23, 0
      %s307 = scalar_select %p306, %s23, 0
      %s308 = smul.addr %s307, 16
      %s309 = smul.addr %s305, 16
      %s310 = sadd.s32 %s308, %s309
      %s311 = smul.addr %s310, 8
      %s312 = scalar_lea.vmem %s6, %s311
      %v313 = vld [vmem:[%s293] sm:$0xff]
      %v314 = vld [vmem:[%s293 + $0x8] sm:$0xff]
      %v315 = vld [vmem:[%s293 + $0x10] sm:$0xff]
      %v316 = vld [vmem:[%s293 + $0x18] sm:$0xff]
      %v317 = vld [vmem:[%s293 + $0x20] sm:$0xff]
      %v318 = vld [vmem:[%s293 + $0x28] sm:$0xff]
      %v319 = vld [vmem:[%s1] sm:$0xff]
      %v320 = vld [vmem:[%s1 + $0x8] sm:$0xff]
      %v321 = vld [vmem:[%s1 + $0x10] sm:$0xff]
      %v322 = vld [vmem:[%s1 + $0x18] sm:$0xff]
      %v323 = vld [vmem:[%s1 + $0x20] sm:$0xff]
      %v324 = vld [vmem:[%s1 + $0x28] sm:$0xff]
      %v325 = vld [vmem:[%s1 + $0x30] sm:$0xff]
      %v326 = vld [vmem:[%s1 + $0x38] sm:$0xff]
      %v327 = vld [vmem:[%s1 + $0x40] sm:$0xff]
      %v328 = vld [vmem:[%s1 + $0x48] sm:$0xff]
      %v329 = vld [vmem:[%s1 + $0x50] sm:$0xff]
      %v330 = vld [vmem:[%s1 + $0x58] sm:$0xff]
      %v331 = vld [vmem:[%s1 + $0x60] sm:$0xff]
      %v332 = vld [vmem:[%s1 + $0x68] sm:$0xff]
      %v333 = vld [vmem:[%s1 + $0x70] sm:$0xff]
      %v334 = vld [vmem:[%s1 + $0x78] sm:$0xff]
      %v335 = vld [vmem:[%s1 + $0x80] sm:$0xff]
      %v336 = vld [vmem:[%s1 + $0x88] sm:$0xff]
      %v337 = vld [vmem:[%s1 + $0x90] sm:$0xff]
      %v338 = vld [vmem:[%s1 + $0x98] sm:$0xff]
      %v339 = vld [vmem:[%s1 + $0xa0] sm:$0xff]
      %v340 = vld [vmem:[%s1 + $0xa8] sm:$0xff]
      %v341 = vld [vmem:[%s1 + $0xb0] sm:$0xff]
      %v342 = vld [vmem:[%s1 + $0xb8] sm:$0xff]
      %v343 = vld [vmem:[%s1 + $0xc0] sm:$0xff]
      %v344 = vld [vmem:[%s1 + $0xc8] sm:$0xff]
      %v345 = vld [vmem:[%s1 + $0xd0] sm:$0xff]
      %v346 = vld [vmem:[%s1 + $0xd8] sm:$0xff]
      %v347 = vld [vmem:[%s1 + $0xe0] sm:$0xff]
      %v348 = vld [vmem:[%s1 + $0xe8] sm:$0xff]
      %v349 = vld [vmem:[%s1 + $0xf0] sm:$0xff]
      %v350 = vld [vmem:[%s1 + $0xf8] sm:$0xff]
      %v351 = vld [vmem:[%s2] sm:$0xff]
      %v352 = vld [vmem:[%s2 + $0x8] sm:$0xff]
      %v353 = vld [vmem:[%s2 + $0x10] sm:$0xff]
      %v354 = vld [vmem:[%s2 + $0x18] sm:$0xff]
      %v355 = vld [vmem:[%s2 + $0x20] sm:$0xff]
      %v356 = vld [vmem:[%s2 + $0x28] sm:$0xff]
      %v357 = vld [vmem:[%s2 + $0x30] sm:$0xff]
      %v358 = vld [vmem:[%s2 + $0x38] sm:$0xff]
      %v359 = vld [vmem:[%s2 + $0x40] sm:$0xff]
      %v360 = vld [vmem:[%s2 + $0x48] sm:$0xff]
      %v361 = vld [vmem:[%s2 + $0x50] sm:$0xff]
      %v362 = vld [vmem:[%s2 + $0x58] sm:$0xff]
      %v363 = vld [vmem:[%s2 + $0x60] sm:$0xff]
      %v364 = vld [vmem:[%s2 + $0x68] sm:$0xff]
      %v365 = vld [vmem:[%s2 + $0x70] sm:$0xff]
      %v366 = vld [vmem:[%s2 + $0x78] sm:$0xff]
      %v367 = vld [vmem:[%s2 + $0x80] sm:$0xff]
      %v368 = vld [vmem:[%s2 + $0x88] sm:$0xff]
      %v369 = vld [vmem:[%s2 + $0x90] sm:$0xff]
      %v370 = vld [vmem:[%s2 + $0x98] sm:$0xff]
      %v371 = vld [vmem:[%s2 + $0xa0] sm:$0xff]
      %v372 = vld [vmem:[%s2 + $0xa8] sm:$0xff]
      %v373 = vld [vmem:[%s2 + $0xb0] sm:$0xff]
      %v374 = vld [vmem:[%s2 + $0xb8] sm:$0xff]
      %v375 = vld [vmem:[%s2 + $0xc0] sm:$0xff]
      %v376 = vld [vmem:[%s2 + $0xc8] sm:$0xff]
      %v377 = vld [vmem:[%s2 + $0xd0] sm:$0xff]
      %v378 = vld [vmem:[%s2 + $0xd8] sm:$0xff]
      %v379 = vld [vmem:[%s2 + $0xe0] sm:$0xff]
      %v380 = vld [vmem:[%s2 + $0xe8] sm:$0xff]
      %v381 = vld [vmem:[%s2 + $0xf0] sm:$0xff]
      %v382 = vld [vmem:[%s2 + $0xf8] sm:$0xff]
      %384 = vset.pattern.permute.xlu0 0
      %385 = vperm.xlu0 %384, %v351
      %v386 = vpop.permute.xlu0 %385
      %389 = vset.pattern.permute.xlu0 0
      %390 = vperm.xlu0 %389, %v352
      %v391 = vpop.permute.xlu0 %390
      %394 = vset.pattern.permute.xlu0 0
      %395 = vperm.xlu0 %394, %v353
      %v396 = vpop.permute.xlu0 %395
      %399 = vset.pattern.permute.xlu0 0
      %400 = vperm.xlu0 %399, %v354
      %v401 = vpop.permute.xlu0 %400
      %404 = vset.pattern.permute.xlu0 0
      %405 = vperm.xlu0 %404, %v355
      %v406 = vpop.permute.xlu0 %405
      %409 = vset.pattern.permute.xlu0 0
      %410 = vperm.xlu0 %409, %v356
      %v411 = vpop.permute.xlu0 %410
      %414 = vset.pattern.permute.xlu0 0
      %415 = vperm.xlu0 %414, %v357
      %v416 = vpop.permute.xlu0 %415
      %419 = vset.pattern.permute.xlu0 0
      %420 = vperm.xlu0 %419, %v358
      %v421 = vpop.permute.xlu0 %420
      %424 = vset.pattern.permute.xlu0 0
      %425 = vperm.xlu0 %424, %v359
      %v426 = vpop.permute.xlu0 %425
      %429 = vset.pattern.permute.xlu0 0
      %430 = vperm.xlu0 %429, %v360
      %v431 = vpop.permute.xlu0 %430
      %434 = vset.pattern.permute.xlu0 0
      %435 = vperm.xlu0 %434, %v361
      %v436 = vpop.permute.xlu0 %435
      %439 = vset.pattern.permute.xlu0 0
      %440 = vperm.xlu0 %439, %v362
      %v441 = vpop.permute.xlu0 %440
      %444 = vset.pattern.permute.xlu0 0
      %445 = vperm.xlu0 %444, %v363
      %v446 = vpop.permute.xlu0 %445
      %449 = vset.pattern.permute.xlu0 0
      %450 = vperm.xlu0 %449, %v364
      %v451 = vpop.permute.xlu0 %450
      %454 = vset.pattern.permute.xlu0 0
      %455 = vperm.xlu0 %454, %v365
      %v456 = vpop.permute.xlu0 %455
      %459 = vset.pattern.permute.xlu0 0
      %460 = vperm.xlu0 %459, %v366
      %v461 = vpop.permute.xlu0 %460
      %464 = vset.pattern.permute.xlu0 0
      %465 = vperm.xlu0 %464, %v367
      %v466 = vpop.permute.xlu0 %465
      %469 = vset.pattern.permute.xlu0 0
      %470 = vperm.xlu0 %469, %v368
      %v471 = vpop.permute.xlu0 %470
      %474 = vset.pattern.permute.xlu0 0
      %475 = vperm.xlu0 %474, %v369
      %v476 = vpop.permute.xlu0 %475
      %479 = vset.pattern.permute.xlu0 0
      %480 = vperm.xlu0 %479, %v370
      %v481 = vpop.permute.xlu0 %480
      %484 = vset.pattern.permute.xlu0 0
      %485 = vperm.xlu0 %484, %v371
      %v486 = vpop.permute.xlu0 %485
      %489 = vset.pattern.permute.xlu0 0
      %490 = vperm.xlu0 %489, %v372
      %v491 = vpop.permute.xlu0 %490
      %494 = vset.pattern.permute.xlu0 0
      %495 = vperm.xlu0 %494, %v373
      %v496 = vpop.permute.xlu0 %495
      %499 = vset.pattern.permute.xlu0 0
      %500 = vperm.xlu0 %499, %v374
      %v501 = vpop.permute.xlu0 %500
      %504 = vset.pattern.permute.xlu0 0
      %505 = vperm.xlu0 %504, %v375
      %v506 = vpop.permute.xlu0 %505
      %509 = vset.pattern.permute.xlu0 0
      %510 = vperm.xlu0 %509, %v376
      %v511 = vpop.permute.xlu0 %510
      %514 = vset.pattern.permute.xlu0 0
      %515 = vperm.xlu0 %514, %v377
      %v516 = vpop.permute.xlu0 %515
      %519 = vset.pattern.permute.xlu0 0
      %520 = vperm.xlu0 %519, %v378
      %v521 = vpop.permute.xlu0 %520
      %524 = vset.pattern.permute.xlu0 0
      %525 = vperm.xlu0 %524, %v379
      %v526 = vpop.permute.xlu0 %525
      %529 = vset.pattern.permute.xlu0 0
      %530 = vperm.xlu0 %529, %v380
      %v531 = vpop.permute.xlu0 %530
      %534 = vset.pattern.permute.xlu0 0
      %535 = vperm.xlu0 %534, %v381
      %v536 = vpop.permute.xlu0 %535
      %539 = vset.pattern.permute.xlu0 0
      %540 = vperm.xlu0 %539, %v382
      %v541 = vpop.permute.xlu0 %540
      %vm543 = vcmask 195584
      %v545 = vsel %vm543, %v319, 0
      %v548 = vsel %vm543, %v320, 0
      %v551 = vsel %vm543, %v321, 0
      %v554 = vsel %vm543, %v322, 0
      %v557 = vsel %vm543, %v323, 0
      %v560 = vsel %vm543, %v324, 0
      %v563 = vsel %vm543, %v325, 0
      %v566 = vsel %vm543, %v326, 0
      %v569 = vsel %vm543, %v327, 0
      %v572 = vsel %vm543, %v328, 0
      %v575 = vsel %vm543, %v329, 0
      %v578 = vsel %vm543, %v330, 0
      %v581 = vsel %vm543, %v331, 0
      %v584 = vsel %vm543, %v332, 0
      %v587 = vsel %vm543, %v333, 0
      %v590 = vsel %vm543, %v334, 0
      %v593 = vsel %vm543, %v335, 0
      %v596 = vsel %vm543, %v336, 0
      %v599 = vsel %vm543, %v337, 0
      %v602 = vsel %vm543, %v338, 0
      %v605 = vsel %vm543, %v339, 0
      %v608 = vsel %vm543, %v340, 0
      %v611 = vsel %vm543, %v341, 0
      %v614 = vsel %vm543, %v342, 0
      %v617 = vsel %vm543, %v343, 0
      %v620 = vsel %vm543, %v344, 0
      %v623 = vsel %vm543, %v345, 0
      %v626 = vsel %vm543, %v346, 0
      %v629 = vsel %vm543, %v347, 0
      %v632 = vsel %vm543, %v348, 0
      %v635 = vsel %vm543, %v349, 0
      %v638 = vsel %vm543, %v350, 0
      %640 = vmatprep.subr.mxu0 %v314
      %641 = vmatpush1.msra.mxu0 %v313
      %642 = vmatprep.subr.mxu0 %v316
      %643 = vmatpush1.msra.mxu0 %v315
      %644 = vmatprep.subr.mxu0 %v318
      %645 = vmatpush1.msra.mxu0 %v317
      %646 = vmatprep.subr.mxu0 0.0
      %647 = vmatpush1.msra.mxu0 0.0
      %648 = vmatprep.subr.mxu0 0.0
      %649 = vmatpush1.msra.mxu0 0.0
      %650 = vmatprep.subr.mxu0 0.0
      %651 = vmatpush1.msra.mxu0 0.0
      %652 = vmatprep.subr.mxu0 0.0
      %653 = vmatpush1.msra.mxu0 0.0
      %654 = vmatprep.subr.mxu0 0.0
      %655 = vmatpush1.msra.mxu0 0.0
      %656 = vmatprep.subr.mxu0 0.0
      %657 = vmatpush1.msra.mxu0 0.0
      %658 = vmatprep.subr.mxu0 0.0
      %659 = vmatpush1.msra.mxu0 0.0
      %660 = vmatprep.subr.mxu0 0.0
      %661 = vmatpush1.msra.mxu0 0.0
      %662 = vmatprep.subr.mxu0 0.0
      %663 = vmatpush1.msra.mxu0 0.0
      %664 = vmatprep.subr.mxu0 0.0
      %665 = vmatpush1.msra.mxu0 0.0
      %666 = vmatprep.subr.mxu0 0.0
      %667 = vmatpush1.msra.mxu0 0.0
      %668 = vmatprep.subr.mxu0 0.0
      %669 = vmatpush1.msra.mxu0 0.0
      %670 = vmatprep.subr.mxu0 0.0
      %671 = vmatpush1.msra.mxu0 0.0
      %672 = vmatprep.subr.mxu0 0.0
      %673 = vmatpush1.msra.mxu0 0.0
      %674 = vmatprep.subr.mxu0 0.0
      %675 = vmatpush1.msra.mxu0 0.0
      %676 = vmatprep.subr.mxu0 0.0
      %677 = vmatpush1.msra.mxu0 0.0
      %678 = vmatprep.subr.mxu0 0.0
      %679 = vmatpush1.msra.mxu0 0.0
      %680 = vmatprep.subr.mxu0 0.0
      %681 = vmatpush1.msra.mxu0 0.0
      %682 = vmatprep.subr.mxu0 0.0
      %683 = vmatpush1.msra.mxu0 0.0
      %684 = vmatprep.subr.mxu0 0.0
      %685 = vmatpush1.msra.mxu0 0.0
      %686 = vmatprep.subr.mxu0 0.0
      %687 = vmatpush1.msra.mxu0 0.0
      %688 = vmatprep.subr.mxu0 0.0
      %689 = vmatpush1.msra.mxu0 0.0
      %690 = vmatprep.subr.mxu0 0.0
      %691 = vmatpush1.msra.mxu0 0.0
      %692 = vmatprep.subr.mxu0 0.0
      %693 = vmatpush1.msra.mxu0 0.0
      %694 = vmatprep.subr.mxu0 0.0
      %695 = vmatpush1.msra.mxu0 0.0
      %696 = vmatprep.subr.mxu0 0.0
      %697 = vmatpush1.msra.mxu0 0.0
      %698 = vmatprep.subr.mxu0 0.0
      %699 = vmatpush1.msra.mxu0 0.0
      %700 = vmatprep.subr.mxu0 0.0
      %701 = vmatpush1.msra.mxu0 0.0
      %702 = vmatprep.subr.mxu0 0.0
      %703 = vmatpush1.msra.mxu0 0.0
      %704 = vmatprep.mubr.f32.mxu0 0.0
      %705 = vmatmul.mubr.f32.gmra.mrb[0].mxu0 %v545
      %v706 = vpop.f32.mrb[0].mxu0
      %v707 = vadd.f32 %v386, %v706
      %v708 = vpop.f32.mrb[0].mxu0
      %v709 = vadd.f32 %v386, %v708
      %710 = vmatprep.mubr.f32.mxu0 0.0
      %711 = vmatmul.mubr.f32.gmra.mrb[0].mxu0 %v548
      %v712 = vpop.f32.mrb[0].mxu0
      %v713 = vadd.f32 %v391, %v712
      %v714 = vpop.f32.mrb[0].mxu0
      %v715 = vadd.f32 %v391, %v714
      %716 = vmatprep.mubr.f32.mxu0 0.0
      %717 = vmatmul.mubr.f32.gmra.mrb[0].mxu0 %v551
      %v718 = vpop.f32.mrb[0].mxu0
      %v719 = vadd.f32 %v396, %v718
      %v720 = vpop.f32.mrb[0].mxu0
      %v721 = vadd.f32 %v396, %v720
      %722 = vmatprep.mubr.f32.mxu0 0.0
      %723 = vmatmul.mubr.f32.gmra.mrb[0].mxu0 %v554
      %v724 = vpop.f32.mrb[0].mxu0
      %v725 = vadd.f32 %v401, %v724
      %v726 = vpop.f32.mrb[0].mxu0
      %v727 = vadd.f32 %v401, %v726
      %728 = vmatprep.mubr.f32.mxu0 0.0
      %729 = vmatmul.mubr.f32.gmra.mrb[0].mxu0 %v557
      %v730 = vpop.f32.mrb[0].mxu0
      %v731 = vadd.f32 %v406, %v730
      %v732 = vpop.f32.mrb[0].mxu0
      %v733 = vadd.f32 %v406, %v732
      %734 = vmatprep.mubr.f32.mxu0 0.0
      %735 = vmatmul.mubr.f32.gmra.mrb[0].mxu0 %v560
      %v736 = vpop.f32.mrb[0].mxu0
      %v737 = vadd.f32 %v411, %v736
      %v738 = vpop.f32.mrb[0].mxu0
      %v739 = vadd.f32 %v411, %v738
      %740 = vmatprep.mubr.f32.mxu0 0.0
      %741 = vmatmul.mubr.f32.gmra.mrb[0].mxu0 %v563
      %v742 = vpop.f32.mrb[0].mxu0
      %v743 = vadd.f32 %v416, %v742
      %v744 = vpop.f32.mrb[0].mxu0
      %v745 = vadd.f32 %v416, %v744
      %746 = vmatprep.mubr.f32.mxu0 0.0
      %747 = vmatmul.mubr.f32.gmra.mrb[0].mxu0 %v566
      %v748 = vpop.f32.mrb[0].mxu0
      %v749 = vadd.f32 %v421, %v748
      %v750 = vpop.f32.mrb[0].mxu0
      %v751 = vadd.f32 %v421, %v750
      %752 = vmatprep.mubr.f32.mxu0 0.0
      %753 = vmatmul.mubr.f32.gmra.mrb[0].mxu0 %v569
      %v754 = vpop.f32.mrb[0].mxu0
      %v755 = vadd.f32 %v426, %v754
      %v756 = vpop.f32.mrb[0].mxu0
      %v757 = vadd.f32 %v426, %v756
      %758 = vmatprep.mubr.f32.mxu0 0.0
      %759 = vmatmul.mubr.f32.gmra.mrb[0].mxu0 %v572
      %v760 = vpop.f32.mrb[0].mxu0
      %v761 = vadd.f32 %v431, %v760
      %v762 = vpop.f32.mrb[0].mxu0
      %v763 = vadd.f32 %v431, %v762
      %764 = vmatprep.mubr.f32.mxu0 0.0
      %765 = vmatmul.mubr.f32.gmra.mrb[0].mxu0 %v575
      %v766 = vpop.f32.mrb[0].mxu0
      %v767 = vadd.f32 %v436, %v766
      %v768 = vpop.f32.mrb[0].mxu0
      %v769 = vadd.f32 %v436, %v768
      %770 = vmatprep.mubr.f32.mxu0 0.0
      %771 = vmatmul.mubr.f32.gmra.mrb[0].mxu0 %v578
      %v772 = vpop.f32.mrb[0].mxu0
      %v773 = vadd.f32 %v441, %v772
      %v774 = vpop.f32.mrb[0].mxu0
      %v775 = vadd.f32 %v441, %v774
      %776 = vmatprep.mubr.f32.mxu0 0.0
      %777 = vmatmul.mubr.f32.gmra.mrb[0].mxu0 %v581
      %v778 = vpop.f32.mrb[0].mxu0
      %v779 = vadd.f32 %v446, %v778
      %v780 = vpop.f32.mrb[0].mxu0
      %v781 = vadd.f32 %v446, %v780
      %782 = vmatprep.mubr.f32.mxu0 0.0
      %783 = vmatmul.mubr.f32.gmra.mrb[0].mxu0 %v584
      %v784 = vpop.f32.mrb[0].mxu0
      %v785 = vadd.f32 %v451, %v784
      %v786 = vpop.f32.mrb[0].mxu0
      %v787 = vadd.f32 %v451, %v786
      %788 = vmatprep.mubr.f32.mxu0 0.0
      %789 = vmatmul.mubr.f32.gmra.mrb[0].mxu0 %v587
      %v790 = vpop.f32.mrb[0].mxu0
      %v791 = vadd.f32 %v456, %v790
      %v792 = vpop.f32.mrb[0].mxu0
      %v793 = vadd.f32 %v456, %v792
      %794 = vmatprep.mubr.f32.mxu0 0.0
      %795 = vmatmul.mubr.f32.gmra.mrb[0].mxu0 %v590
      %v796 = vpop.f32.mrb[0].mxu0
      %v797 = vadd.f32 %v461, %v796
      %v798 = vpop.f32.mrb[0].mxu0
      %v799 = vadd.f32 %v461, %v798
      %800 = vmatprep.mubr.f32.mxu0 0.0
      %801 = vmatmul.mubr.f32.gmra.mrb[0].mxu0 %v593
      %v802 = vpop.f32.mrb[0].mxu0
      %v803 = vadd.f32 %v466, %v802
      %v804 = vpop.f32.mrb[0].mxu0
      %v805 = vadd.f32 %v466, %v804
      %806 = vmatprep.mubr.f32.mxu0 0.0
      %807 = vmatmul.mubr.f32.gmra.mrb[0].mxu0 %v596
      %v808 = vpop.f32.mrb[0].mxu0
      %v809 = vadd.f32 %v471, %v808
      %v810 = vpop.f32.mrb[0].mxu0
      %v811 = vadd.f32 %v471, %v810
      %812 = vmatprep.mubr.f32.mxu0 0.0
      %813 = vmatmul.mubr.f32.gmra.mrb[0].mxu0 %v599
      %v814 = vpop.f32.mrb[0].mxu0
      %v815 = vadd.f32 %v476, %v814
      %v816 = vpop.f32.mrb[0].mxu0
      %v817 = vadd.f32 %v476, %v816
      %818 = vmatprep.mubr.f32.mxu0 0.0
      %819 = vmatmul.mubr.f32.gmra.mrb[0].mxu0 %v602
      %v820 = vpop.f32.mrb[0].mxu0
      %v821 = vadd.f32 %v481, %v820
      %v822 = vpop.f32.mrb[0].mxu0
      %v823 = vadd.f32 %v481, %v822
      %824 = vmatprep.mubr.f32.mxu0 0.0
      %825 = vmatmul.mubr.f32.gmra.mrb[0].mxu0 %v605
      %v826 = vpop.f32.mrb[0].mxu0
      %v827 = vadd.f32 %v486, %v826
      %v828 = vpop.f32.mrb[0].mxu0
      %v829 = vadd.f32 %v486, %v828
      %830 = vmatprep.mubr.f32.mxu0 0.0
      %831 = vmatmul.mubr.f32.gmra.mrb[0].mxu0 %v608
      %v832 = vpop.f32.mrb[0].mxu0
      %v833 = vadd.f32 %v491, %v832
      %v834 = vpop.f32.mrb[0].mxu0
      %v835 = vadd.f32 %v491, %v834
      %836 = vmatprep.mubr.f32.mxu0 0.0
      %837 = vmatmul.mubr.f32.gmra.mrb[0].mxu0 %v611
      %v838 = vpop.f32.mrb[0].mxu0
      %v839 = vadd.f32 %v496, %v838
      %v840 = vpop.f32.mrb[0].mxu0
      %v841 = vadd.f32 %v496, %v840
      %842 = vmatprep.mubr.f32.mxu0 0.0
      %843 = vmatmul.mubr.f32.gmra.mrb[0].mxu0 %v614
      %v844 = vpop.f32.mrb[0].mxu0
      %v845 = vadd.f32 %v501, %v844
      %v846 = vpop.f32.mrb[0].mxu0
      %v847 = vadd.f32 %v501, %v846
      %848 = vmatprep.mubr.f32.mxu0 0.0
      %849 = vmatmul.mubr.f32.gmra.mrb[0].mxu0 %v617
      %v850 = vpop.f32.mrb[0].mxu0
      %v851 = vadd.f32 %v506, %v850
      %v852 = vpop.f32.mrb[0].mxu0
      %v853 = vadd.f32 %v506, %v852
      %854 = vmatprep.mubr.f32.mxu0 0.0
      %855 = vmatmul.mubr.f32.gmra.mrb[0].mxu0 %v620
      %v856 = vpop.f32.mrb[0].mxu0
      %v857 = vadd.f32 %v511, %v856
      %v858 = vpop.f32.mrb[0].mxu0
      %v859 = vadd.f32 %v511, %v858
      %860 = vmatprep.mubr.f32.mxu0 0.0
      %861 = vmatmul.mubr.f32.gmra.mrb[0].mxu0 %v623
      %v862 = vpop.f32.mrb[0].mxu0
      %v863 = vadd.f32 %v516, %v862
      %v864 = vpop.f32.mrb[0].mxu0
      %v865 = vadd.f32 %v516, %v864
      %866 = vmatprep.mubr.f32.mxu0 0.0
      %867 = vmatmul.mubr.f32.gmra.mrb[0].mxu0 %v626
      %v868 = vpop.f32.mrb[0].mxu0
      %v869 = vadd.f32 %v521, %v868
      %v870 = vpop.f32.mrb[0].mxu0
      %v871 = vadd.f32 %v521, %v870
      %872 = vmatprep.mubr.f32.mxu0 0.0
      %873 = vmatmul.mubr.f32.gmra.mrb[0].mxu0 %v629
      %v874 = vpop.f32.mrb[0].mxu0
      %v875 = vadd.f32 %v526, %v874
      %v876 = vpop.f32.mrb[0].mxu0
      %v877 = vadd.f32 %v526, %v876
      %878 = vmatprep.mubr.f32.mxu0 0.0
      %879 = vmatmul.mubr.f32.gmra.mrb[0].mxu0 %v632
      %v880 = vpop.f32.mrb[0].mxu0
      %v881 = vadd.f32 %v531, %v880
      %v882 = vpop.f32.mrb[0].mxu0
      %v883 = vadd.f32 %v531, %v882
      %884 = vmatprep.mubr.f32.mxu0 0.0
      %885 = vmatmul.mubr.f32.gmra.mrb[0].mxu0 %v635
      %v886 = vpop.f32.mrb[0].mxu0
      %v887 = vadd.f32 %v536, %v886
      %v888 = vpop.f32.mrb[0].mxu0
      %v889 = vadd.f32 %v536, %v888
      %890 = vmatprep.mubr.f32.mxu0 0.0
      %891 = vmatmul.mubr.f32.gmra.mrb[0].mxu0 %v638
      %v892 = vpop.f32.mrb[0].mxu0
      %v893 = vadd.f32 %v541, %v892
      %v894 = vpop.f32.mrb[0].mxu0
      %v895 = vadd.f32 %v541, %v894
      %896 = vdwg.mxu0
      %v897 = vmax.f32 %v707, 0.0
      %v898 = vmax.f32 %v709, 0.0
      %v899 = vmax.f32 %v713, 0.0
      %v900 = vmax.f32 %v715, 0.0
      %v901 = vmax.f32 %v719, 0.0
      %v902 = vmax.f32 %v721, 0.0
      %v903 = vmax.f32 %v725, 0.0
      %v904 = vmax.f32 %v727, 0.0
      %v905 = vmax.f32 %v731, 0.0
      %v906 = vmax.f32 %v733, 0.0
      %v907 = vmax.f32 %v737, 0.0
      %v908 = vmax.f32 %v739, 0.0
      %v909 = vmax.f32 %v743, 0.0
      %v910 = vmax.f32 %v745, 0.0
      %v911 = vmax.f32 %v749, 0.0
      %v912 = vmax.f32 %v751, 0.0
      %v913 = vmax.f32 %v755, 0.0
      %v914 = vmax.f32 %v757, 0.0
      %v915 = vmax.f32 %v761, 0.0
      %v916 = vmax.f32 %v763, 0.0
      %v917 = vmax.f32 %v767, 0.0
      %v918 = vmax.f32 %v769, 0.0
      %v919 = vmax.f32 %v773, 0.0
      %v920 = vmax.f32 %v775, 0.0
      %v921 = vmax.f32 %v779, 0.0
      %v922 = vmax.f32 %v781, 0.0
      %v923 = vmax.f32 %v785, 0.0
      %v924 = vmax.f32 %v787, 0.0
      %v925 = vmax.f32 %v791, 0.0
      %v926 = vmax.f32 %v793, 0.0
      %v927 = vmax.f32 %v797, 0.0
      %v928 = vmax.f32 %v799, 0.0
      %v929 = vmax.f32 %v803, 0.0
      %v930 = vmax.f32 %v805, 0.0
      %v931 = vmax.f32 %v809, 0.0
      %v932 = vmax.f32 %v811, 0.0
      %v933 = vmax.f32 %v815, 0.0
      %v934 = vmax.f32 %v817, 0.0
      %v935 = vmax.f32 %v821, 0.0
      %v936 = vmax.f32 %v823, 0.0
      %v937 = vmax.f32 %v827, 0.0
      %v938 = vmax.f32 %v829, 0.0
      %v939 = vmax.f32 %v833, 0.0
      %v940 = vmax.f32 %v835, 0.0
      %v941 = vmax.f32 %v839, 0.0
      %v942 = vmax.f32 %v841, 0.0
      %v943 = vmax.f32 %v845, 0.0
      %v944 = vmax.f32 %v847, 0.0
      %v945 = vmax.f32 %v851, 0.0
      %v946 = vmax.f32 %v853, 0.0
      %v947 = vmax.f32 %v857, 0.0
      %v948 = vmax.f32 %v859, 0.0
      %v949 = vmax.f32 %v863, 0.0
      %v950 = vmax.f32 %v865, 0.0
      %v951 = vmax.f32 %v869, 0.0
      %v952 = vmax.f32 %v871, 0.0
      %v953 = vmax.f32 %v875, 0.0
      %v954 = vmax.f32 %v877, 0.0
      %v955 = vmax.f32 %v881, 0.0
      %v956 = vmax.f32 %v883, 0.0
      %v957 = vmax.f32 %v887, 0.0
      %v958 = vmax.f32 %v889, 0.0
      %v959 = vmax.f32 %v893, 0.0
      %v960 = vmax.f32 %v895, 0.0
      %v961 = vld [vmem:[%s3] sm:$0xff]
      %v962 = vld [vmem:[%s3 + $0x8] sm:$0xff]
      %v963 = vld [vmem:[%s3 + $0x10] sm:$0xff]
      %v964 = vld [vmem:[%s3 + $0x18] sm:$0xff]
      %v965 = vld [vmem:[%s3 + $0x20] sm:$0xff]
      %v966 = vld [vmem:[%s3 + $0x28] sm:$0xff]
      %v967 = vld [vmem:[%s3 + $0x30] sm:$0xff]
      %v968 = vld [vmem:[%s3 + $0x38] sm:$0xff]
      %v969 = vld [vmem:[%s3 + $0x40] sm:$0xff]
      %v970 = vld [vmem:[%s3 + $0x48] sm:$0xff]
      %v971 = vld [vmem:[%s3 + $0x50] sm:$0xff]
      %v972 = vld [vmem:[%s3 + $0x58] sm:$0xff]
      %v973 = vld [vmem:[%s3 + $0x60] sm:$0xff]
      %v974 = vld [vmem:[%s3 + $0x68] sm:$0xff]
      %v975 = vld [vmem:[%s3 + $0x70] sm:$0xff]
      %v976 = vld [vmem:[%s3 + $0x78] sm:$0xff]
      %v977 = vld [vmem:[%s3 + $0x80] sm:$0xff]
      %v978 = vld [vmem:[%s3 + $0x88] sm:$0xff]
      %v979 = vld [vmem:[%s3 + $0x90] sm:$0xff]
      %v980 = vld [vmem:[%s3 + $0x98] sm:$0xff]
      %v981 = vld [vmem:[%s3 + $0xa0] sm:$0xff]
      %v982 = vld [vmem:[%s3 + $0xa8] sm:$0xff]
      %v983 = vld [vmem:[%s3 + $0xb0] sm:$0xff]
      %v984 = vld [vmem:[%s3 + $0xb8] sm:$0xff]
      %v985 = vld [vmem:[%s3 + $0xc0] sm:$0xff]
      %v986 = vld [vmem:[%s3 + $0xc8] sm:$0xff]
      %v987 = vld [vmem:[%s3 + $0xd0] sm:$0xff]
      %v988 = vld [vmem:[%s3 + $0xd8] sm:$0xff]
      %v989 = vld [vmem:[%s3 + $0xe0] sm:$0xff]
      %v990 = vld [vmem:[%s3 + $0xe8] sm:$0xff]
      %v991 = vld [vmem:[%s3 + $0xf0] sm:$0xff]
      %v992 = vld [vmem:[%s3 + $0xf8] sm:$0xff]
      %v993 = vld [vmem:[%s4] sm:$0xff]
      %v994 = vld [vmem:[%s4 + $0x8] sm:$0xff]
      %v995 = vld [vmem:[%s4 + $0x10] sm:$0xff]
      %v996 = vld [vmem:[%s4 + $0x18] sm:$0xff]
      %v997 = vld [vmem:[%s4 + $0x20] sm:$0xff]
      %v998 = vld [vmem:[%s4 + $0x28] sm:$0xff]
      %v999 = vld [vmem:[%s4 + $0x30] sm:$0xff]
      %v1000 = vld [vmem:[%s4 + $0x38] sm:$0xff]
      %v1001 = vld [vmem:[%s4 + $0x40] sm:$0xff]
      %v1002 = vld [vmem:[%s4 + $0x48] sm:$0xff]
      %v1003 = vld [vmem:[%s4 + $0x50] sm:$0xff]
      %v1004 = vld [vmem:[%s4 + $0x58] sm:$0xff]
      %v1005 = vld [vmem:[%s4 + $0x60] sm:$0xff]
      %v1006 = vld [vmem:[%s4 + $0x68] sm:$0xff]
      %v1007 = vld [vmem:[%s4 + $0x70] sm:$0xff]
      %v1008 = vld [vmem:[%s4 + $0x78] sm:$0xff]
      %1010 = vset.pattern.permute.xlu0 0
      %1011 = vperm.xlu0 %1010, %v993
      %v1012 = vpop.permute.xlu0 %1011
      %1015 = vset.pattern.permute.xlu0 0
      %1016 = vperm.xlu0 %1015, %v994
      %v1017 = vpop.permute.xlu0 %1016
      %1020 = vset.pattern.permute.xlu0 0
      %1021 = vperm.xlu0 %1020, %v995
      %v1022 = vpop.permute.xlu0 %1021
      %1025 = vset.pattern.permute.xlu0 0
      %1026 = vperm.xlu0 %1025, %v996
      %v1027 = vpop.permute.xlu0 %1026
      %1030 = vset.pattern.permute.xlu0 0
      %1031 = vperm.xlu0 %1030, %v997
      %v1032 = vpop.permute.xlu0 %1031
      %1035 = vset.pattern.permute.xlu0 0
      %1036 = vperm.xlu0 %1035, %v998
      %v1037 = vpop.permute.xlu0 %1036
      %1040 = vset.pattern.permute.xlu0 0
      %1041 = vperm.xlu0 %1040, %v999
      %v1042 = vpop.permute.xlu0 %1041
      %1045 = vset.pattern.permute.xlu0 0
      %1046 = vperm.xlu0 %1045, %v1000
      %v1047 = vpop.permute.xlu0 %1046
      %1050 = vset.pattern.permute.xlu0 0
      %1051 = vperm.xlu0 %1050, %v1001
      %v1052 = vpop.permute.xlu0 %1051
      %1055 = vset.pattern.permute.xlu0 0
      %1056 = vperm.xlu0 %1055, %v1002
      %v1057 = vpop.permute.xlu0 %1056
      %1060 = vset.pattern.permute.xlu0 0
      %1061 = vperm.xlu0 %1060, %v1003
      %v1062 = vpop.permute.xlu0 %1061
      %1065 = vset.pattern.permute.xlu0 0
      %1066 = vperm.xlu0 %1065, %v1004
      %v1067 = vpop.permute.xlu0 %1066
      %1070 = vset.pattern.permute.xlu0 0
      %1071 = vperm.xlu0 %1070, %v1005
      %v1072 = vpop.permute.xlu0 %1071
      %1075 = vset.pattern.permute.xlu0 0
      %1076 = vperm.xlu0 %1075, %v1006
      %v1077 = vpop.permute.xlu0 %1076
      %1080 = vset.pattern.permute.xlu0 0
      %1081 = vperm.xlu0 %1080, %v1007
      %v1082 = vpop.permute.xlu0 %1081
      %1085 = vset.pattern.permute.xlu0 0
      %1086 = vperm.xlu0 %1085, %v1008
      %v1087 = vpop.permute.xlu0 %1086
      %1089 = vmatprep.subr.mxu0 %v898
      %1090 = vmatpush1.msra.mxu0 %v897
      %1091 = vmatprep.subr.mxu0 %v900
      %1092 = vmatpush1.msra.mxu0 %v899
      %1093 = vmatprep.subr.mxu0 %v902
      %1094 = vmatpush1.msra.mxu0 %v901
      %1095 = vmatprep.subr.mxu0 %v904
      %1096 = vmatpush1.msra.mxu0 %v903
      %1097 = vmatprep.subr.mxu0 %v906
      %1098 = vmatpush1.msra.mxu0 %v905
      %1099 = vmatprep.subr.mxu0 %v908
      %1100 = vmatpush1.msra.mxu0 %v907
      %1101 = vmatprep.subr.mxu0 %v910
      %1102 = vmatpush1.msra.mxu0 %v909
      %1103 = vmatprep.subr.mxu0 %v912
      %1104 = vmatpush1.msra.mxu0 %v911
      %1105 = vmatprep.subr.mxu0 %v914
      %1106 = vmatpush1.msra.mxu0 %v913
      %1107 = vmatprep.subr.mxu0 %v916
      %1108 = vmatpush1.msra.mxu0 %v915
      %1109 = vmatprep.subr.mxu0 %v918
      %1110 = vmatpush1.msra.mxu0 %v917
      %1111 = vmatprep.subr.mxu0 %v920
      %1112 = vmatpush1.msra.mxu0 %v919
      %1113 = vmatprep.subr.mxu0 %v922
      %1114 = vmatpush1.msra.mxu0 %v921
      %1115 = vmatprep.subr.mxu0 %v924
      %1116 = vmatpush1.msra.mxu0 %v923
      %1117 = vmatprep.subr.mxu0 %v926
      %1118 = vmatpush1.msra.mxu0 %v925
      %1119 = vmatprep.subr.mxu0 %v928
      %1120 = vmatpush1.msra.mxu0 %v927
      %1121 = vmatprep.subr.mxu0 %v930
      %1122 = vmatpush1.msra.mxu0 %v929
      %1123 = vmatprep.subr.mxu0 %v932
      %1124 = vmatpush1.msra.mxu0 %v931
      %1125 = vmatprep.subr.mxu0 %v934
      %1126 = vmatpush1.msra.mxu0 %v933
      %1127 = vmatprep.subr.mxu0 %v936
      %1128 = vmatpush1.msra.mxu0 %v935
      %1129 = vmatprep.subr.mxu0 %v938
      %1130 = vmatpush1.msra.mxu0 %v937
      %1131 = vmatprep.subr.mxu0 %v940
      %1132 = vmatpush1.msra.mxu0 %v939
      %1133 = vmatprep.subr.mxu0 %v942
      %1134 = vmatpush1.msra.mxu0 %v941
      %1135 = vmatprep.subr.mxu0 %v944
      %1136 = vmatpush1.msra.mxu0 %v943
      %1137 = vmatprep.subr.mxu0 %v946
      %1138 = vmatpush1.msra.mxu0 %v945
      %1139 = vmatprep.subr.mxu0 %v948
      %1140 = vmatpush1.msra.mxu0 %v947
      %1141 = vmatprep.subr.mxu0 %v950
      %1142 = vmatpush1.msra.mxu0 %v949
      %1143 = vmatprep.subr.mxu0 %v952
      %1144 = vmatpush1.msra.mxu0 %v951
      %1145 = vmatprep.subr.mxu0 %v954
      %1146 = vmatpush1.msra.mxu0 %v953
      %1147 = vmatprep.subr.mxu0 %v956
      %1148 = vmatpush1.msra.mxu0 %v955
      %1149 = vmatprep.subr.mxu0 %v958
      %1150 = vmatpush1.msra.mxu0 %v957
      %1151 = vmatprep.subr.mxu0 %v960
      %1152 = vmatpush1.msra.mxu0 %v959
      %1153 = vmatprep.mubr.f32.mxu0 %v962
      %1154 = vmatmul.mubr.f32.gmra.mrb[0].mxu0 %v961
      %v1155 = vpop.f32.mrb[0].mxu0
      %v1156 = vadd.f32 %v1012, %v1155
      %v1157 = vpop.f32.mrb[0].mxu0
      %v1158 = vadd.f32 %v1012, %v1157
      %1159 = vmatprep.mubr.f32.mxu0 %v964
      %1160 = vmatmul.mubr.f32.gmra.mrb[0].mxu0 %v963
      %v1161 = vpop.f32.mrb[0].mxu0
      %v1162 = vadd.f32 %v1017, %v1161
      %v1163 = vpop.f32.mrb[0].mxu0
      %v1164 = vadd.f32 %v1017, %v1163
      %1165 = vmatprep.mubr.f32.mxu0 %v966
      %1166 = vmatmul.mubr.f32.gmra.mrb[0].mxu0 %v965
      %v1167 = vpop.f32.mrb[0].mxu0
      %v1168 = vadd.f32 %v1022, %v1167
      %v1169 = vpop.f32.mrb[0].mxu0
      %v1170 = vadd.f32 %v1022, %v1169
      %1171 = vmatprep.mubr.f32.mxu0 %v968
      %1172 = vmatmul.mubr.f32.gmra.mrb[0].mxu0 %v967
      %v1173 = vpop.f32.mrb[0].mxu0
      %v1174 = vadd.f32 %v1027, %v1173
      %v1175 = vpop.f32.mrb[0].mxu0
      %v1176 = vadd.f32 %v1027, %v1175
      %1177 = vmatprep.mubr.f32.mxu0 %v970
      %1178 = vmatmul.mubr.f32.gmra.mrb[0].mxu0 %v969
      %v1179 = vpop.f32.mrb[0].mxu0
      %v1180 = vadd.f32 %v1032, %v1179
      %v1181 = vpop.f32.mrb[0].mxu0
      %v1182 = vadd.f32 %v1032, %v1181
      %1183 = vmatprep.mubr.f32.mxu0 %v972
      %1184 = vmatmul.mubr.f32.gmra.mrb[0].mxu0 %v971
      %v1185 = vpop.f32.mrb[0].mxu0
      %v1186 = vadd.f32 %v1037, %v1185
      %v1187 = vpop.f32.mrb[0].mxu0
      %v1188 = vadd.f32 %v1037, %v1187
      %1189 = vmatprep.mubr.f32.mxu0 %v974
      %1190 = vmatmul.mubr.f32.gmra.mrb[0].mxu0 %v973
      %v1191 = vpop.f32.mrb[0].mxu0
      %v1192 = vadd.f32 %v1042, %v1191
      %v1193 = vpop.f32.mrb[0].mxu0
      %v1194 = vadd.f32 %v1042, %v1193
      %1195 = vmatprep.mubr.f32.mxu0 %v976
      %1196 = vmatmul.mubr.f32.gmra.mrb[0].mxu0 %v975
      %v1197 = vpop.f32.mrb[0].mxu0
      %v1198 = vadd.f32 %v1047, %v1197
      %v1199 = vpop.f32.mrb[0].mxu0
      %v1200 = vadd.f32 %v1047, %v1199
      %1201 = vmatprep.mubr.f32.mxu0 %v978
      %1202 = vmatmul.mubr.f32.gmra.mrb[0].mxu0 %v977
      %v1203 = vpop.f32.mrb[0].mxu0
      %v1204 = vadd.f32 %v1052, %v1203
      %v1205 = vpop.f32.mrb[0].mxu0
      %v1206 = vadd.f32 %v1052, %v1205
      %1207 = vmatprep.mubr.f32.mxu0 %v980
      %1208 = vmatmul.mubr.f32.gmra.mrb[0].mxu0 %v979
      %v1209 = vpop.f32.mrb[0].mxu0
      %v1210 = vadd.f32 %v1057, %v1209
      %v1211 = vpop.f32.mrb[0].mxu0
      %v1212 = vadd.f32 %v1057, %v1211
      %1213 = vmatprep.mubr.f32.mxu0 %v982
      %1214 = vmatmul.mubr.f32.gmra.mrb[0].mxu0 %v981
      %v1215 = vpop.f32.mrb[0].mxu0
      %v1216 = vadd.f32 %v1062, %v1215
      %v1217 = vpop.f32.mrb[0].mxu0
      %v1218 = vadd.f32 %v1062, %v1217
      %1219 = vmatprep.mubr.f32.mxu0 %v984
      %1220 = vmatmul.mubr.f32.gmra.mrb[0].mxu0 %v983
      %v1221 = vpop.f32.mrb[0].mxu0
      %v1222 = vadd.f32 %v1067, %v1221
      %v1223 = vpop.f32.mrb[0].mxu0
      %v1224 = vadd.f32 %v1067, %v1223
      %1225 = vmatprep.mubr.f32.mxu0 %v986
      %1226 = vmatmul.mubr.f32.gmra.mrb[0].mxu0 %v985
      %v1227 = vpop.f32.mrb[0].mxu0
      %v1228 = vadd.f32 %v1072, %v1227
      %v1229 = vpop.f32.mrb[0].mxu0
      %v1230 = vadd.f32 %v1072, %v1229
      %1231 = vmatprep.mubr.f32.mxu0 %v988
      %1232 = vmatmul.mubr.f32.gmra.mrb[0].mxu0 %v987
      %v1233 = vpop.f32.mrb[0].mxu0
      %v1234 = vadd.f32 %v1077, %v1233
      %v1235 = vpop.f32.mrb[0].mxu0
      %v1236 = vadd.f32 %v1077, %v1235
      %1237 = vmatprep.mubr.f32.mxu0 %v990
      %1238 = vmatmul.mubr.f32.gmra.mrb[0].mxu0 %v989
      %v1239 = vpop.f32.mrb[0].mxu0
      %v1240 = vadd.f32 %v1082, %v1239
      %v1241 = vpop.f32.mrb[0].mxu0
      %v1242 = vadd.f32 %v1082, %v1241
      %1243 = vmatprep.mubr.f32.mxu0 %v992
      %1244 = vmatmul.mubr.f32.gmra.mrb[0].mxu0 %v991
      %v1245 = vpop.f32.mrb[0].mxu0
      %v1246 = vadd.f32 %v1087, %v1245
      %v1247 = vpop.f32.mrb[0].mxu0
      %v1248 = vadd.f32 %v1087, %v1247
      %1249 = vdwg.mxu0
      %v1250 = vmax.f32 %v1156, 0.0
      %v1251 = vmax.f32 %v1158, 0.0
      %v1252 = vmax.f32 %v1162, 0.0
      %v1253 = vmax.f32 %v1164, 0.0
      %v1254 = vmax.f32 %v1168, 0.0
      %v1255 = vmax.f32 %v1170, 0.0
      %v1256 = vmax.f32 %v1174, 0.0
      %v1257 = vmax.f32 %v1176, 0.0
      %v1258 = vmax.f32 %v1180, 0.0
      %v1259 = vmax.f32 %v1182, 0.0
      %v1260 = vmax.f32 %v1186, 0.0
      %v1261 = vmax.f32 %v1188, 0.0
      %v1262 = vmax.f32 %v1192, 0.0
      %v1263 = vmax.f32 %v1194, 0.0
      %v1264 = vmax.f32 %v1198, 0.0
      %v1265 = vmax.f32 %v1200, 0.0
      %v1266 = vmax.f32 %v1204, 0.0
      %v1267 = vmax.f32 %v1206, 0.0
      %v1268 = vmax.f32 %v1210, 0.0
      %v1269 = vmax.f32 %v1212, 0.0
      %v1270 = vmax.f32 %v1216, 0.0
      %v1271 = vmax.f32 %v1218, 0.0
      %v1272 = vmax.f32 %v1222, 0.0
      %v1273 = vmax.f32 %v1224, 0.0
      %v1274 = vmax.f32 %v1228, 0.0
      %v1275 = vmax.f32 %v1230, 0.0
      %v1276 = vmax.f32 %v1234, 0.0
      %v1277 = vmax.f32 %v1236, 0.0
      %v1278 = vmax.f32 %v1240, 0.0
      %v1279 = vmax.f32 %v1242, 0.0
      %v1280 = vmax.f32 %v1246, 0.0
      %v1281 = vmax.f32 %v1248, 0.0
      %v1282 = vlaneseq
      %v1283 = vand.u32 %v1282, 127
      %v1284 = vadd.s32 %v1283, 128
      %s1285 = smul.u32 %s23, 256
      %v1286 = vstv %s1285
      %v1287 = vadd.s32 %v1286, %v1283
      %v1288 = vadd.s32 %v1286, %v1284
      %vm1289 = vcmp.lt.s32.totalorder %v1287, 200
      %vm1290 = vcmp.lt.s32.totalorder %v1288, 200
      %v1291 = vsel %vm1289, 1, 0
      %v1292 = vsel %vm1290, 1, 0
      %vm1293 = vcmp.eq.s32.totalorder %v1291, 1
      %vm1294 = vcmp.eq.s32.totalorder %v1292, 1
      %v1295 = vsel %vm1293, %v1250, 0.0
      %v1296 = vsel %vm1294, %v1251, 0.0
      %v1297 = vsel %vm1293, %v1252, 0.0
      %v1298 = vsel %vm1294, %v1253, 0.0
      %v1299 = vsel %vm1293, %v1254, 0.0
      %v1300 = vsel %vm1294, %v1255, 0.0
      %v1301 = vsel %vm1293, %v1256, 0.0
      %v1302 = vsel %vm1294, %v1257, 0.0
      %v1303 = vsel %vm1293, %v1258, 0.0
      %v1304 = vsel %vm1294, %v1259, 0.0
      %v1305 = vsel %vm1293, %v1260, 0.0
      %v1306 = vsel %vm1294, %v1261, 0.0
      %v1307 = vsel %vm1293, %v1262, 0.0
      %v1308 = vsel %vm1294, %v1263, 0.0
      %v1309 = vsel %vm1293, %v1264, 0.0
      %v1310 = vsel %vm1294, %v1265, 0.0
      %v1311 = vsel %vm1293, %v1266, 0.0
      %v1312 = vsel %vm1294, %v1267, 0.0
      %v1313 = vsel %vm1293, %v1268, 0.0
      %v1314 = vsel %vm1294, %v1269, 0.0
      %v1315 = vsel %vm1293, %v1270, 0.0
      %v1316 = vsel %vm1294, %v1271, 0.0
      %v1317 = vsel %vm1293, %v1272, 0.0
      %v1318 = vsel %vm1294, %v1273, 0.0
      %v1319 = vsel %vm1293, %v1274, 0.0
      %v1320 = vsel %vm1294, %v1275, 0.0
      %v1321 = vsel %vm1293, %v1276, 0.0
      %v1322 = vsel %vm1294, %v1277, 0.0
      %v1323 = vsel %vm1293, %v1278, 0.0
      %v1324 = vsel %vm1294, %v1279, 0.0
      %v1325 = vsel %vm1293, %v1280, 0.0
      %v1326 = vsel %vm1294, %v1281, 0.0
      %v1327 = vadd.f32 %v1295, %v1296
      %1328 = vadd.xlane.f32.xlu0 %v1327
      %v1329 = vpop.xlane.xlu0 %1328
      %v1330 = vadd.f32 %v1297, %v1298
      %1331 = vadd.xlane.f32.xlu0 %v1330
      %v1332 = vpop.xlane.xlu0 %1331
      %v1333 = vadd.f32 %v1299, %v1300
      %1334 = vadd.xlane.f32.xlu0 %v1333
      %v1335 = vpop.xlane.xlu0 %1334
      %v1336 = vadd.f32 %v1301, %v1302
      %1337 = vadd.xlane.f32.xlu0 %v1336
      %v1338 = vpop.xlane.xlu0 %1337
      %v1339 = vadd.f32 %v1303, %v1304
      %1340 = vadd.xlane.f32.xlu0 %v1339
      %v1341 = vpop.xlane.xlu0 %1340
      %v1342 = vadd.f32 %v1305, %v1306
      %1343 = vadd.xlane.f32.xlu0 %v1342
      %v1344 = vpop.xlane.xlu0 %1343
      %v1345 = vadd.f32 %v1307, %v1308
      %1346 = vadd.xlane.f32.xlu0 %v1345
      %v1347 = vpop.xlane.xlu0 %1346
      %v1348 = vadd.f32 %v1309, %v1310
      %1349 = vadd.xlane.f32.xlu0 %v1348
      %v1350 = vpop.xlane.xlu0 %1349
      %v1351 = vadd.f32 %v1311, %v1312
      %1352 = vadd.xlane.f32.xlu0 %v1351
      %v1353 = vpop.xlane.xlu0 %1352
      %v1354 = vadd.f32 %v1313, %v1314
      %1355 = vadd.xlane.f32.xlu0 %v1354
      %v1356 = vpop.xlane.xlu0 %1355
      %v1357 = vadd.f32 %v1315, %v1316
      %1358 = vadd.xlane.f32.xlu0 %v1357
      %v1359 = vpop.xlane.xlu0 %1358
      %v1360 = vadd.f32 %v1317, %v1318
      %1361 = vadd.xlane.f32.xlu0 %v1360
      %v1362 = vpop.xlane.xlu0 %1361
      %v1363 = vadd.f32 %v1319, %v1320
      %1364 = vadd.xlane.f32.xlu0 %v1363
      %v1365 = vpop.xlane.xlu0 %1364
      %v1366 = vadd.f32 %v1321, %v1322
      %1367 = vadd.xlane.f32.xlu0 %v1366
      %v1368 = vpop.xlane.xlu0 %1367
      %v1369 = vadd.f32 %v1323, %v1324
      %1370 = vadd.xlane.f32.xlu0 %v1369
      %v1371 = vpop.xlane.xlu0 %1370
      %v1372 = vadd.f32 %v1325, %v1326
      %1373 = vadd.xlane.f32.xlu0 %v1372
      %v1374 = vpop.xlane.xlu0 %1373
      %vm1375 = vcmask 7168
      %1376 = vst.msk [vmem:[%s303] sm:$0xff] %vm1375, %v1329
      %1377 = vst.msk [vmem:[%s303 + $0x8] sm:$0xff] %vm1375, %v1332
      %1378 = vst.msk [vmem:[%s303 + $0x10] sm:$0xff] %vm1375, %v1335
      %1379 = vst.msk [vmem:[%s303 + $0x18] sm:$0xff] %vm1375, %v1338
      %1380 = vst.msk [vmem:[%s303 + $0x20] sm:$0xff] %vm1375, %v1341
      %1381 = vst.msk [vmem:[%s303 + $0x28] sm:$0xff] %vm1375, %v1344
      %1382 = vst.msk [vmem:[%s303 + $0x30] sm:$0xff] %vm1375, %v1347
      %1383 = vst.msk [vmem:[%s303 + $0x38] sm:$0xff] %vm1375, %v1350
      %1384 = vst.msk [vmem:[%s303 + $0x40] sm:$0xff] %vm1375, %v1353
      %1385 = vst.msk [vmem:[%s303 + $0x48] sm:$0xff] %vm1375, %v1356
      %1386 = vst.msk [vmem:[%s303 + $0x50] sm:$0xff] %vm1375, %v1359
      %1387 = vst.msk [vmem:[%s303 + $0x58] sm:$0xff] %vm1375, %v1362
      %1388 = vst.msk [vmem:[%s303 + $0x60] sm:$0xff] %vm1375, %v1365
      %1389 = vst.msk [vmem:[%s303 + $0x68] sm:$0xff] %vm1375, %v1368
      %1390 = vst.msk [vmem:[%s303 + $0x70] sm:$0xff] %vm1375, %v1371
      %1391 = vst.msk [vmem:[%s303 + $0x78] sm:$0xff] %vm1375, %v1374
      %v1392 = vmul.f32 %v1295, %v1295
      %v1393 = vmul.f32 %v1296, %v1296
      %v1394 = vmul.f32 %v1297, %v1297
      %v1395 = vmul.f32 %v1298, %v1298
      %v1396 = vmul.f32 %v1299, %v1299
      %v1397 = vmul.f32 %v1300, %v1300
      %v1398 = vmul.f32 %v1301, %v1301
      %v1399 = vmul.f32 %v1302, %v1302
      %v1400 = vmul.f32 %v1303, %v1303
      %v1401 = vmul.f32 %v1304, %v1304
      %v1402 = vmul.f32 %v1305, %v1305
      %v1403 = vmul.f32 %v1306, %v1306
      %v1404 = vmul.f32 %v1307, %v1307
      %v1405 = vmul.f32 %v1308, %v1308
      %v1406 = vmul.f32 %v1309, %v1309
      %v1407 = vmul.f32 %v1310, %v1310
      %v1408 = vmul.f32 %v1311, %v1311
      %v1409 = vmul.f32 %v1312, %v1312
      %v1410 = vmul.f32 %v1313, %v1313
      %v1411 = vmul.f32 %v1314, %v1314
      %v1412 = vmul.f32 %v1315, %v1315
      %v1413 = vmul.f32 %v1316, %v1316
      %v1414 = vmul.f32 %v1317, %v1317
      %v1415 = vmul.f32 %v1318, %v1318
      %v1416 = vmul.f32 %v1319, %v1319
      %v1417 = vmul.f32 %v1320, %v1320
      %v1418 = vmul.f32 %v1321, %v1321
      %v1419 = vmul.f32 %v1322, %v1322
      %v1420 = vmul.f32 %v1323, %v1323
      %v1421 = vmul.f32 %v1324, %v1324
      %v1422 = vmul.f32 %v1325, %v1325
      %v1423 = vmul.f32 %v1326, %v1326
      %v1424 = vadd.f32 %v1392, %v1393
      %1425 = vadd.xlane.f32.xlu0 %v1424
      %v1426 = vpop.xlane.xlu0 %1425
      %v1427 = vadd.f32 %v1394, %v1395
      %1428 = vadd.xlane.f32.xlu0 %v1427
      %v1429 = vpop.xlane.xlu0 %1428
      %v1430 = vadd.f32 %v1396, %v1397
      %1431 = vadd.xlane.f32.xlu0 %v1430
      %v1432 = vpop.xlane.xlu0 %1431
      %v1433 = vadd.f32 %v1398, %v1399
      %1434 = vadd.xlane.f32.xlu0 %v1433
      %v1435 = vpop.xlane.xlu0 %1434
      %v1436 = vadd.f32 %v1400, %v1401
      %1437 = vadd.xlane.f32.xlu0 %v1436
      %v1438 = vpop.xlane.xlu0 %1437
      %v1439 = vadd.f32 %v1402, %v1403
      %1440 = vadd.xlane.f32.xlu0 %v1439
      %v1441 = vpop.xlane.xlu0 %1440
      %v1442 = vadd.f32 %v1404, %v1405
      %1443 = vadd.xlane.f32.xlu0 %v1442
      %v1444 = vpop.xlane.xlu0 %1443
      %v1445 = vadd.f32 %v1406, %v1407
      %1446 = vadd.xlane.f32.xlu0 %v1445
      %v1447 = vpop.xlane.xlu0 %1446
      %v1448 = vadd.f32 %v1408, %v1409
      %1449 = vadd.xlane.f32.xlu0 %v1448
      %v1450 = vpop.xlane.xlu0 %1449
      %v1451 = vadd.f32 %v1410, %v1411
      %1452 = vadd.xlane.f32.xlu0 %v1451
      %v1453 = vpop.xlane.xlu0 %1452
      %v1454 = vadd.f32 %v1412, %v1413
      %1455 = vadd.xlane.f32.xlu0 %v1454
      %v1456 = vpop.xlane.xlu0 %1455
      %v1457 = vadd.f32 %v1414, %v1415
      %1458 = vadd.xlane.f32.xlu0 %v1457
      %v1459 = vpop.xlane.xlu0 %1458
      %v1460 = vadd.f32 %v1416, %v1417
      %1461 = vadd.xlane.f32.xlu0 %v1460
      %v1462 = vpop.xlane.xlu0 %1461
      %v1463 = vadd.f32 %v1418, %v1419
      %1464 = vadd.xlane.f32.xlu0 %v1463
      %v1465 = vpop.xlane.xlu0 %1464
      %v1466 = vadd.f32 %v1420, %v1421
      %1467 = vadd.xlane.f32.xlu0 %v1466
      %v1468 = vpop.xlane.xlu0 %1467
      %v1469 = vadd.f32 %v1422, %v1423
      %1470 = vadd.xlane.f32.xlu0 %v1469
      %v1471 = vpop.xlane.xlu0 %1470
      %1472 = vst.msk [vmem:[%s312] sm:$0xff] %vm1375, %v1426
      %1473 = vst.msk [vmem:[%s312 + $0x8] sm:$0xff] %vm1375, %v1429
      %1474 = vst.msk [vmem:[%s312 + $0x10] sm:$0xff] %vm1375, %v1432
      %1475 = vst.msk [vmem:[%s312 + $0x18] sm:$0xff] %vm1375, %v1435
      %1476 = vst.msk [vmem:[%s312 + $0x20] sm:$0xff] %vm1375, %v1438
      %1477 = vst.msk [vmem:[%s312 + $0x28] sm:$0xff] %vm1375, %v1441
      %1478 = vst.msk [vmem:[%s312 + $0x30] sm:$0xff] %vm1375, %v1444
      %1479 = vst.msk [vmem:[%s312 + $0x38] sm:$0xff] %vm1375, %v1447
      %1480 = vst.msk [vmem:[%s312 + $0x40] sm:$0xff] %vm1375, %v1450
      %1481 = vst.msk [vmem:[%s312 + $0x48] sm:$0xff] %vm1375, %v1453
      %1482 = vst.msk [vmem:[%s312 + $0x50] sm:$0xff] %vm1375, %v1456
      %1483 = vst.msk [vmem:[%s312 + $0x58] sm:$0xff] %vm1375, %v1459
      %1484 = vst.msk [vmem:[%s312 + $0x60] sm:$0xff] %vm1375, %v1462
      %1485 = vst.msk [vmem:[%s312 + $0x68] sm:$0xff] %vm1375, %v1465
      %1486 = vst.msk [vmem:[%s312 + $0x70] sm:$0xff] %vm1375, %v1468
      %1487 = vst.msk [vmem:[%s312 + $0x78] sm:$0xff] %vm1375, %v1471
      %p1488 = scmp.lt.s32.totalorder %s22, 1
      %s1489 = scalar_select %p1488, %s22, 1
      %p1490 = scmp.lt.s32.totalorder %s23, 0
      %s1491 = scalar_select %p1490, %s23, 0
      %s1492 = smul.addr %s1491, 16
      %s1493 = smul.addr %s1489, 16
      %s1494 = sadd.s32 %s1492, %s1493
      %s1495 = smul.addr %s1494, 8
      %s1496 = scalar_lea.vmem %s5, %s1495
      %p1497 = scmp.lt.s32.totalorder %s22, 1
      %s1498 = scalar_select %p1497, %s22, 1
      %p1499 = scmp.lt.s32.totalorder %s23, 0
      %s1500 = scalar_select %p1499, %s23, 0
      %s1501 = smul.addr %s1500, 16
      %s1502 = smul.addr %s1498, 16
      %s1503 = sadd.s32 %s1501, %s1502
      %s1504 = smul.addr %s1503, 8
      %s1505 = scalar_lea.vmem %s6, %s1504
      // Predicated region
      $region41: #{mlp_forward.4} parent=39 // pred_check
        %p1506 = pneg %p162
      $region42: #{mlp_forward.4} parent=39 // pred_check_branch
        %1508 = sbr.rel (%p1506) target = $region44
      $region43: #{mlp_forward.4} parent=39 // pred_region
        _
      $region44: #{mlp_forward.4} parent=39 // pred_fallthru
        _
      // Predicated region
      $region45: #{mlp_forward.4} parent=39 // pred_check
        %p1509 = pneg %p190
      $region46: #{mlp_forward.4} parent=39 // pred_check_branch
        %1511 = sbr.rel (%p1509) target = $region48
      $region47: #{mlp_forward.4} parent=39 // pred_region
        _
      $region48: #{mlp_forward.4} parent=39 // pred_fallthru
        _
    $region40: #{mlp_forward.4} parent=5 // pred_fallthru
      _
    %p1512 = scmp.le.s32.totalorder 2, %s13
    // Predicated region
    $region49: #{mlp_forward.4} parent=5 // pred_check
      %p1513 = pneg %p1512
    $region50: #{mlp_forward.4} parent=5 // pred_check_branch
      %1515 = sbr.rel (%p1513) target = $region52
    $region51: #{mlp_forward.4} parent=5 // pred_region
      %s1516 = ssub.s32 %s13, 2
      // Predicated region
      $region53: #{mlp_forward.4} parent=51 // pred_check
        %p1517 = pneg %p168
      $region54: #{mlp_forward.4} parent=51 // pred_check_branch
        %1519 = sbr.rel (%p1517) target = $region56
      $region55: #{mlp_forward.4} parent=51 // pred_region
        %p1520 = scmp.lt.s32.totalorder %s24, 1
        %s1521 = scalar_select %p1520, %s24, 1
        %p1522 = scmp.lt.s32.totalorder %s25, 0
        %s1523 = scalar_select %p1522, %s25, 0
        %s1524 = smul.addr %s1523, 16
        %s1525 = smul.addr %s1521, 16
        %s1526 = sadd.s32 %s1524, %s1525
        %s1527 = smul.addr %s1526, 8
        %s1528 = scalar_lea.vmem %s5, %s1527
      $region56: #{mlp_forward.4} parent=51 // pred_fallthru
        _
      // Predicated region
      $region57: #{mlp_forward.4} parent=51 // pred_check
        %p1529 = pneg %p196
      $region58: #{mlp_forward.4} parent=51 // pred_check_branch
        %1531 = sbr.rel (%p1529) target = $region60
      $region59: #{mlp_forward.4} parent=51 // pred_region
        %p1532 = scmp.lt.s32.totalorder %s24, 1
        %s1533 = scalar_select %p1532, %s24, 1
        %p1534 = scmp.lt.s32.totalorder %s25, 0
        %s1535 = scalar_select %p1534, %s25, 0
        %s1536 = smul.addr %s1535, 16
        %s1537 = smul.addr %s1533, 16
        %s1538 = sadd.s32 %s1536, %s1537
        %s1539 = smul.addr %s1538, 8
        %s1540 = scalar_lea.vmem %s6, %s1539
      $region60: #{mlp_forward.4} parent=51 // pred_fallthru
        _
    $region52: #{mlp_forward.4} parent=5 // pred_fallthru
      _
  $region6: #{mlp_forward.4} parent=0 // loop_footer
    %s17 = sadd.s32 1, %s13
  $region7: #{mlp_forward.4} parent=0 // loop_footer_branch
    %12 = sbr.rel target = $region3
  $region8: #{mlp_forward.4} parent=0 // loop_exit
    _

</llo_original>
